<compile_context>
chip_gen: v6e
topology: v6e:2x2x1
jax: 0.10.0
libtpu: 0.0.40
codegen_flags: <defaults>
</compile_context>

<pallas_src>
import jax
import jax.numpy as jnp
from jax.experimental import pallas as pl
from jax.experimental.pallas import tpu as pltpu

HIDDEN_SIZE = 32
OUTPUT_SIZE = 64       # vocab size
MAX_LENGTH = 16
DROPOUT_P = 0.1        # TODO(synk): dropout is identity here (eval mode); no train-mode PRNG mask.

H, V, L = HIDDEN_SIZE, OUTPUT_SIZE, MAX_LENGTH
LANES = 128

# ---- packed weight-slab row layout (f32, lane width 128) --------------------
R_EMBCAT = 0             # (H rows)  lanes [0:H]=comb_we,  [H:H+L]=attn_we
R_HIDCAT = R_EMBCAT + H  # (H rows)  lanes [0:3H]=w_hh,    [3H:3H+L]=attn_wh
R_COMBWA = R_HIDCAT + H  # (H rows)  lanes [0:H]=comb_wa
R_WIH = R_COMBWA + H     # (H rows)  lanes [0:3H]=w_ih
R_OUTW = R_WIH + H       # (H rows)  lanes [0:V]=out_w
R_BIAS = R_OUTW + H      # row+0: [attn_b | comb_b | out_b]; row+1: b_ih; row+2: b_hh
SLAB_ROWS = R_BIAS + 8   # pad bias block to a sublane multiple -> (168, 128)


def fused_decoder_kernel(tok_ref,                        # scalar prefetch (SMEM): (T,) int32
                         emb_ref, w_ref, enc_ref, h0_ref,  # resident VMEM inputs
                         out_ref):                          # (T, 128) packed output
    T = out_ref.shape[0]

    # Load resident weights once (VMEM -> vregs; tiny, compiler may re-materialize).
    w_embcat = w_ref[R_EMBCAT:R_EMBCAT + H, :]           # (H,128): comb_we | attn_we
    w_hidcat = w_ref[R_HIDCAT:R_HIDCAT + H, :]           # (H,128): w_hh | attn_wh
    w_combwa = w_ref[R_COMBWA:R_COMBWA + H, 0:H]         # (H,H)
    w_ih = w_ref[R_WIH:R_WIH + H, 0:3 * H]               # (H,3H)
    w_out = w_ref[R_OUTW:R_OUTW + H, 0:V]                # (H,V)
    b_misc = w_ref[R_BIAS:R_BIAS + 1, :]                 # (1,128): attn_b | comb_b | out_b
    b_ih = w_ref[R_BIAS + 1:R_BIAS + 2, 0:3 * H]         # (1,3H)
    b_hh = w_ref[R_BIAS + 2:R_BIAS + 3, 0:3 * H]         # (1,3H)

    enc = enc_ref[...]                                    # (L,H)
    hid = h0_ref[...]                                     # (1,H), carried across steps
    pad = jnp.zeros((1, LANES - (V + H + L)), jnp.float32)

    rows = []
    for t in range(T):                                    # statically unrolled decode loop
        tok = tok_ref[t]
        emb = emb_ref[tok]                                # (1,H) == dropout(embedding(tok)), eval-mode identity

        # one dot per distinct LHS (merged weights; zero-padded lanes contribute nothing)
        d1 = jnp.dot(emb, w_embcat, preferred_element_type=jnp.float32)   # (1,128)
        comb_e = d1[:, 0:H]                               # emb @ comb_we
        scores_e = d1[:, H:H + L]                         # emb @ attn_we

        d2 = jnp.dot(hid, w_hidcat, preferred_element_type=jnp.float32)   # (1,128)
        gh = d2[:, 0:3 * H] + b_hh                        # hid @ w_hh + b_hh
        scores_h = d2[:, 3 * H:3 * H + L]                 # hid @ attn_wh

        # attn_weights = softmax(attn(cat(embedded, hidden)), dim=1)
        scores = scores_e + scores_h + b_misc[:, 0:L]     # (1,L)
        m = jnp.max(scores, axis=-1, keepdims=True)
        e = jnp.exp(scores - m)
        attn_w = e / jnp.sum(e, axis=-1, keepdims=True)   # (1,L)

        # attn_applied = bmm(attn_weights, encoder_outputs)
        attn_applied = jnp.dot(attn_w, enc, preferred_element_type=jnp.float32)   # (1,H)

        # output = relu(attn_combine(cat(embedded, attn_applied)))
        comb = (comb_e
                + jnp.dot(attn_applied, w_combwa, preferred_element_type=jnp.float32)
                + b_misc[:, L:L + H])                     # (1,H)
        x = jnp.maximum(comb, 0.0)

        # single-step GRU, PyTorch gate order (r, z, n)
        gi = jnp.dot(x, w_ih, preferred_element_type=jnp.float32) + b_ih  # (1,3H)
        r = jax.nn.sigmoid(gi[:, 0:H] + gh[:, 0:H])
        z = jax.nn.sigmoid(gi[:, H:2 * H] + gh[:, H:2 * H])
        n = jnp.tanh(gi[:, 2 * H:3 * H] + r * gh[:, 2 * H:3 * H])
        h_new = (1.0 - z) * n + z * hid                   # (1,H)
        hid = h_new

        # output = log_softmax(out(gru_output), dim=1)
        logits = jnp.dot(h_new, w_out, preferred_element_type=jnp.float32) \
            + b_misc[:, L + H:L + H + V]                  # (1,V)
        lm = jnp.max(logits, axis=-1, keepdims=True)
        sh = logits - lm
        logp = sh - jnp.log(jnp.sum(jnp.exp(sh), axis=-1, keepdims=True))

        # lane-dense packed per-step row: [logp(64) | h_new(32) | attn_w(16) | pad(16)]
        rows.append(jnp.concatenate([logp, h_new, attn_w, pad], axis=1))

    # single unmasked (T,128) store
    out_ref[...] = jnp.concatenate(rows, axis=0)


def make_params(key, hidden=H, output=V, max_length=L):
    ks = jax.random.split(key, 12)
    s = 0.1
    return {
        "embedding": jax.random.normal(ks[0], (output, hidden), jnp.float32) * s,
        # attn: Linear(2H -> L); stored transposed + split over the concat axis
        "attn_we": jax.random.normal(ks[1], (hidden, max_length), jnp.float32) * s,
        "attn_wh": jax.random.normal(ks[2], (hidden, max_length), jnp.float32) * s,
        "attn_b": jax.random.normal(ks[3], (1, max_length), jnp.float32) * s,
        # attn_combine: Linear(2H -> H); stored transposed + split
        "comb_we": jax.random.normal(ks[4], (hidden, hidden), jnp.float32) * s,
        "comb_wa": jax.random.normal(ks[5], (hidden, hidden), jnp.float32) * s,
        "comb_b": jax.random.normal(ks[6], (1, hidden), jnp.float32) * s,
        # GRU(H -> H): stored transposed (H, 3H), PyTorch gate order r,z,n
        "w_ih": jax.random.normal(ks[7], (hidden, 3 * hidden), jnp.float32) * s,
        "w_hh": jax.random.normal(ks[8], (hidden, 3 * hidden), jnp.float32) * s,
        "b_ih": jax.random.normal(ks[9], (1, 3 * hidden), jnp.float32) * s,
        "b_hh": jax.random.normal(ks[10], (1, 3 * hidden), jnp.float32) * s,
        # out: Linear(H -> V), stored transposed
        "out_w": jax.random.normal(ks[11], (hidden, output), jnp.float32) * s,
        "out_b": jnp.zeros((1, output), jnp.float32),
    }


def pack_params(params):
    """Pack all weights/biases into one (SLAB_ROWS, 128) slab + a 3-D embedding table."""
    slab = jnp.zeros((SLAB_ROWS, LANES), jnp.float32)
    slab = slab.at[R_EMBCAT:R_EMBCAT + H, 0:H].set(params["comb_we"])
    slab = slab.at[R_EMBCAT:R_EMBCAT + H, H:H + L].set(params["attn_we"])
    slab = slab.at[R_HIDCAT:R_HIDCAT + H, 0:3 * H].set(params["w_hh"])
    slab = slab.at[R_HIDCAT:R_HIDCAT + H, 3 * H:3 * H + L].set(params["attn_wh"])
    slab = slab.at[R_COMBWA:R_COMBWA + H, 0:H].set(params["comb_wa"])
    slab = slab.at[R_WIH:R_WIH + H, 0:3 * H].set(params["w_ih"])
    slab = slab.at[R_OUTW:R_OUTW + H, 0:V].set(params["out_w"])
    slab = slab.at[R_BIAS, 0:L].set(params["attn_b"][0])
    slab = slab.at[R_BIAS, L:L + H].set(params["comb_b"][0])
    slab = slab.at[R_BIAS, L + H:L + H + V].set(params["out_b"][0])
    slab = slab.at[R_BIAS + 1, 0:3 * H].set(params["b_ih"][0])
    slab = slab.at[R_BIAS + 2, 0:3 * H].set(params["b_hh"][0])
    emb3d = params["embedding"].reshape(V, 1, H)
    return slab, emb3d


def attn_decoder_decode(params, tokens, hidden, encoder_outputs):
    """Fused T-step teacher-forced decode in one pallas_call (single grid point).

    tokens: (T,) int32, hidden: (1,1,H) f32, encoder_outputs: (L,H) f32.
    Returns (logp (T,V), final hidden (1,1,H), attn_weights (T,L), hiddens (T,H)).
    """
    T = int(tokens.shape[0])
    slab, emb3d = pack_params(params)
    h0 = hidden.reshape(1, H).astype(jnp.float32)

    grid_spec = pltpu.PrefetchScalarGridSpec(
        num_scalar_prefetch=1,                       # token ids -> SMEM
        grid=(1,),
        in_specs=[
            pl.BlockSpec((V, 1, H), lambda i, tok: (0, 0, 0)),          # embedding table (resident)
            pl.BlockSpec((SLAB_ROWS, LANES), lambda i, tok: (0, 0)),    # packed weight slab (resident)
            pl.BlockSpec((L, H), lambda i, tok: (0, 0)),                # encoder_outputs (resident)
            pl.BlockSpec((1, H), lambda i, tok: (0, 0)),                # initial hidden (resident)
        ],
        out_specs=pl.BlockSpec((T, LANES), lambda i, tok: (0, 0)),
    )
    packed = pl.pallas_call(
        fused_decoder_kernel,
        out_shape=jax.ShapeDtypeStruct((T, LANES), jnp.float32),
        grid_spec=grid_spec,
        compiler_params=pltpu.CompilerParams(dimension_semantics=("arbitrary",)),
    )(tokens.astype(jnp.int32), emb3d, slab,
      encoder_outputs.astype(jnp.float32), h0)

    logp = packed[:, 0:V]                            # (T, V)
    hiddens = packed[:, V:V + H]                     # (T, H)
    attn_w = packed[:, V + H:V + H + L]              # (T, L)
    final_hidden = hiddens[T - 1].reshape(1, 1, H)
    return logp, final_hidden, attn_w, hiddens


def attn_decoder_forward(params, token, hidden, encoder_outputs):
    """Module-shaped single step: token (1,1) int32 -> (logp (1,V), hidden (1,1,H), attn (1,L))."""
    logp, final_h, attn_w, _ = attn_decoder_decode(
        params, token.reshape(1).astype(jnp.int32), hidden, encoder_outputs)
    return logp, final_h, attn_w


def reference_decode(params, tokens, hidden, encoder_outputs):
    """Pure-JAX reference: loop the PyTorch forward (eval mode) over the token sequence."""
    hid = hidden.reshape(1, H)
    logps, attns, hids = [], [], []
    for t in range(int(tokens.shape[0])):
        emb = params["embedding"][tokens[t]].reshape(1, H)
        scores = emb @ params["attn_we"] + hid @ params["attn_wh"] + params["attn_b"]
        attn_w = jax.nn.softmax(scores, axis=1)
        attn_applied = attn_w @ encoder_outputs
        comb = emb @ params["comb_we"] + attn_applied @ params["comb_wa"] + params["comb_b"]
        x = jax.nn.relu(comb)
        gi = x @ params["w_ih"] + params["b_ih"]
        gh = hid @ params["w_hh"] + params["b_hh"]
        r = jax.nn.sigmoid(gi[:, :H] + gh[:, :H])
        z = jax.nn.sigmoid(gi[:, H:2 * H] + gh[:, H:2 * H])
        n = jnp.tanh(gi[:, 2 * H:] + r * gh[:, 2 * H:])
        hid = (1.0 - z) * n + z * hid
        logits = hid @ params["out_w"] + params["out_b"]
        logps.append(jax.nn.log_softmax(logits, axis=1)[0])
        attns.append(attn_w[0])
        hids.append(hid[0])
    return jnp.stack(logps), hid.reshape(1, 1, H), jnp.stack(attns), jnp.stack(hids)


if __name__ == "__main__":
    key = jax.random.PRNGKey(0)
    pkey, ekey, tkey = jax.random.split(key, 3)
    params = make_params(pkey)

    T = 8
    tokens = jax.random.randint(tkey, (T,), 0, OUTPUT_SIZE, dtype=jnp.int32)
    hidden0 = jnp.zeros((1, 1, HIDDEN_SIZE), jnp.float32)                  # initHidden()
    encoder_outputs = jax.random.normal(ekey, (MAX_LENGTH, HIDDEN_SIZE), jnp.float32)

    # fused multi-step decode (one kernel launch, weights resident in VMEM)
    logp, final_h, attn_w, hiddens = attn_decoder_decode(params, tokens, hidden0, encoder_outputs)
    jax.block_until_ready((logp, final_h, attn_w, hiddens))

    ref_logp, ref_h, ref_attn, ref_hiddens = reference_decode(params, tokens, hidden0, encoder_outputs)
    assert jnp.allclose(logp, ref_logp, atol=1e-3), "log-softmax output mismatch"
    assert jnp.allclose(final_h, ref_h, atol=1e-3), "final hidden mismatch"
    assert jnp.allclose(attn_w, ref_attn, atol=1e-3), "attn weights mismatch"
    assert jnp.allclose(hiddens, ref_hiddens, atol=1e-3), "per-step hidden mismatch"

    # single-step path with the module's exact signature / shapes
    tok1 = jnp.array([[3]], dtype=jnp.int32)
    logp1, h1, a1 = attn_decoder_forward(params, tok1, hidden0, encoder_outputs)
    jax.block_until_ready((logp1, h1, a1))
    r_logp1, r_h1, r_a1, _ = reference_decode(params, jnp.array([3], jnp.int32), hidden0, encoder_outputs)
    assert jnp.allclose(logp1, r_logp1, atol=1e-3), "single-step logp mismatch"
    assert jnp.allclose(h1, r_h1, atol=1e-3), "single-step hidden mismatch"
    assert jnp.allclose(a1, r_a1, atol=1e-3), "single-step attn mismatch"

    print("KERNEL_OK")
</pallas_src>

<mosaic_0001>
module attributes {stable_mosaic.version = 11 : i64} {
  func.func @fused_decoder_kernel(%arg0: i32, %arg1: memref<8xi32, #tpu.memory_space<smem>>, %arg2: memref<64x1x32xf32, #tpu.memory_space<vmem>>, %arg3: memref<168x128xf32, #tpu.memory_space<vmem>>, %arg4: memref<16x32xf32, #tpu.memory_space<vmem>>, %arg5: memref<1x32xf32, #tpu.memory_space<vmem>>, %arg6: memref<8x128xf32, #tpu.memory_space<vmem>>) attributes {dimension_semantics = [#tpu.dimension_semantics<arbitrary>], iteration_bounds = array<i64: 1>, scalar_prefetch = 1 : i64, scratch_operands = 0 : i64, tpu.core_type = #tpu.core_type<tc>, window_params = [{pipeline_mode = #tpu.pipeline_mode<synchronous>, transform_indices = @transform_0, window_bounds = array<i64: 64, 1, 32>}, {pipeline_mode = #tpu.pipeline_mode<synchronous>, transform_indices = @transform_1, window_bounds = array<i64: 168, 128>}, {pipeline_mode = #tpu.pipeline_mode<synchronous>, transform_indices = @transform_2, window_bounds = array<i64: 16, 32>}, {pipeline_mode = #tpu.pipeline_mode<synchronous>, transform_indices = @transform_3, window_bounds = array<i64: 1, 32>}, {pipeline_mode = #tpu.pipeline_mode<synchronous>, transform_indices = @transform_4, window_bounds = array<i64: 8, 128>}]} {
    %c0 = arith.constant 0 : index
    %c0_0 = arith.constant 0 : index
    %0 = vector.load %arg3[%c0, %c0_0] : memref<168x128xf32, #tpu.memory_space<vmem>>, vector<32x128xf32>
    %c32 = arith.constant 32 : index
    %c0_1 = arith.constant 0 : index
    %1 = vector.load %arg3[%c32, %c0_1] : memref<168x128xf32, #tpu.memory_space<vmem>>, vector<32x128xf32>
    %c64 = arith.constant 64 : index
    %c0_2 = arith.constant 0 : index
    %2 = vector.load %arg3[%c64, %c0_2] : memref<168x128xf32, #tpu.memory_space<vmem>>, vector<32x32xf32>
    %c96 = arith.constant 96 : index
    %c0_3 = arith.constant 0 : index
    %3 = vector.load %arg3[%c96, %c0_3] : memref<168x128xf32, #tpu.memory_space<vmem>>, vector<32x96xf32>
    %c128 = arith.constant 128 : index
    %c0_4 = arith.constant 0 : index
    %4 = vector.load %arg3[%c128, %c0_4] : memref<168x128xf32, #tpu.memory_space<vmem>>, vector<32x64xf32>
    %c160 = arith.constant 160 : index
    %c0_5 = arith.constant 0 : index
    %5 = vector.load %arg3[%c160, %c0_5] : memref<168x128xf32, #tpu.memory_space<vmem>>, vector<1x128xf32>
    %c161 = arith.constant 161 : index
    %c0_6 = arith.constant 0 : index
    %6 = vector.load %arg3[%c161, %c0_6] : memref<168x128xf32, #tpu.memory_space<vmem>>, vector<1x96xf32>
    %c162 = arith.constant 162 : index
    %c0_7 = arith.constant 0 : index
    %7 = vector.load %arg3[%c162, %c0_7] : memref<168x128xf32, #tpu.memory_space<vmem>>, vector<1x96xf32>
    %c0_8 = arith.constant 0 : index
    %c0_9 = arith.constant 0 : index
    %8 = vector.load %arg4[%c0_8, %c0_9] : memref<16x32xf32, #tpu.memory_space<vmem>>, vector<16x32xf32>
    %c0_10 = arith.constant 0 : index
    %c0_11 = arith.constant 0 : index
    %9 = vector.load %arg5[%c0_10, %c0_11] : memref<1x32xf32, #tpu.memory_space<vmem>>, vector<1x32xf32>
    %cst = arith.constant 0.000000e+00 : f32
    %10 = vector.broadcast %cst : f32 to vector<1x16xf32>
    %c0_12 = arith.constant 0 : index
    %11 = memref.load %arg1[%c0_12] : memref<8xi32, #tpu.memory_space<smem>>
    %12 = arith.index_cast %11 : i32 to index
    %c0_13 = arith.constant 0 : index
    %c0_14 = arith.constant 0 : index
    %13 = vector.load %arg2[%12, %c0_13, %c0_14] : memref<64x1x32xf32, #tpu.memory_space<vmem>>, vector<1x1x32xf32>
    %14 = vector.shape_cast %13 : vector<1x1x32xf32> to vector<1x32xf32>
    %cst_15 = arith.constant dense<0.000000e+00> : vector<1x128xf32>
    %15 = tpu.matmul %14, %0, %cst_15 {dimension_numbers = #tpu.dot_dimension_numbers<[1], [0], [0], [1], [0, 0, 1, 1], [], []>} : vector<1x32xf32>, vector<32x128xf32>, vector<1x128xf32> -> vector<1x128xf32>
    %16 = vector.extract_strided_slice %15 {offsets = [0, 0], sizes = [1, 32], strides = [1, 1]} : vector<1x128xf32> to vector<1x32xf32>
    %17 = vector.extract_strided_slice %15 {offsets = [0, 32], sizes = [1, 16], strides = [1, 1]} : vector<1x128xf32> to vector<1x16xf32>
    %cst_16 = arith.constant dense<0.000000e+00> : vector<1x128xf32>
    %18 = tpu.matmul %9, %1, %cst_16 {dimension_numbers = #tpu.dot_dimension_numbers<[1], [0], [0], [1], [0, 0, 1, 1], [], []>} : vector<1x32xf32>, vector<32x128xf32>, vector<1x128xf32> -> vector<1x128xf32>
    %19 = vector.extract_strided_slice %18 {offsets = [0, 0], sizes = [1, 96], strides = [1, 1]} : vector<1x128xf32> to vector<1x96xf32>
    %20 = arith.addf %19, %7 : vector<1x96xf32>
    %21 = vector.extract_strided_slice %18 {offsets = [0, 96], sizes = [1, 16], strides = [1, 1]} : vector<1x128xf32> to vector<1x16xf32>
    %22 = arith.addf %17, %21 : vector<1x16xf32>
    %23 = vector.extract_strided_slice %5 {offsets = [0, 0], sizes = [1, 16], strides = [1, 1]} : vector<1x128xf32> to vector<1x16xf32>
    %24 = arith.addf %22, %23 : vector<1x16xf32>
    %cst_17 = arith.constant dense<0xFF800000> : vector<1xf32>
    %25 = vector.multi_reduction <maximumf>, %24, %cst_17 [1] : vector<1x16xf32> to vector<1xf32>
    %26 = vector.shape_cast %25 : vector<1xf32> to vector<1x1xf32>
    %27 = vector.broadcast %26 : vector<1x1xf32> to vector<1x16xf32>
    %28 = arith.subf %24, %27 : vector<1x16xf32>
    %29 = math.exp %28 : vector<1x16xf32>
    %cst_18 = arith.constant dense<0.000000e+00> : vector<1xf32>
    %30 = vector.multi_reduction <add>, %29, %cst_18 [1] : vector<1x16xf32> to vector<1xf32>
    %31 = vector.shape_cast %30 : vector<1xf32> to vector<1x1xf32>
    %32 = vector.broadcast %31 : vector<1x1xf32> to vector<1x16xf32>
    %33 = arith.divf %29, %32 : vector<1x16xf32>
    %cst_19 = arith.constant dense<0.000000e+00> : vector<1x32xf32>
    %34 = tpu.matmul %33, %8, %cst_19 {dimension_numbers = #tpu.dot_dimension_numbers<[1], [0], [0], [1], [0, 0, 1, 1], [], []>} : vector<1x16xf32>, vector<16x32xf32>, vector<1x32xf32> -> vector<1x32xf32>
    %cst_20 = arith.constant dense<0.000000e+00> : vector<1x32xf32>
    %35 = tpu.matmul %34, %2, %cst_20 {dimension_numbers = #tpu.dot_dimension_numbers<[1], [0], [0], [1], [0, 0, 1, 1], [], []>} : vector<1x32xf32>, vector<32x32xf32>, vector<1x32xf32> -> vector<1x32xf32>
    %36 = arith.addf %16, %35 : vector<1x32xf32>
    %37 = vector.extract_strided_slice %5 {offsets = [0, 16], sizes = [1, 32], strides = [1, 1]} : vector<1x128xf32> to vector<1x32xf32>
    %38 = arith.addf %36, %37 : vector<1x32xf32>
    %cst_21 = arith.constant 0.000000e+00 : f32
    %39 = vector.broadcast %cst_21 : f32 to vector<1x32xf32>
    %40 = arith.maximumf %38, %39 : vector<1x32xf32>
    %cst_22 = arith.constant dense<0.000000e+00> : vector<1x96xf32>
    %41 = tpu.matmul %40, %3, %cst_22 {dimension_numbers = #tpu.dot_dimension_numbers<[1], [0], [0], [1], [0, 0, 1, 1], [], []>} : vector<1x32xf32>, vector<32x96xf32>, vector<1x96xf32> -> vector<1x96xf32>
    %42 = arith.addf %41, %6 : vector<1x96xf32>
    %43 = vector.extract_strided_slice %42 {offsets = [0, 0], sizes = [1, 32], strides = [1, 1]} : vector<1x96xf32> to vector<1x32xf32>
    %44 = vector.extract_strided_slice %20 {offsets = [0, 0], sizes = [1, 32], strides = [1, 1]} : vector<1x96xf32> to vector<1x32xf32>
    %45 = arith.addf %43, %44 : vector<1x32xf32>
    %46 = arith.negf %45 : vector<1x32xf32>
    %47 = math.exp %46 : vector<1x32xf32>
    %cst_23 = arith.constant 1.000000e+00 : f32
    %48 = vector.broadcast %cst_23 : f32 to vector<1x32xf32>
    %49 = arith.addf %48, %47 : vector<1x32xf32>
    %50 = arith.divf %48, %49 : vector<1x32xf32>
    %51 = vector.extract_strided_slice %42 {offsets = [0, 32], sizes = [1, 32], strides = [1, 1]} : vector<1x96xf32> to vector<1x32xf32>
    %52 = vector.extract_strided_slice %20 {offsets = [0, 32], sizes = [1, 32], strides = [1, 1]} : vector<1x96xf32> to vector<1x32xf32>
    %53 = arith.addf %51, %52 : vector<1x32xf32>
    %54 = arith.negf %53 : vector<1x32xf32>
    %55 = math.exp %54 : vector<1x32xf32>
    %cst_24 = arith.constant 1.000000e+00 : f32
    %56 = vector.broadcast %cst_24 : f32 to vector<1x32xf32>
    %57 = arith.addf %56, %55 : vector<1x32xf32>
    %58 = arith.divf %56, %57 : vector<1x32xf32>
    %59 = vector.extract_strided_slice %42 {offsets = [0, 64], sizes = [1, 32], strides = [1, 1]} : vector<1x96xf32> to vector<1x32xf32>
    %60 = vector.extract_strided_slice %20 {offsets = [0, 64], sizes = [1, 32], strides = [1, 1]} : vector<1x96xf32> to vector<1x32xf32>
    %61 = arith.mulf %50, %60 : vector<1x32xf32>
    %62 = arith.addf %59, %61 : vector<1x32xf32>
    %63 = math.tanh %62 : vector<1x32xf32>
    %cst_25 = arith.constant 1.000000e+00 : f32
    %64 = vector.broadcast %cst_25 : f32 to vector<1x32xf32>
    %65 = arith.subf %64, %58 : vector<1x32xf32>
    %66 = arith.mulf %65, %63 : vector<1x32xf32>
    %67 = arith.mulf %58, %9 : vector<1x32xf32>
    %68 = arith.addf %66, %67 : vector<1x32xf32>
    %cst_26 = arith.constant dense<0.000000e+00> : vector<1x64xf32>
    %69 = tpu.matmul %68, %4, %cst_26 {dimension_numbers = #tpu.dot_dimension_numbers<[1], [0], [0], [1], [0, 0, 1, 1], [], []>} : vector<1x32xf32>, vector<32x64xf32>, vector<1x64xf32> -> vector<1x64xf32>
    %70 = vector.extract_strided_slice %5 {offsets = [0, 48], sizes = [1, 64], strides = [1, 1]} : vector<1x128xf32> to vector<1x64xf32>
    %71 = arith.addf %69, %70 : vector<1x64xf32>
    %cst_27 = arith.constant dense<0xFF800000> : vector<1xf32>
    %72 = vector.multi_reduction <maximumf>, %71, %cst_27 [1] : vector<1x64xf32> to vector<1xf32>
    %73 = vector.shape_cast %72 : vector<1xf32> to vector<1x1xf32>
    %74 = vector.broadcast %73 : vector<1x1xf32> to vector<1x64xf32>
    %75 = arith.subf %71, %74 : vector<1x64xf32>
    %76 = math.exp %75 : vector<1x64xf32>
    %cst_28 = arith.constant dense<0.000000e+00> : vector<1xf32>
    %77 = vector.multi_reduction <add>, %76, %cst_28 [1] : vector<1x64xf32> to vector<1xf32>
    %78 = vector.shape_cast %77 : vector<1xf32> to vector<1x1xf32>
    %79 = math.log %78 : vector<1x1xf32>
    %80 = vector.broadcast %79 : vector<1x1xf32> to vector<1x64xf32>
    %81 = arith.subf %75, %80 : vector<1x64xf32>
    %82 = tpu.concatenate %81, %68, %33, %10 in 1 : vector<1x64xf32>, vector<1x32xf32>, vector<1x16xf32>, vector<1x16xf32> -> vector<1x128xf32>
    %c1 = arith.constant 1 : index
    %83 = memref.load %arg1[%c1] : memref<8xi32, #tpu.memory_space<smem>>
    %84 = arith.index_cast %83 : i32 to index
    %c0_29 = arith.constant 0 : index
    %c0_30 = arith.constant 0 : index
    %85 = vector.load %arg2[%84, %c0_29, %c0_30] : memref<64x1x32xf32, #tpu.memory_space<vmem>>, vector<1x1x32xf32>
    %86 = vector.shape_cast %85 : vector<1x1x32xf32> to vector<1x32xf32>
    %cst_31 = arith.constant dense<0.000000e+00> : vector<1x128xf32>
    %87 = tpu.matmul %86, %0, %cst_31 {dimension_numbers = #tpu.dot_dimension_numbers<[1], [0], [0], [1], [0, 0, 1, 1], [], []>} : vector<1x32xf32>, vector<32x128xf32>, vector<1x128xf32> -> vector<1x128xf32>
    %88 = vector.extract_strided_slice %87 {offsets = [0, 0], sizes = [1, 32], strides = [1, 1]} : vector<1x128xf32> to vector<1x32xf32>
    %89 = vector.extract_strided_slice %87 {offsets = [0, 32], sizes = [1, 16], strides = [1, 1]} : vector<1x128xf32> to vector<1x16xf32>
    %cst_32 = arith.constant dense<0.000000e+00> : vector<1x128xf32>
    %90 = tpu.matmul %68, %1, %cst_32 {dimension_numbers = #tpu.dot_dimension_numbers<[1], [0], [0], [1], [0, 0, 1, 1], [], []>} : vector<1x32xf32>, vector<32x128xf32>, vector<1x128xf32> -> vector<1x128xf32>
    %91 = vector.extract_strided_slice %90 {offsets = [0, 0], sizes = [1, 96], strides = [1, 1]} : vector<1x128xf32> to vector<1x96xf32>
    %92 = arith.addf %91, %7 : vector<1x96xf32>
    %93 = vector.extract_strided_slice %90 {offsets = [0, 96], sizes = [1, 16], strides = [1, 1]} : vector<1x128xf32> to vector<1x16xf32>
    %94 = arith.addf %89, %93 : vector<1x16xf32>
    %95 = vector.extract_strided_slice %5 {offsets = [0, 0], sizes = [1, 16], strides = [1, 1]} : vector<1x128xf32> to vector<1x16xf32>
    %96 = arith.addf %94, %95 : vector<1x16xf32>
    %cst_33 = arith.constant dense<0xFF800000> : vector<1xf32>
    %97 = vector.multi_reduction <maximumf>, %96, %cst_33 [1] : vector<1x16xf32> to vector<1xf32>
    %98 = vector.shape_cast %97 : vector<1xf32> to vector<1x1xf32>
    %99 = vector.broadcast %98 : vector<1x1xf32> to vector<1x16xf32>
    %100 = arith.subf %96, %99 : vector<1x16xf32>
    %101 = math.exp %100 : vector<1x16xf32>
    %cst_34 = arith.constant dense<0.000000e+00> : vector<1xf32>
    %102 = vector.multi_reduction <add>, %101, %cst_34 [1] : vector<1x16xf32> to vector<1xf32>
    %103 = vector.shape_cast %102 : vector<1xf32> to vector<1x1xf32>
    %104 = vector.broadcast %103 : vector<1x1xf32> to vector<1x16xf32>
    %105 = arith.divf %101, %104 : vector<1x16xf32>
    %cst_35 = arith.constant dense<0.000000e+00> : vector<1x32xf32>
    %106 = tpu.matmul %105, %8, %cst_35 {dimension_numbers = #tpu.dot_dimension_numbers<[1], [0], [0], [1], [0, 0, 1, 1], [], []>} : vector<1x16xf32>, vector<16x32xf32>, vector<1x32xf32> -> vector<1x32xf32>
    %cst_36 = arith.constant dense<0.000000e+00> : vector<1x32xf32>
    %107 = tpu.matmul %106, %2, %cst_36 {dimension_numbers = #tpu.dot_dimension_numbers<[1], [0], [0], [1], [0, 0, 1, 1], [], []>} : vector<1x32xf32>, vector<32x32xf32>, vector<1x32xf32> -> vector<1x32xf32>
    %108 = arith.addf %88, %107 : vector<1x32xf32>
    %109 = vector.extract_strided_slice %5 {offsets = [0, 16], sizes = [1, 32], strides = [1, 1]} : vector<1x128xf32> to vector<1x32xf32>
    %110 = arith.addf %108, %109 : vector<1x32xf32>
    %cst_37 = arith.constant 0.000000e+00 : f32
    %111 = vector.broadcast %cst_37 : f32 to vector<1x32xf32>
    %112 = arith.maximumf %110, %111 : vector<1x32xf32>
    %cst_38 = arith.constant dense<0.000000e+00> : vector<1x96xf32>
    %113 = tpu.matmul %112, %3, %cst_38 {dimension_numbers = #tpu.dot_dimension_numbers<[1], [0], [0], [1], [0, 0, 1, 1], [], []>} : vector<1x32xf32>, vector<32x96xf32>, vector<1x96xf32> -> vector<1x96xf32>
    %114 = arith.addf %113, %6 : vector<1x96xf32>
    %115 = vector.extract_strided_slice %114 {offsets = [0, 0], sizes = [1, 32], strides = [1, 1]} : vector<1x96xf32> to vector<1x32xf32>
    %116 = vector.extract_strided_slice %92 {offsets = [0, 0], sizes = [1, 32], strides = [1, 1]} : vector<1x96xf32> to vector<1x32xf32>
    %117 = arith.addf %115, %116 : vector<1x32xf32>
    %118 = arith.negf %117 : vector<1x32xf32>
    %119 = math.exp %118 : vector<1x32xf32>
    %cst_39 = arith.constant 1.000000e+00 : f32
    %120 = vector.broadcast %cst_39 : f32 to vector<1x32xf32>
    %121 = arith.addf %120, %119 : vector<1x32xf32>
    %122 = arith.divf %120, %121 : vector<1x32xf32>
    %123 = vector.extract_strided_slice %114 {offsets = [0, 32], sizes = [1, 32], strides = [1, 1]} : vector<1x96xf32> to vector<1x32xf32>
    %124 = vector.extract_strided_slice %92 {offsets = [0, 32], sizes = [1, 32], strides = [1, 1]} : vector<1x96xf32> to vector<1x32xf32>
    %125 = arith.addf %123, %124 : vector<1x32xf32>
    %126 = arith.negf %125 : vector<1x32xf32>
    %127 = math.exp %126 : vector<1x32xf32>
    %cst_40 = arith.constant 1.000000e+00 : f32
    %128 = vector.broadcast %cst_40 : f32 to vector<1x32xf32>
    %129 = arith.addf %128, %127 : vector<1x32xf32>
    %130 = arith.divf %128, %129 : vector<1x32xf32>
    %131 = vector.extract_strided_slice %114 {offsets = [0, 64], sizes = [1, 32], strides = [1, 1]} : vector<1x96xf32> to vector<1x32xf32>
    %132 = vector.extract_strided_slice %92 {offsets = [0, 64], sizes = [1, 32], strides = [1, 1]} : vector<1x96xf32> to vector<1x32xf32>
    %133 = arith.mulf %122, %132 : vector<1x32xf32>
    %134 = arith.addf %131, %133 : vector<1x32xf32>
    %135 = math.tanh %134 : vector<1x32xf32>
    %cst_41 = arith.constant 1.000000e+00 : f32
    %136 = vector.broadcast %cst_41 : f32 to vector<1x32xf32>
    %137 = arith.subf %136, %130 : vector<1x32xf32>
    %138 = arith.mulf %137, %135 : vector<1x32xf32>
    %139 = arith.mulf %130, %68 : vector<1x32xf32>
    %140 = arith.addf %138, %139 : vector<1x32xf32>
    %cst_42 = arith.constant dense<0.000000e+00> : vector<1x64xf32>
    %141 = tpu.matmul %140, %4, %cst_42 {dimension_numbers = #tpu.dot_dimension_numbers<[1], [0], [0], [1], [0, 0, 1, 1], [], []>} : vector<1x32xf32>, vector<32x64xf32>, vector<1x64xf32> -> vector<1x64xf32>
    %142 = vector.extract_strided_slice %5 {offsets = [0, 48], sizes = [1, 64], strides = [1, 1]} : vector<1x128xf32> to vector<1x64xf32>
    %143 = arith.addf %141, %142 : vector<1x64xf32>
    %cst_43 = arith.constant dense<0xFF800000> : vector<1xf32>
    %144 = vector.multi_reduction <maximumf>, %143, %cst_43 [1] : vector<1x64xf32> to vector<1xf32>
    %145 = vector.shape_cast %144 : vector<1xf32> to vector<1x1xf32>
    %146 = vector.broadcast %145 : vector<1x1xf32> to vector<1x64xf32>
    %147 = arith.subf %143, %146 : vector<1x64xf32>
    %148 = math.exp %147 : vector<1x64xf32>
    %cst_44 = arith.constant dense<0.000000e+00> : vector<1xf32>
    %149 = vector.multi_reduction <add>, %148, %cst_44 [1] : vector<1x64xf32> to vector<1xf32>
    %150 = vector.shape_cast %149 : vector<1xf32> to vector<1x1xf32>
    %151 = math.log %150 : vector<1x1xf32>
    %152 = vector.broadcast %151 : vector<1x1xf32> to vector<1x64xf32>
    %153 = arith.subf %147, %152 : vector<1x64xf32>
    %154 = tpu.concatenate %153, %140, %105, %10 in 1 : vector<1x64xf32>, vector<1x32xf32>, vector<1x16xf32>, vector<1x16xf32> -> vector<1x128xf32>
    %c2 = arith.constant 2 : index
    %155 = memref.load %arg1[%c2] : memref<8xi32, #tpu.memory_space<smem>>
    %156 = arith.index_cast %155 : i32 to index
    %c0_45 = arith.constant 0 : index
    %c0_46 = arith.constant 0 : index
    %157 = vector.load %arg2[%156, %c0_45, %c0_46] : memref<64x1x32xf32, #tpu.memory_space<vmem>>, vector<1x1x32xf32>
    %158 = vector.shape_cast %157 : vector<1x1x32xf32> to vector<1x32xf32>
    %cst_47 = arith.constant dense<0.000000e+00> : vector<1x128xf32>
    %159 = tpu.matmul %158, %0, %cst_47 {dimension_numbers = #tpu.dot_dimension_numbers<[1], [0], [0], [1], [0, 0, 1, 1], [], []>} : vector<1x32xf32>, vector<32x128xf32>, vector<1x128xf32> -> vector<1x128xf32>
    %160 = vector.extract_strided_slice %159 {offsets = [0, 0], sizes = [1, 32], strides = [1, 1]} : vector<1x128xf32> to vector<1x32xf32>
    %161 = vector.extract_strided_slice %159 {offsets = [0, 32], sizes = [1, 16], strides = [1, 1]} : vector<1x128xf32> to vector<1x16xf32>
    %cst_48 = arith.constant dense<0.000000e+00> : vector<1x128xf32>
    %162 = tpu.matmul %140, %1, %cst_48 {dimension_numbers = #tpu.dot_dimension_numbers<[1], [0], [0], [1], [0, 0, 1, 1], [], []>} : vector<1x32xf32>, vector<32x128xf32>, vector<1x128xf32> -> vector<1x128xf32>
    %163 = vector.extract_strided_slice %162 {offsets = [0, 0], sizes = [1, 96], strides = [1, 1]} : vector<1x128xf32> to vector<1x96xf32>
    %164 = arith.addf %163, %7 : vector<1x96xf32>
    %165 = vector.extract_strided_slice %162 {offsets = [0, 96], sizes = [1, 16], strides = [1, 1]} : vector<1x128xf32> to vector<1x16xf32>
    %166 = arith.addf %161, %165 : vector<1x16xf32>
    %167 = vector.extract_strided_slice %5 {offsets = [0, 0], sizes = [1, 16], strides = [1, 1]} : vector<1x128xf32> to vector<1x16xf32>
    %168 = arith.addf %166, %167 : vector<1x16xf32>
    %cst_49 = arith.constant dense<0xFF800000> : vector<1xf32>
    %169 = vector.multi_reduction <maximumf>, %168, %cst_49 [1] : vector<1x16xf32> to vector<1xf32>
    %170 = vector.shape_cast %169 : vector<1xf32> to vector<1x1xf32>
    %171 = vector.broadcast %170 : vector<1x1xf32> to vector<1x16xf32>
    %172 = arith.subf %168, %171 : vector<1x16xf32>
    %173 = math.exp %172 : vector<1x16xf32>
    %cst_50 = arith.constant dense<0.000000e+00> : vector<1xf32>
    %174 = vector.multi_reduction <add>, %173, %cst_50 [1] : vector<1x16xf32> to vector<1xf32>
    %175 = vector.shape_cast %174 : vector<1xf32> to vector<1x1xf32>
    %176 = vector.broadcast %175 : vector<1x1xf32> to vector<1x16xf32>
    %177 = arith.divf %173, %176 : vector<1x16xf32>
    %cst_51 = arith.constant dense<0.000000e+00> : vector<1x32xf32>
    %178 = tpu.matmul %177, %8, %cst_51 {dimension_numbers = #tpu.dot_dimension_numbers<[1], [0], [0], [1], [0, 0, 1, 1], [], []>} : vector<1x16xf32>, vector<16x32xf32>, vector<1x32xf32> -> vector<1x32xf32>
    %cst_52 = arith.constant dense<0.000000e+00> : vector<1x32xf32>
    %179 = tpu.matmul %178, %2, %cst_52 {dimension_numbers = #tpu.dot_dimension_numbers<[1], [0], [0], [1], [0, 0, 1, 1], [], []>} : vector<1x32xf32>, vector<32x32xf32>, vector<1x32xf32> -> vector<1x32xf32>
    %180 = arith.addf %160, %179 : vector<1x32xf32>
    %181 = vector.extract_strided_slice %5 {offsets = [0, 16], sizes = [1, 32], strides = [1, 1]} : vector<1x128xf32> to vector<1x32xf32>
    %182 = arith.addf %180, %181 : vector<1x32xf32>
    %cst_53 = arith.constant 0.000000e+00 : f32
    %183 = vector.broadcast %cst_53 : f32 to vector<1x32xf32>
    %184 = arith.maximumf %182, %183 : vector<1x32xf32>
    %cst_54 = arith.constant dense<0.000000e+00> : vector<1x96xf32>
    %185 = tpu.matmul %184, %3, %cst_54 {dimension_numbers = #tpu.dot_dimension_numbers<[1], [0], [0], [1], [0, 0, 1, 1], [], []>} : vector<1x32xf32>, vector<32x96xf32>, vector<1x96xf32> -> vector<1x96xf32>
    %186 = arith.addf %185, %6 : vector<1x96xf32>
    %187 = vector.extract_strided_slice %186 {offsets = [0, 0], sizes = [1, 32], strides = [1, 1]} : vector<1x96xf32> to vector<1x32xf32>
    %188 = vector.extract_strided_slice %164 {offsets = [0, 0], sizes = [1, 32], strides = [1, 1]} : vector<1x96xf32> to vector<1x32xf32>
    %189 = arith.addf %187, %188 : vector<1x32xf32>
    %190 = arith.negf %189 : vector<1x32xf32>
    %191 = math.exp %190 : vector<1x32xf32>
    %cst_55 = arith.constant 1.000000e+00 : f32
    %192 = vector.broadcast %cst_55 : f32 to vector<1x32xf32>
    %193 = arith.addf %192, %191 : vector<1x32xf32>
    %194 = arith.divf %192, %193 : vector<1x32xf32>
    %195 = vector.extract_strided_slice %186 {offsets = [0, 32], sizes = [1, 32], strides = [1, 1]} : vector<1x96xf32> to vector<1x32xf32>
    %196 = vector.extract_strided_slice %164 {offsets = [0, 32], sizes = [1, 32], strides = [1, 1]} : vector<1x96xf32> to vector<1x32xf32>
    %197 = arith.addf %195, %196 : vector<1x32xf32>
    %198 = arith.negf %197 : vector<1x32xf32>
    %199 = math.exp %198 : vector<1x32xf32>
    %cst_56 = arith.constant 1.000000e+00 : f32
    %200 = vector.broadcast %cst_56 : f32 to vector<1x32xf32>
    %201 = arith.addf %200, %199 : vector<1x32xf32>
    %202 = arith.divf %200, %201 : vector<1x32xf32>
    %203 = vector.extract_strided_slice %186 {offsets = [0, 64], sizes = [1, 32], strides = [1, 1]} : vector<1x96xf32> to vector<1x32xf32>
    %204 = vector.extract_strided_slice %164 {offsets = [0, 64], sizes = [1, 32], strides = [1, 1]} : vector<1x96xf32> to vector<1x32xf32>
    %205 = arith.mulf %194, %204 : vector<1x32xf32>
    %206 = arith.addf %203, %205 : vector<1x32xf32>
    %207 = math.tanh %206 : vector<1x32xf32>
    %cst_57 = arith.constant 1.000000e+00 : f32
    %208 = vector.broadcast %cst_57 : f32 to vector<1x32xf32>
    %209 = arith.subf %208, %202 : vector<1x32xf32>
    %210 = arith.mulf %209, %207 : vector<1x32xf32>
    %211 = arith.mulf %202, %140 : vector<1x32xf32>
    %212 = arith.addf %210, %211 : vector<1x32xf32>
    %cst_58 = arith.constant dense<0.000000e+00> : vector<1x64xf32>
    %213 = tpu.matmul %212, %4, %cst_58 {dimension_numbers = #tpu.dot_dimension_numbers<[1], [0], [0], [1], [0, 0, 1, 1], [], []>} : vector<1x32xf32>, vector<32x64xf32>, vector<1x64xf32> -> vector<1x64xf32>
    %214 = vector.extract_strided_slice %5 {offsets = [0, 48], sizes = [1, 64], strides = [1, 1]} : vector<1x128xf32> to vector<1x64xf32>
    %215 = arith.addf %213, %214 : vector<1x64xf32>
    %cst_59 = arith.constant dense<0xFF800000> : vector<1xf32>
    %216 = vector.multi_reduction <maximumf>, %215, %cst_59 [1] : vector<1x64xf32> to vector<1xf32>
    %217 = vector.shape_cast %216 : vector<1xf32> to vector<1x1xf32>
    %218 = vector.broadcast %217 : vector<1x1xf32> to vector<1x64xf32>
    %219 = arith.subf %215, %218 : vector<1x64xf32>
    %220 = math.exp %219 : vector<1x64xf32>
    %cst_60 = arith.constant dense<0.000000e+00> : vector<1xf32>
    %221 = vector.multi_reduction <add>, %220, %cst_60 [1] : vector<1x64xf32> to vector<1xf32>
    %222 = vector.shape_cast %221 : vector<1xf32> to vector<1x1xf32>
    %223 = math.log %222 : vector<1x1xf32>
    %224 = vector.broadcast %223 : vector<1x1xf32> to vector<1x64xf32>
    %225 = arith.subf %219, %224 : vector<1x64xf32>
    %226 = tpu.concatenate %225, %212, %177, %10 in 1 : vector<1x64xf32>, vector<1x32xf32>, vector<1x16xf32>, vector<1x16xf32> -> vector<1x128xf32>
    %c3 = arith.constant 3 : index
    %227 = memref.load %arg1[%c3] : memref<8xi32, #tpu.memory_space<smem>>
    %228 = arith.index_cast %227 : i32 to index
    %c0_61 = arith.constant 0 : index
    %c0_62 = arith.constant 0 : index
    %229 = vector.load %arg2[%228, %c0_61, %c0_62] : memref<64x1x32xf32, #tpu.memory_space<vmem>>, vector<1x1x32xf32>
    %230 = vector.shape_cast %229 : vector<1x1x32xf32> to vector<1x32xf32>
    %cst_63 = arith.constant dense<0.000000e+00> : vector<1x128xf32>
    %231 = tpu.matmul %230, %0, %cst_63 {dimension_numbers = #tpu.dot_dimension_numbers<[1], [0], [0], [1], [0, 0, 1, 1], [], []>} : vector<1x32xf32>, vector<32x128xf32>, vector<1x128xf32> -> vector<1x128xf32>
    %232 = vector.extract_strided_slice %231 {offsets = [0, 0], sizes = [1, 32], strides = [1, 1]} : vector<1x128xf32> to vector<1x32xf32>
    %233 = vector.extract_strided_slice %231 {offsets = [0, 32], sizes = [1, 16], strides = [1, 1]} : vector<1x128xf32> to vector<1x16xf32>
    %cst_64 = arith.constant dense<0.000000e+00> : vector<1x128xf32>
    %234 = tpu.matmul %212, %1, %cst_64 {dimension_numbers = #tpu.dot_dimension_numbers<[1], [0], [0], [1], [0, 0, 1, 1], [], []>} : vector<1x32xf32>, vector<32x128xf32>, vector<1x128xf32> -> vector<1x128xf32>
    %235 = vector.extract_strided_slice %234 {offsets = [0, 0], sizes = [1, 96], strides = [1, 1]} : vector<1x128xf32> to vector<1x96xf32>
    %236 = arith.addf %235, %7 : vector<1x96xf32>
    %237 = vector.extract_strided_slice %234 {offsets = [0, 96], sizes = [1, 16], strides = [1, 1]} : vector<1x128xf32> to vector<1x16xf32>
    %238 = arith.addf %233, %237 : vector<1x16xf32>
    %239 = vector.extract_strided_slice %5 {offsets = [0, 0], sizes = [1, 16], strides = [1, 1]} : vector<1x128xf32> to vector<1x16xf32>
    %240 = arith.addf %238, %239 : vector<1x16xf32>
    %cst_65 = arith.constant dense<0xFF800000> : vector<1xf32>
    %241 = vector.multi_reduction <maximumf>, %240, %cst_65 [1] : vector<1x16xf32> to vector<1xf32>
    %242 = vector.shape_cast %241 : vector<1xf32> to vector<1x1xf32>
    %243 = vector.broadcast %242 : vector<1x1xf32> to vector<1x16xf32>
    %244 = arith.subf %240, %243 : vector<1x16xf32>
    %245 = math.exp %244 : vector<1x16xf32>
    %cst_66 = arith.constant dense<0.000000e+00> : vector<1xf32>
    %246 = vector.multi_reduction <add>, %245, %cst_66 [1] : vector<1x16xf32> to vector<1xf32>
    %247 = vector.shape_cast %246 : vector<1xf32> to vector<1x1xf32>
    %248 = vector.broadcast %247 : vector<1x1xf32> to vector<1x16xf32>
    %249 = arith.divf %245, %248 : vector<1x16xf32>
    %cst_67 = arith.constant dense<0.000000e+00> : vector<1x32xf32>
    %250 = tpu.matmul %249, %8, %cst_67 {dimension_numbers = #tpu.dot_dimension_numbers<[1], [0], [0], [1], [0, 0, 1, 1], [], []>} : vector<1x16xf32>, vector<16x32xf32>, vector<1x32xf32> -> vector<1x32xf32>
    %cst_68 = arith.constant dense<0.000000e+00> : vector<1x32xf32>
    %251 = tpu.matmul %250, %2, %cst_68 {dimension_numbers = #tpu.dot_dimension_numbers<[1], [0], [0], [1], [0, 0, 1, 1], [], []>} : vector<1x32xf32>, vector<32x32xf32>, vector<1x32xf32> -> vector<1x32xf32>
    %252 = arith.addf %232, %251 : vector<1x32xf32>
    %253 = vector.extract_strided_slice %5 {offsets = [0, 16], sizes = [1, 32], strides = [1, 1]} : vector<1x128xf32> to vector<1x32xf32>
    %254 = arith.addf %252, %253 : vector<1x32xf32>
    %cst_69 = arith.constant 0.000000e+00 : f32
    %255 = vector.broadcast %cst_69 : f32 to vector<1x32xf32>
    %256 = arith.maximumf %254, %255 : vector<1x32xf32>
    %cst_70 = arith.constant dense<0.000000e+00> : vector<1x96xf32>
    %257 = tpu.matmul %256, %3, %cst_70 {dimension_numbers = #tpu.dot_dimension_numbers<[1], [0], [0], [1], [0, 0, 1, 1], [], []>} : vector<1x32xf32>, vector<32x96xf32>, vector<1x96xf32> -> vector<1x96xf32>
    %258 = arith.addf %257, %6 : vector<1x96xf32>
    %259 = vector.extract_strided_slice %258 {offsets = [0, 0], sizes = [1, 32], strides = [1, 1]} : vector<1x96xf32> to vector<1x32xf32>
    %260 = vector.extract_strided_slice %236 {offsets = [0, 0], sizes = [1, 32], strides = [1, 1]} : vector<1x96xf32> to vector<1x32xf32>
    %261 = arith.addf %259, %260 : vector<1x32xf32>
    %262 = arith.negf %261 : vector<1x32xf32>
    %263 = math.exp %262 : vector<1x32xf32>
    %cst_71 = arith.constant 1.000000e+00 : f32
    %264 = vector.broadcast %cst_71 : f32 to vector<1x32xf32>
    %265 = arith.addf %264, %263 : vector<1x32xf32>
    %266 = arith.divf %264, %265 : vector<1x32xf32>
    %267 = vector.extract_strided_slice %258 {offsets = [0, 32], sizes = [1, 32], strides = [1, 1]} : vector<1x96xf32> to vector<1x32xf32>
    %268 = vector.extract_strided_slice %236 {offsets = [0, 32], sizes = [1, 32], strides = [1, 1]} : vector<1x96xf32> to vector<1x32xf32>
    %269 = arith.addf %267, %268 : vector<1x32xf32>
    %270 = arith.negf %269 : vector<1x32xf32>
    %271 = math.exp %270 : vector<1x32xf32>
    %cst_72 = arith.constant 1.000000e+00 : f32
    %272 = vector.broadcast %cst_72 : f32 to vector<1x32xf32>
    %273 = arith.addf %272, %271 : vector<1x32xf32>
    %274 = arith.divf %272, %273 : vector<1x32xf32>
    %275 = vector.extract_strided_slice %258 {offsets = [0, 64], sizes = [1, 32], strides = [1, 1]} : vector<1x96xf32> to vector<1x32xf32>
    %276 = vector.extract_strided_slice %236 {offsets = [0, 64], sizes = [1, 32], strides = [1, 1]} : vector<1x96xf32> to vector<1x32xf32>
    %277 = arith.mulf %266, %276 : vector<1x32xf32>
    %278 = arith.addf %275, %277 : vector<1x32xf32>
    %279 = math.tanh %278 : vector<1x32xf32>
    %cst_73 = arith.constant 1.000000e+00 : f32
    %280 = vector.broadcast %cst_73 : f32 to vector<1x32xf32>
    %281 = arith.subf %280, %274 : vector<1x32xf32>
    %282 = arith.mulf %281, %279 : vector<1x32xf32>
    %283 = arith.mulf %274, %212 : vector<1x32xf32>
    %284 = arith.addf %282, %283 : vector<1x32xf32>
    %cst_74 = arith.constant dense<0.000000e+00> : vector<1x64xf32>
    %285 = tpu.matmul %284, %4, %cst_74 {dimension_numbers = #tpu.dot_dimension_numbers<[1], [0], [0], [1], [0, 0, 1, 1], [], []>} : vector<1x32xf32>, vector<32x64xf32>, vector<1x64xf32> -> vector<1x64xf32>
    %286 = vector.extract_strided_slice %5 {offsets = [0, 48], sizes = [1, 64], strides = [1, 1]} : vector<1x128xf32> to vector<1x64xf32>
    %287 = arith.addf %285, %286 : vector<1x64xf32>
    %cst_75 = arith.constant dense<0xFF800000> : vector<1xf32>
    %288 = vector.multi_reduction <maximumf>, %287, %cst_75 [1] : vector<1x64xf32> to vector<1xf32>
    %289 = vector.shape_cast %288 : vector<1xf32> to vector<1x1xf32>
    %290 = vector.broadcast %289 : vector<1x1xf32> to vector<1x64xf32>
    %291 = arith.subf %287, %290 : vector<1x64xf32>
    %292 = math.exp %291 : vector<1x64xf32>
    %cst_76 = arith.constant dense<0.000000e+00> : vector<1xf32>
    %293 = vector.multi_reduction <add>, %292, %cst_76 [1] : vector<1x64xf32> to vector<1xf32>
    %294 = vector.shape_cast %293 : vector<1xf32> to vector<1x1xf32>
    %295 = math.log %294 : vector<1x1xf32>
    %296 = vector.broadcast %295 : vector<1x1xf32> to vector<1x64xf32>
    %297 = arith.subf %291, %296 : vector<1x64xf32>
    %298 = tpu.concatenate %297, %284, %249, %10 in 1 : vector<1x64xf32>, vector<1x32xf32>, vector<1x16xf32>, vector<1x16xf32> -> vector<1x128xf32>
    %c4 = arith.constant 4 : index
    %299 = memref.load %arg1[%c4] : memref<8xi32, #tpu.memory_space<smem>>
    %300 = arith.index_cast %299 : i32 to index
    %c0_77 = arith.constant 0 : index
    %c0_78 = arith.constant 0 : index
    %301 = vector.load %arg2[%300, %c0_77, %c0_78] : memref<64x1x32xf32, #tpu.memory_space<vmem>>, vector<1x1x32xf32>
    %302 = vector.shape_cast %301 : vector<1x1x32xf32> to vector<1x32xf32>
    %cst_79 = arith.constant dense<0.000000e+00> : vector<1x128xf32>
    %303 = tpu.matmul %302, %0, %cst_79 {dimension_numbers = #tpu.dot_dimension_numbers<[1], [0], [0], [1], [0, 0, 1, 1], [], []>} : vector<1x32xf32>, vector<32x128xf32>, vector<1x128xf32> -> vector<1x128xf32>
    %304 = vector.extract_strided_slice %303 {offsets = [0, 0], sizes = [1, 32], strides = [1, 1]} : vector<1x128xf32> to vector<1x32xf32>
    %305 = vector.extract_strided_slice %303 {offsets = [0, 32], sizes = [1, 16], strides = [1, 1]} : vector<1x128xf32> to vector<1x16xf32>
    %cst_80 = arith.constant dense<0.000000e+00> : vector<1x128xf32>
    %306 = tpu.matmul %284, %1, %cst_80 {dimension_numbers = #tpu.dot_dimension_numbers<[1], [0], [0], [1], [0, 0, 1, 1], [], []>} : vector<1x32xf32>, vector<32x128xf32>, vector<1x128xf32> -> vector<1x128xf32>
    %307 = vector.extract_strided_slice %306 {offsets = [0, 0], sizes = [1, 96], strides = [1, 1]} : vector<1x128xf32> to vector<1x96xf32>
    %308 = arith.addf %307, %7 : vector<1x96xf32>
    %309 = vector.extract_strided_slice %306 {offsets = [0, 96], sizes = [1, 16], strides = [1, 1]} : vector<1x128xf32> to vector<1x16xf32>
    %310 = arith.addf %305, %309 : vector<1x16xf32>
    %311 = vector.extract_strided_slice %5 {offsets = [0, 0], sizes = [1, 16], strides = [1, 1]} : vector<1x128xf32> to vector<1x16xf32>
    %312 = arith.addf %310, %311 : vector<1x16xf32>
    %cst_81 = arith.constant dense<0xFF800000> : vector<1xf32>
    %313 = vector.multi_reduction <maximumf>, %312, %cst_81 [1] : vector<1x16xf32> to vector<1xf32>
    %314 = vector.shape_cast %313 : vector<1xf32> to vector<1x1xf32>
    %315 = vector.broadcast %314 : vector<1x1xf32> to vector<1x16xf32>
    %316 = arith.subf %312, %315 : vector<1x16xf32>
    %317 = math.exp %316 : vector<1x16xf32>
    %cst_82 = arith.constant dense<0.000000e+00> : vector<1xf32>
    %318 = vector.multi_reduction <add>, %317, %cst_82 [1] : vector<1x16xf32> to vector<1xf32>
    %319 = vector.shape_cast %318 : vector<1xf32> to vector<1x1xf32>
    %320 = vector.broadcast %319 : vector<1x1xf32> to vector<1x16xf32>
    %321 = arith.divf %317, %320 : vector<1x16xf32>
    %cst_83 = arith.constant dense<0.000000e+00> : vector<1x32xf32>
    %322 = tpu.matmul %321, %8, %cst_83 {dimension_numbers = #tpu.dot_dimension_numbers<[1], [0], [0], [1], [0, 0, 1, 1], [], []>} : vector<1x16xf32>, vector<16x32xf32>, vector<1x32xf32> -> vector<1x32xf32>
    %cst_84 = arith.constant dense<0.000000e+00> : vector<1x32xf32>
    %323 = tpu.matmul %322, %2, %cst_84 {dimension_numbers = #tpu.dot_dimension_numbers<[1], [0], [0], [1], [0, 0, 1, 1], [], []>} : vector<1x32xf32>, vector<32x32xf32>, vector<1x32xf32> -> vector<1x32xf32>
    %324 = arith.addf %304, %323 : vector<1x32xf32>
    %325 = vector.extract_strided_slice %5 {offsets = [0, 16], sizes = [1, 32], strides = [1, 1]} : vector<1x128xf32> to vector<1x32xf32>
    %326 = arith.addf %324, %325 : vector<1x32xf32>
    %cst_85 = arith.constant 0.000000e+00 : f32
    %327 = vector.broadcast %cst_85 : f32 to vector<1x32xf32>
    %328 = arith.maximumf %326, %327 : vector<1x32xf32>
    %cst_86 = arith.constant dense<0.000000e+00> : vector<1x96xf32>
    %329 = tpu.matmul %328, %3, %cst_86 {dimension_numbers = #tpu.dot_dimension_numbers<[1], [0], [0], [1], [0, 0, 1, 1], [], []>} : vector<1x32xf32>, vector<32x96xf32>, vector<1x96xf32> -> vector<1x96xf32>
    %330 = arith.addf %329, %6 : vector<1x96xf32>
    %331 = vector.extract_strided_slice %330 {offsets = [0, 0], sizes = [1, 32], strides = [1, 1]} : vector<1x96xf32> to vector<1x32xf32>
    %332 = vector.extract_strided_slice %308 {offsets = [0, 0], sizes = [1, 32], strides = [1, 1]} : vector<1x96xf32> to vector<1x32xf32>
    %333 = arith.addf %331, %332 : vector<1x32xf32>
    %334 = arith.negf %333 : vector<1x32xf32>
    %335 = math.exp %334 : vector<1x32xf32>
    %cst_87 = arith.constant 1.000000e+00 : f32
    %336 = vector.broadcast %cst_87 : f32 to vector<1x32xf32>
    %337 = arith.addf %336, %335 : vector<1x32xf32>
    %338 = arith.divf %336, %337 : vector<1x32xf32>
    %339 = vector.extract_strided_slice %330 {offsets = [0, 32], sizes = [1, 32], strides = [1, 1]} : vector<1x96xf32> to vector<1x32xf32>
    %340 = vector.extract_strided_slice %308 {offsets = [0, 32], sizes = [1, 32], strides = [1, 1]} : vector<1x96xf32> to vector<1x32xf32>
    %341 = arith.addf %339, %340 : vector<1x32xf32>
    %342 = arith.negf %341 : vector<1x32xf32>
    %343 = math.exp %342 : vector<1x32xf32>
    %cst_88 = arith.constant 1.000000e+00 : f32
    %344 = vector.broadcast %cst_88 : f32 to vector<1x32xf32>
    %345 = arith.addf %344, %343 : vector<1x32xf32>
    %346 = arith.divf %344, %345 : vector<1x32xf32>
    %347 = vector.extract_strided_slice %330 {offsets = [0, 64], sizes = [1, 32], strides = [1, 1]} : vector<1x96xf32> to vector<1x32xf32>
    %348 = vector.extract_strided_slice %308 {offsets = [0, 64], sizes = [1, 32], strides = [1, 1]} : vector<1x96xf32> to vector<1x32xf32>
    %349 = arith.mulf %338, %348 : vector<1x32xf32>
    %350 = arith.addf %347, %349 : vector<1x32xf32>
    %351 = math.tanh %350 : vector<1x32xf32>
    %cst_89 = arith.constant 1.000000e+00 : f32
    %352 = vector.broadcast %cst_89 : f32 to vector<1x32xf32>
    %353 = arith.subf %352, %346 : vector<1x32xf32>
    %354 = arith.mulf %353, %351 : vector<1x32xf32>
    %355 = arith.mulf %346, %284 : vector<1x32xf32>
    %356 = arith.addf %354, %355 : vector<1x32xf32>
    %cst_90 = arith.constant dense<0.000000e+00> : vector<1x64xf32>
    %357 = tpu.matmul %356, %4, %cst_90 {dimension_numbers = #tpu.dot_dimension_numbers<[1], [0], [0], [1], [0, 0, 1, 1], [], []>} : vector<1x32xf32>, vector<32x64xf32>, vector<1x64xf32> -> vector<1x64xf32>
    %358 = vector.extract_strided_slice %5 {offsets = [0, 48], sizes = [1, 64], strides = [1, 1]} : vector<1x128xf32> to vector<1x64xf32>
    %359 = arith.addf %357, %358 : vector<1x64xf32>
    %cst_91 = arith.constant dense<0xFF800000> : vector<1xf32>
    %360 = vector.multi_reduction <maximumf>, %359, %cst_91 [1] : vector<1x64xf32> to vector<1xf32>
    %361 = vector.shape_cast %360 : vector<1xf32> to vector<1x1xf32>
    %362 = vector.broadcast %361 : vector<1x1xf32> to vector<1x64xf32>
    %363 = arith.subf %359, %362 : vector<1x64xf32>
    %364 = math.exp %363 : vector<1x64xf32>
    %cst_92 = arith.constant dense<0.000000e+00> : vector<1xf32>
    %365 = vector.multi_reduction <add>, %364, %cst_92 [1] : vector<1x64xf32> to vector<1xf32>
    %366 = vector.shape_cast %365 : vector<1xf32> to vector<1x1xf32>
    %367 = math.log %366 : vector<1x1xf32>
    %368 = vector.broadcast %367 : vector<1x1xf32> to vector<1x64xf32>
    %369 = arith.subf %363, %368 : vector<1x64xf32>
    %370 = tpu.concatenate %369, %356, %321, %10 in 1 : vector<1x64xf32>, vector<1x32xf32>, vector<1x16xf32>, vector<1x16xf32> -> vector<1x128xf32>
    %c5 = arith.constant 5 : index
    %371 = memref.load %arg1[%c5] : memref<8xi32, #tpu.memory_space<smem>>
    %372 = arith.index_cast %371 : i32 to index
    %c0_93 = arith.constant 0 : index
    %c0_94 = arith.constant 0 : index
    %373 = vector.load %arg2[%372, %c0_93, %c0_94] : memref<64x1x32xf32, #tpu.memory_space<vmem>>, vector<1x1x32xf32>
    %374 = vector.shape_cast %373 : vector<1x1x32xf32> to vector<1x32xf32>
    %cst_95 = arith.constant dense<0.000000e+00> : vector<1x128xf32>
    %375 = tpu.matmul %374, %0, %cst_95 {dimension_numbers = #tpu.dot_dimension_numbers<[1], [0], [0], [1], [0, 0, 1, 1], [], []>} : vector<1x32xf32>, vector<32x128xf32>, vector<1x128xf32> -> vector<1x128xf32>
    %376 = vector.extract_strided_slice %375 {offsets = [0, 0], sizes = [1, 32], strides = [1, 1]} : vector<1x128xf32> to vector<1x32xf32>
    %377 = vector.extract_strided_slice %375 {offsets = [0, 32], sizes = [1, 16], strides = [1, 1]} : vector<1x128xf32> to vector<1x16xf32>
    %cst_96 = arith.constant dense<0.000000e+00> : vector<1x128xf32>
    %378 = tpu.matmul %356, %1, %cst_96 {dimension_numbers = #tpu.dot_dimension_numbers<[1], [0], [0], [1], [0, 0, 1, 1], [], []>} : vector<1x32xf32>, vector<32x128xf32>, vector<1x128xf32> -> vector<1x128xf32>
    %379 = vector.extract_strided_slice %378 {offsets = [0, 0], sizes = [1, 96], strides = [1, 1]} : vector<1x128xf32> to vector<1x96xf32>
    %380 = arith.addf %379, %7 : vector<1x96xf32>
    %381 = vector.extract_strided_slice %378 {offsets = [0, 96], sizes = [1, 16], strides = [1, 1]} : vector<1x128xf32> to vector<1x16xf32>
    %382 = arith.addf %377, %381 : vector<1x16xf32>
    %383 = vector.extract_strided_slice %5 {offsets = [0, 0], sizes = [1, 16], strides = [1, 1]} : vector<1x128xf32> to vector<1x16xf32>
    %384 = arith.addf %382, %383 : vector<1x16xf32>
    %cst_97 = arith.constant dense<0xFF800000> : vector<1xf32>
    %385 = vector.multi_reduction <maximumf>, %384, %cst_97 [1] : vector<1x16xf32> to vector<1xf32>
    %386 = vector.shape_cast %385 : vector<1xf32> to vector<1x1xf32>
    %387 = vector.broadcast %386 : vector<1x1xf32> to vector<1x16xf32>
    %388 = arith.subf %384, %387 : vector<1x16xf32>
    %389 = math.exp %388 : vector<1x16xf32>
    %cst_98 = arith.constant dense<0.000000e+00> : vector<1xf32>
    %390 = vector.multi_reduction <add>, %389, %cst_98 [1] : vector<1x16xf32> to vector<1xf32>
    %391 = vector.shape_cast %390 : vector<1xf32> to vector<1x1xf32>
    %392 = vector.broadcast %391 : vector<1x1xf32> to vector<1x16xf32>
    %393 = arith.divf %389, %392 : vector<1x16xf32>
    %cst_99 = arith.constant dense<0.000000e+00> : vector<1x32xf32>
    %394 = tpu.matmul %393, %8, %cst_99 {dimension_numbers = #tpu.dot_dimension_numbers<[1], [0], [0], [1], [0, 0, 1, 1], [], []>} : vector<1x16xf32>, vector<16x32xf32>, vector<1x32xf32> -> vector<1x32xf32>
    %cst_100 = arith.constant dense<0.000000e+00> : vector<1x32xf32>
    %395 = tpu.matmul %394, %2, %cst_100 {dimension_numbers = #tpu.dot_dimension_numbers<[1], [0], [0], [1], [0, 0, 1, 1], [], []>} : vector<1x32xf32>, vector<32x32xf32>, vector<1x32xf32> -> vector<1x32xf32>
    %396 = arith.addf %376, %395 : vector<1x32xf32>
    %397 = vector.extract_strided_slice %5 {offsets = [0, 16], sizes = [1, 32], strides = [1, 1]} : vector<1x128xf32> to vector<1x32xf32>
    %398 = arith.addf %396, %397 : vector<1x32xf32>
    %cst_101 = arith.constant 0.000000e+00 : f32
    %399 = vector.broadcast %cst_101 : f32 to vector<1x32xf32>
    %400 = arith.maximumf %398, %399 : vector<1x32xf32>
    %cst_102 = arith.constant dense<0.000000e+00> : vector<1x96xf32>
    %401 = tpu.matmul %400, %3, %cst_102 {dimension_numbers = #tpu.dot_dimension_numbers<[1], [0], [0], [1], [0, 0, 1, 1], [], []>} : vector<1x32xf32>, vector<32x96xf32>, vector<1x96xf32> -> vector<1x96xf32>
    %402 = arith.addf %401, %6 : vector<1x96xf32>
    %403 = vector.extract_strided_slice %402 {offsets = [0, 0], sizes = [1, 32], strides = [1, 1]} : vector<1x96xf32> to vector<1x32xf32>
    %404 = vector.extract_strided_slice %380 {offsets = [0, 0], sizes = [1, 32], strides = [1, 1]} : vector<1x96xf32> to vector<1x32xf32>
    %405 = arith.addf %403, %404 : vector<1x32xf32>
    %406 = arith.negf %405 : vector<1x32xf32>
    %407 = math.exp %406 : vector<1x32xf32>
    %cst_103 = arith.constant 1.000000e+00 : f32
    %408 = vector.broadcast %cst_103 : f32 to vector<1x32xf32>
    %409 = arith.addf %408, %407 : vector<1x32xf32>
    %410 = arith.divf %408, %409 : vector<1x32xf32>
    %411 = vector.extract_strided_slice %402 {offsets = [0, 32], sizes = [1, 32], strides = [1, 1]} : vector<1x96xf32> to vector<1x32xf32>
    %412 = vector.extract_strided_slice %380 {offsets = [0, 32], sizes = [1, 32], strides = [1, 1]} : vector<1x96xf32> to vector<1x32xf32>
    %413 = arith.addf %411, %412 : vector<1x32xf32>
    %414 = arith.negf %413 : vector<1x32xf32>
    %415 = math.exp %414 : vector<1x32xf32>
    %cst_104 = arith.constant 1.000000e+00 : f32
    %416 = vector.broadcast %cst_104 : f32 to vector<1x32xf32>
    %417 = arith.addf %416, %415 : vector<1x32xf32>
    %418 = arith.divf %416, %417 : vector<1x32xf32>
    %419 = vector.extract_strided_slice %402 {offsets = [0, 64], sizes = [1, 32], strides = [1, 1]} : vector<1x96xf32> to vector<1x32xf32>
    %420 = vector.extract_strided_slice %380 {offsets = [0, 64], sizes = [1, 32], strides = [1, 1]} : vector<1x96xf32> to vector<1x32xf32>
    %421 = arith.mulf %410, %420 : vector<1x32xf32>
    %422 = arith.addf %419, %421 : vector<1x32xf32>
    %423 = math.tanh %422 : vector<1x32xf32>
    %cst_105 = arith.constant 1.000000e+00 : f32
    %424 = vector.broadcast %cst_105 : f32 to vector<1x32xf32>
    %425 = arith.subf %424, %418 : vector<1x32xf32>
    %426 = arith.mulf %425, %423 : vector<1x32xf32>
    %427 = arith.mulf %418, %356 : vector<1x32xf32>
    %428 = arith.addf %426, %427 : vector<1x32xf32>
    %cst_106 = arith.constant dense<0.000000e+00> : vector<1x64xf32>
    %429 = tpu.matmul %428, %4, %cst_106 {dimension_numbers = #tpu.dot_dimension_numbers<[1], [0], [0], [1], [0, 0, 1, 1], [], []>} : vector<1x32xf32>, vector<32x64xf32>, vector<1x64xf32> -> vector<1x64xf32>
    %430 = vector.extract_strided_slice %5 {offsets = [0, 48], sizes = [1, 64], strides = [1, 1]} : vector<1x128xf32> to vector<1x64xf32>
    %431 = arith.addf %429, %430 : vector<1x64xf32>
    %cst_107 = arith.constant dense<0xFF800000> : vector<1xf32>
    %432 = vector.multi_reduction <maximumf>, %431, %cst_107 [1] : vector<1x64xf32> to vector<1xf32>
    %433 = vector.shape_cast %432 : vector<1xf32> to vector<1x1xf32>
    %434 = vector.broadcast %433 : vector<1x1xf32> to vector<1x64xf32>
    %435 = arith.subf %431, %434 : vector<1x64xf32>
    %436 = math.exp %435 : vector<1x64xf32>
    %cst_108 = arith.constant dense<0.000000e+00> : vector<1xf32>
    %437 = vector.multi_reduction <add>, %436, %cst_108 [1] : vector<1x64xf32> to vector<1xf32>
    %438 = vector.shape_cast %437 : vector<1xf32> to vector<1x1xf32>
    %439 = math.log %438 : vector<1x1xf32>
    %440 = vector.broadcast %439 : vector<1x1xf32> to vector<1x64xf32>
    %441 = arith.subf %435, %440 : vector<1x64xf32>
    %442 = tpu.concatenate %441, %428, %393, %10 in 1 : vector<1x64xf32>, vector<1x32xf32>, vector<1x16xf32>, vector<1x16xf32> -> vector<1x128xf32>
    %c6 = arith.constant 6 : index
    %443 = memref.load %arg1[%c6] : memref<8xi32, #tpu.memory_space<smem>>
    %444 = arith.index_cast %443 : i32 to index
    %c0_109 = arith.constant 0 : index
    %c0_110 = arith.constant 0 : index
    %445 = vector.load %arg2[%444, %c0_109, %c0_110] : memref<64x1x32xf32, #tpu.memory_space<vmem>>, vector<1x1x32xf32>
    %446 = vector.shape_cast %445 : vector<1x1x32xf32> to vector<1x32xf32>
    %cst_111 = arith.constant dense<0.000000e+00> : vector<1x128xf32>
    %447 = tpu.matmul %446, %0, %cst_111 {dimension_numbers = #tpu.dot_dimension_numbers<[1], [0], [0], [1], [0, 0, 1, 1], [], []>} : vector<1x32xf32>, vector<32x128xf32>, vector<1x128xf32> -> vector<1x128xf32>
    %448 = vector.extract_strided_slice %447 {offsets = [0, 0], sizes = [1, 32], strides = [1, 1]} : vector<1x128xf32> to vector<1x32xf32>
    %449 = vector.extract_strided_slice %447 {offsets = [0, 32], sizes = [1, 16], strides = [1, 1]} : vector<1x128xf32> to vector<1x16xf32>
    %cst_112 = arith.constant dense<0.000000e+00> : vector<1x128xf32>
    %450 = tpu.matmul %428, %1, %cst_112 {dimension_numbers = #tpu.dot_dimension_numbers<[1], [0], [0], [1], [0, 0, 1, 1], [], []>} : vector<1x32xf32>, vector<32x128xf32>, vector<1x128xf32> -> vector<1x128xf32>
    %451 = vector.extract_strided_slice %450 {offsets = [0, 0], sizes = [1, 96], strides = [1, 1]} : vector<1x128xf32> to vector<1x96xf32>
    %452 = arith.addf %451, %7 : vector<1x96xf32>
    %453 = vector.extract_strided_slice %450 {offsets = [0, 96], sizes = [1, 16], strides = [1, 1]} : vector<1x128xf32> to vector<1x16xf32>
    %454 = arith.addf %449, %453 : vector<1x16xf32>
    %455 = vector.extract_strided_slice %5 {offsets = [0, 0], sizes = [1, 16], strides = [1, 1]} : vector<1x128xf32> to vector<1x16xf32>
    %456 = arith.addf %454, %455 : vector<1x16xf32>
    %cst_113 = arith.constant dense<0xFF800000> : vector<1xf32>
    %457 = vector.multi_reduction <maximumf>, %456, %cst_113 [1] : vector<1x16xf32> to vector<1xf32>
    %458 = vector.shape_cast %457 : vector<1xf32> to vector<1x1xf32>
    %459 = vector.broadcast %458 : vector<1x1xf32> to vector<1x16xf32>
    %460 = arith.subf %456, %459 : vector<1x16xf32>
    %461 = math.exp %460 : vector<1x16xf32>
    %cst_114 = arith.constant dense<0.000000e+00> : vector<1xf32>
    %462 = vector.multi_reduction <add>, %461, %cst_114 [1] : vector<1x16xf32> to vector<1xf32>
    %463 = vector.shape_cast %462 : vector<1xf32> to vector<1x1xf32>
    %464 = vector.broadcast %463 : vector<1x1xf32> to vector<1x16xf32>
    %465 = arith.divf %461, %464 : vector<1x16xf32>
    %cst_115 = arith.constant dense<0.000000e+00> : vector<1x32xf32>
    %466 = tpu.matmul %465, %8, %cst_115 {dimension_numbers = #tpu.dot_dimension_numbers<[1], [0], [0], [1], [0, 0, 1, 1], [], []>} : vector<1x16xf32>, vector<16x32xf32>, vector<1x32xf32> -> vector<1x32xf32>
    %cst_116 = arith.constant dense<0.000000e+00> : vector<1x32xf32>
    %467 = tpu.matmul %466, %2, %cst_116 {dimension_numbers = #tpu.dot_dimension_numbers<[1], [0], [0], [1], [0, 0, 1, 1], [], []>} : vector<1x32xf32>, vector<32x32xf32>, vector<1x32xf32> -> vector<1x32xf32>
    %468 = arith.addf %448, %467 : vector<1x32xf32>
    %469 = vector.extract_strided_slice %5 {offsets = [0, 16], sizes = [1, 32], strides = [1, 1]} : vector<1x128xf32> to vector<1x32xf32>
    %470 = arith.addf %468, %469 : vector<1x32xf32>
    %cst_117 = arith.constant 0.000000e+00 : f32
    %471 = vector.broadcast %cst_117 : f32 to vector<1x32xf32>
    %472 = arith.maximumf %470, %471 : vector<1x32xf32>
    %cst_118 = arith.constant dense<0.000000e+00> : vector<1x96xf32>
    %473 = tpu.matmul %472, %3, %cst_118 {dimension_numbers = #tpu.dot_dimension_numbers<[1], [0], [0], [1], [0, 0, 1, 1], [], []>} : vector<1x32xf32>, vector<32x96xf32>, vector<1x96xf32> -> vector<1x96xf32>
    %474 = arith.addf %473, %6 : vector<1x96xf32>
    %475 = vector.extract_strided_slice %474 {offsets = [0, 0], sizes = [1, 32], strides = [1, 1]} : vector<1x96xf32> to vector<1x32xf32>
    %476 = vector.extract_strided_slice %452 {offsets = [0, 0], sizes = [1, 32], strides = [1, 1]} : vector<1x96xf32> to vector<1x32xf32>
    %477 = arith.addf %475, %476 : vector<1x32xf32>
    %478 = arith.negf %477 : vector<1x32xf32>
    %479 = math.exp %478 : vector<1x32xf32>
    %cst_119 = arith.constant 1.000000e+00 : f32
    %480 = vector.broadcast %cst_119 : f32 to vector<1x32xf32>
    %481 = arith.addf %480, %479 : vector<1x32xf32>
    %482 = arith.divf %480, %481 : vector<1x32xf32>
    %483 = vector.extract_strided_slice %474 {offsets = [0, 32], sizes = [1, 32], strides = [1, 1]} : vector<1x96xf32> to vector<1x32xf32>
    %484 = vector.extract_strided_slice %452 {offsets = [0, 32], sizes = [1, 32], strides = [1, 1]} : vector<1x96xf32> to vector<1x32xf32>
    %485 = arith.addf %483, %484 : vector<1x32xf32>
    %486 = arith.negf %485 : vector<1x32xf32>
    %487 = math.exp %486 : vector<1x32xf32>
    %cst_120 = arith.constant 1.000000e+00 : f32
    %488 = vector.broadcast %cst_120 : f32 to vector<1x32xf32>
    %489 = arith.addf %488, %487 : vector<1x32xf32>
    %490 = arith.divf %488, %489 : vector<1x32xf32>
    %491 = vector.extract_strided_slice %474 {offsets = [0, 64], sizes = [1, 32], strides = [1, 1]} : vector<1x96xf32> to vector<1x32xf32>
    %492 = vector.extract_strided_slice %452 {offsets = [0, 64], sizes = [1, 32], strides = [1, 1]} : vector<1x96xf32> to vector<1x32xf32>
    %493 = arith.mulf %482, %492 : vector<1x32xf32>
    %494 = arith.addf %491, %493 : vector<1x32xf32>
    %495 = math.tanh %494 : vector<1x32xf32>
    %cst_121 = arith.constant 1.000000e+00 : f32
    %496 = vector.broadcast %cst_121 : f32 to vector<1x32xf32>
    %497 = arith.subf %496, %490 : vector<1x32xf32>
    %498 = arith.mulf %497, %495 : vector<1x32xf32>
    %499 = arith.mulf %490, %428 : vector<1x32xf32>
    %500 = arith.addf %498, %499 : vector<1x32xf32>
    %cst_122 = arith.constant dense<0.000000e+00> : vector<1x64xf32>
    %501 = tpu.matmul %500, %4, %cst_122 {dimension_numbers = #tpu.dot_dimension_numbers<[1], [0], [0], [1], [0, 0, 1, 1], [], []>} : vector<1x32xf32>, vector<32x64xf32>, vector<1x64xf32> -> vector<1x64xf32>
    %502 = vector.extract_strided_slice %5 {offsets = [0, 48], sizes = [1, 64], strides = [1, 1]} : vector<1x128xf32> to vector<1x64xf32>
    %503 = arith.addf %501, %502 : vector<1x64xf32>
    %cst_123 = arith.constant dense<0xFF800000> : vector<1xf32>
    %504 = vector.multi_reduction <maximumf>, %503, %cst_123 [1] : vector<1x64xf32> to vector<1xf32>
    %505 = vector.shape_cast %504 : vector<1xf32> to vector<1x1xf32>
    %506 = vector.broadcast %505 : vector<1x1xf32> to vector<1x64xf32>
    %507 = arith.subf %503, %506 : vector<1x64xf32>
    %508 = math.exp %507 : vector<1x64xf32>
    %cst_124 = arith.constant dense<0.000000e+00> : vector<1xf32>
    %509 = vector.multi_reduction <add>, %508, %cst_124 [1] : vector<1x64xf32> to vector<1xf32>
    %510 = vector.shape_cast %509 : vector<1xf32> to vector<1x1xf32>
    %511 = math.log %510 : vector<1x1xf32>
    %512 = vector.broadcast %511 : vector<1x1xf32> to vector<1x64xf32>
    %513 = arith.subf %507, %512 : vector<1x64xf32>
    %514 = tpu.concatenate %513, %500, %465, %10 in 1 : vector<1x64xf32>, vector<1x32xf32>, vector<1x16xf32>, vector<1x16xf32> -> vector<1x128xf32>
    %c7 = arith.constant 7 : index
    %515 = memref.load %arg1[%c7] : memref<8xi32, #tpu.memory_space<smem>>
    %516 = arith.index_cast %515 : i32 to index
    %c0_125 = arith.constant 0 : index
    %c0_126 = arith.constant 0 : index
    %517 = vector.load %arg2[%516, %c0_125, %c0_126] : memref<64x1x32xf32, #tpu.memory_space<vmem>>, vector<1x1x32xf32>
    %518 = vector.shape_cast %517 : vector<1x1x32xf32> to vector<1x32xf32>
    %cst_127 = arith.constant dense<0.000000e+00> : vector<1x128xf32>
    %519 = tpu.matmul %518, %0, %cst_127 {dimension_numbers = #tpu.dot_dimension_numbers<[1], [0], [0], [1], [0, 0, 1, 1], [], []>} : vector<1x32xf32>, vector<32x128xf32>, vector<1x128xf32> -> vector<1x128xf32>
    %520 = vector.extract_strided_slice %519 {offsets = [0, 0], sizes = [1, 32], strides = [1, 1]} : vector<1x128xf32> to vector<1x32xf32>
    %521 = vector.extract_strided_slice %519 {offsets = [0, 32], sizes = [1, 16], strides = [1, 1]} : vector<1x128xf32> to vector<1x16xf32>
    %cst_128 = arith.constant dense<0.000000e+00> : vector<1x128xf32>
    %522 = tpu.matmul %500, %1, %cst_128 {dimension_numbers = #tpu.dot_dimension_numbers<[1], [0], [0], [1], [0, 0, 1, 1], [], []>} : vector<1x32xf32>, vector<32x128xf32>, vector<1x128xf32> -> vector<1x128xf32>
    %523 = vector.extract_strided_slice %522 {offsets = [0, 0], sizes = [1, 96], strides = [1, 1]} : vector<1x128xf32> to vector<1x96xf32>
    %524 = arith.addf %523, %7 : vector<1x96xf32>
    %525 = vector.extract_strided_slice %522 {offsets = [0, 96], sizes = [1, 16], strides = [1, 1]} : vector<1x128xf32> to vector<1x16xf32>
    %526 = arith.addf %521, %525 : vector<1x16xf32>
    %527 = vector.extract_strided_slice %5 {offsets = [0, 0], sizes = [1, 16], strides = [1, 1]} : vector<1x128xf32> to vector<1x16xf32>
    %528 = arith.addf %526, %527 : vector<1x16xf32>
    %cst_129 = arith.constant dense<0xFF800000> : vector<1xf32>
    %529 = vector.multi_reduction <maximumf>, %528, %cst_129 [1] : vector<1x16xf32> to vector<1xf32>
    %530 = vector.shape_cast %529 : vector<1xf32> to vector<1x1xf32>
    %531 = vector.broadcast %530 : vector<1x1xf32> to vector<1x16xf32>
    %532 = arith.subf %528, %531 : vector<1x16xf32>
    %533 = math.exp %532 : vector<1x16xf32>
    %cst_130 = arith.constant dense<0.000000e+00> : vector<1xf32>
    %534 = vector.multi_reduction <add>, %533, %cst_130 [1] : vector<1x16xf32> to vector<1xf32>
    %535 = vector.shape_cast %534 : vector<1xf32> to vector<1x1xf32>
    %536 = vector.broadcast %535 : vector<1x1xf32> to vector<1x16xf32>
    %537 = arith.divf %533, %536 : vector<1x16xf32>
    %cst_131 = arith.constant dense<0.000000e+00> : vector<1x32xf32>
    %538 = tpu.matmul %537, %8, %cst_131 {dimension_numbers = #tpu.dot_dimension_numbers<[1], [0], [0], [1], [0, 0, 1, 1], [], []>} : vector<1x16xf32>, vector<16x32xf32>, vector<1x32xf32> -> vector<1x32xf32>
    %cst_132 = arith.constant dense<0.000000e+00> : vector<1x32xf32>
    %539 = tpu.matmul %538, %2, %cst_132 {dimension_numbers = #tpu.dot_dimension_numbers<[1], [0], [0], [1], [0, 0, 1, 1], [], []>} : vector<1x32xf32>, vector<32x32xf32>, vector<1x32xf32> -> vector<1x32xf32>
    %540 = arith.addf %520, %539 : vector<1x32xf32>
    %541 = vector.extract_strided_slice %5 {offsets = [0, 16], sizes = [1, 32], strides = [1, 1]} : vector<1x128xf32> to vector<1x32xf32>
    %542 = arith.addf %540, %541 : vector<1x32xf32>
    %cst_133 = arith.constant 0.000000e+00 : f32
    %543 = vector.broadcast %cst_133 : f32 to vector<1x32xf32>
    %544 = arith.maximumf %542, %543 : vector<1x32xf32>
    %cst_134 = arith.constant dense<0.000000e+00> : vector<1x96xf32>
    %545 = tpu.matmul %544, %3, %cst_134 {dimension_numbers = #tpu.dot_dimension_numbers<[1], [0], [0], [1], [0, 0, 1, 1], [], []>} : vector<1x32xf32>, vector<32x96xf32>, vector<1x96xf32> -> vector<1x96xf32>
    %546 = arith.addf %545, %6 : vector<1x96xf32>
    %547 = vector.extract_strided_slice %546 {offsets = [0, 0], sizes = [1, 32], strides = [1, 1]} : vector<1x96xf32> to vector<1x32xf32>
    %548 = vector.extract_strided_slice %524 {offsets = [0, 0], sizes = [1, 32], strides = [1, 1]} : vector<1x96xf32> to vector<1x32xf32>
    %549 = arith.addf %547, %548 : vector<1x32xf32>
    %550 = arith.negf %549 : vector<1x32xf32>
    %551 = math.exp %550 : vector<1x32xf32>
    %cst_135 = arith.constant 1.000000e+00 : f32
    %552 = vector.broadcast %cst_135 : f32 to vector<1x32xf32>
    %553 = arith.addf %552, %551 : vector<1x32xf32>
    %554 = arith.divf %552, %553 : vector<1x32xf32>
    %555 = vector.extract_strided_slice %546 {offsets = [0, 32], sizes = [1, 32], strides = [1, 1]} : vector<1x96xf32> to vector<1x32xf32>
    %556 = vector.extract_strided_slice %524 {offsets = [0, 32], sizes = [1, 32], strides = [1, 1]} : vector<1x96xf32> to vector<1x32xf32>
    %557 = arith.addf %555, %556 : vector<1x32xf32>
    %558 = arith.negf %557 : vector<1x32xf32>
    %559 = math.exp %558 : vector<1x32xf32>
    %cst_136 = arith.constant 1.000000e+00 : f32
    %560 = vector.broadcast %cst_136 : f32 to vector<1x32xf32>
    %561 = arith.addf %560, %559 : vector<1x32xf32>
    %562 = arith.divf %560, %561 : vector<1x32xf32>
    %563 = vector.extract_strided_slice %546 {offsets = [0, 64], sizes = [1, 32], strides = [1, 1]} : vector<1x96xf32> to vector<1x32xf32>
    %564 = vector.extract_strided_slice %524 {offsets = [0, 64], sizes = [1, 32], strides = [1, 1]} : vector<1x96xf32> to vector<1x32xf32>
    %565 = arith.mulf %554, %564 : vector<1x32xf32>
    %566 = arith.addf %563, %565 : vector<1x32xf32>
    %567 = math.tanh %566 : vector<1x32xf32>
    %cst_137 = arith.constant 1.000000e+00 : f32
    %568 = vector.broadcast %cst_137 : f32 to vector<1x32xf32>
    %569 = arith.subf %568, %562 : vector<1x32xf32>
    %570 = arith.mulf %569, %567 : vector<1x32xf32>
    %571 = arith.mulf %562, %500 : vector<1x32xf32>
    %572 = arith.addf %570, %571 : vector<1x32xf32>
    %cst_138 = arith.constant dense<0.000000e+00> : vector<1x64xf32>
    %573 = tpu.matmul %572, %4, %cst_138 {dimension_numbers = #tpu.dot_dimension_numbers<[1], [0], [0], [1], [0, 0, 1, 1], [], []>} : vector<1x32xf32>, vector<32x64xf32>, vector<1x64xf32> -> vector<1x64xf32>
    %574 = vector.extract_strided_slice %5 {offsets = [0, 48], sizes = [1, 64], strides = [1, 1]} : vector<1x128xf32> to vector<1x64xf32>
    %575 = arith.addf %573, %574 : vector<1x64xf32>
    %cst_139 = arith.constant dense<0xFF800000> : vector<1xf32>
    %576 = vector.multi_reduction <maximumf>, %575, %cst_139 [1] : vector<1x64xf32> to vector<1xf32>
    %577 = vector.shape_cast %576 : vector<1xf32> to vector<1x1xf32>
    %578 = vector.broadcast %577 : vector<1x1xf32> to vector<1x64xf32>
    %579 = arith.subf %575, %578 : vector<1x64xf32>
    %580 = math.exp %579 : vector<1x64xf32>
    %cst_140 = arith.constant dense<0.000000e+00> : vector<1xf32>
    %581 = vector.multi_reduction <add>, %580, %cst_140 [1] : vector<1x64xf32> to vector<1xf32>
    %582 = vector.shape_cast %581 : vector<1xf32> to vector<1x1xf32>
    %583 = math.log %582 : vector<1x1xf32>
    %584 = vector.broadcast %583 : vector<1x1xf32> to vector<1x64xf32>
    %585 = arith.subf %579, %584 : vector<1x64xf32>
    %586 = tpu.concatenate %585, %572, %537, %10 in 1 : vector<1x64xf32>, vector<1x32xf32>, vector<1x16xf32>, vector<1x16xf32> -> vector<1x128xf32>
    %587 = tpu.concatenate %82, %154, %226, %298, %370, %442, %514, %586 in 0 : vector<1x128xf32>, vector<1x128xf32>, vector<1x128xf32>, vector<1x128xf32>, vector<1x128xf32>, vector<1x128xf32>, vector<1x128xf32>, vector<1x128xf32> -> vector<8x128xf32>
    %c0_141 = arith.constant 0 : index
    %c0_142 = arith.constant 0 : index
    %588 = vector.load %arg6[%c0_141, %c0_142] : memref<8x128xf32, #tpu.memory_space<vmem>>, vector<8x128xf32>
    tpu.vector_store %arg6[%c0_141, %c0_142], %587 {strides = array<i32>} : memref<8x128xf32, #tpu.memory_space<vmem>>, vector<8x128xf32>,
    return
  }
  func.func @transform_0(%arg0: i32, %arg1: memref<8xi32, #tpu.memory_space<smem>>) -> (i32, i32, i32) {
    %c0_i32 = arith.constant 0 : i32
    %c0_i32_0 = arith.constant 0 : i32
    %c0_i32_1 = arith.constant 0 : i32
    %c0_i32_2 = arith.constant 0 : i32
    return %c0_i32, %c0_i32_0, %c0_i32_1 : i32, i32, i32
  }
  func.func @transform_1(%arg0: i32, %arg1: memref<8xi32, #tpu.memory_space<smem>>) -> (i32, i32) {
    %c0_i32 = arith.constant 0 : i32
    %c0_i32_0 = arith.constant 0 : i32
    %c0_i32_1 = arith.constant 0 : i32
    return %c0_i32, %c0_i32_0 : i32, i32
  }
  func.func @transform_2(%arg0: i32, %arg1: memref<8xi32, #tpu.memory_space<smem>>) -> (i32, i32) {
    %c0_i32 = arith.constant 0 : i32
    %c0_i32_0 = arith.constant 0 : i32
    %c0_i32_1 = arith.constant 0 : i32
    return %c0_i32, %c0_i32_0 : i32, i32
  }
  func.func @transform_3(%arg0: i32, %arg1: memref<8xi32, #tpu.memory_space<smem>>) -> (i32, i32) {
    %c0_i32 = arith.constant 0 : i32
    %c0_i32_0 = arith.constant 0 : i32
    %c0_i32_1 = arith.constant 0 : i32
    return %c0_i32, %c0_i32_0 : i32, i32
  }
  func.func @transform_4(%arg0: i32, %arg1: memref<8xi32, #tpu.memory_space<smem>>) -> (i32, i32) {
    %c0_i32 = arith.constant 0 : i32
    %c0_i32_0 = arith.constant 0 : i32
    %c0_i32_1 = arith.constant 0 : i32
    return %c0_i32, %c0_i32_0 : i32, i32
  }
}

</mosaic_0001>

<llo_original>
// kernel: tpu_custom_call.1
$region0: #{tpu_custom_call.1}
  #allocation0 [shape = 'u32[]', space=smem, size = 0x4, offset = 0x4, fixed_abs, tag = 'smem constant byte address 0x4 - core index']
  #allocation1 [shape = 'u32[144,128]{1,0:T(1,128)}', space=vmem, size = 0x12000, scoped, tag = 'internal scratch']
  #allocation2 [shape = 's32[1]{0}', space=sflag, size = 0x4, scoped, tag = 'scoped memory for tpu_custom_call.1']
  #allocation3 [shape = 'u8[512]{0}', space=smem, size = 0x200, scoped, tag = 'prefetched SMEM operand 0']
  %s0 = inlined_call_operand.vmem [shape: s32[8], index: 0, kind: input, shape index: {}]
  %s1 = inlined_call_operand.vmem [shape: f32[64,1,32], index: 1, kind: input, shape index: {}]
  %s2 = inlined_call_operand.hbm [shape: f32[168,128], index: 2, kind: input, shape index: {}]
  %s3 = inlined_call_operand.vmem [shape: f32[16,32], index: 3, kind: input, shape index: {}]
  %s4 = inlined_call_operand.vmem [shape: f32[1,32], index: 4, kind: input, shape index: {}]
  %s5 = inlined_call_operand.hbm [shape: f32[8,128], index: 5, kind: output, shape index: {}]
  %s6 = sld [smem:[#allocation0]]
  $region30: #{tpu_custom_call.1} parent=0
    _
  %s8 = ssub.s32 1, %s6
  %s9 = scalar_select 0, %s8, %s6
  %s10 = sshll.u32 %s0, 4
  %s11 = int_to_ptr.vmem [resolvable:$true] %s10
  %13 = dma.vmem_to_smem %s11, 16, [#allocation3], [#allocation2]
  %14 = dma.done [#allocation2], 16
  %15 = sfence
  $region1: #{tpu_custom_call.1} parent=0
    #allocation4 [shape = 'u8[86016]{0}', space=vmem, size = 0x15000, scoped, tag = 'input window, operand 2, single buffered']
    #allocation5 [shape = 's32[1]{0}', space=sflag, size = 0x4, scoped, tag = 'scoped memory for tpu_custom_call.1']
    #allocation6 [shape = 's32[1]{0}', space=sflag, size = 0x4, scoped, tag = 'scoped memory for tpu_custom_call.1']
    #allocation7 [shape = 'u8[4096]{0}', space=vmem, size = 0x1000, scoped, tag = 'output window, operand 0, single buffered']
    %16 = vsyncpa [#allocation5], 0
    %17 = vsyncpa [#allocation6], 0
    // Predicated region
    $region2: #{tpu_custom_call.1} parent=1 // pred_check
      _
    $region3: #{tpu_custom_call.1} parent=1 // pred_check_branch
      %19 = sbr.rel (0) target = $region5
    $region4: #{tpu_custom_call.1} parent=1 // pred_region
      _
    $region5: #{tpu_custom_call.1} parent=1 // pred_fallthru
      _
    // Predicated region
    $region6: #{tpu_custom_call.1} parent=1 // pred_check
      _
    $region7: #{tpu_custom_call.1} parent=1 // pred_check_branch
      %21 = sbr.rel (0) target = $region9
    $region8: #{tpu_custom_call.1} parent=1 // pred_region
      %s23 = ssub.s32 2688, 2688
      %24 = vsyncadd [#allocation5], %s23
      %s25 = sshll.u32 [#allocation4], 4
      %s26 = int_to_ptr.vmem [resolvable:$true] %s25
      %31 = dma.hbm_to_vmem [thread:$0]  %s2, 2688, %s26, [#allocation5], 128, 128, 8
    $region9: #{tpu_custom_call.1} parent=1 // pred_fallthru
      _
    // Predicated region
    $region10: #{tpu_custom_call.1} parent=1 // pred_check
      _
    $region11: #{tpu_custom_call.1} parent=1 // pred_check_branch
      %33 = sbr.rel (0) target = $region13
    $region12: #{tpu_custom_call.1} parent=1 // pred_region
      _
    $region13: #{tpu_custom_call.1} parent=1 // pred_fallthru
      _
    // Predicated region
    $region14: #{tpu_custom_call.1} parent=1 // pred_check
      _
    $region15: #{tpu_custom_call.1} parent=1 // pred_check_branch
      %35 = sbr.rel (0) target = $region17
    $region16: #{tpu_custom_call.1} parent=1 // pred_region
      _
    $region17: #{tpu_custom_call.1} parent=1 // pred_fallthru
      _
    // Predicated region
    $region18: #{tpu_custom_call.1} parent=1 // pred_check
      _
    $region19: #{tpu_custom_call.1} parent=1 // pred_check_branch
      %37 = sbr.rel (0) target = $region21
    $region20: #{tpu_custom_call.1} parent=1 // pred_region
      %38 = dma.done [#allocation5], 2688
    $region21: #{tpu_custom_call.1} parent=1 // pred_fallthru
      _
    %v39 = vld [vmem:[#allocation4] sm:$0xff]
    %v40 = vld [vmem:[#allocation4 + $0x8] sm:$0xff]
    %v41 = vld [vmem:[#allocation4 + $0x10] sm:$0xff]
    %v42 = vld [vmem:[#allocation4 + $0x18] sm:$0xff]
    %v43 = vld [vmem:[#allocation4 + $0x20] sm:$0xff]
    %v44 = vld [vmem:[#allocation4 + $0x28] sm:$0xff]
    %v45 = vld [vmem:[#allocation4 + $0x30] sm:$0xff]
    %v46 = vld [vmem:[#allocation4 + $0x38] sm:$0xff]
    %v47 = vld [vmem:[#allocation4 + $0x40] sm:$0xff]
    %v48 = vld [vmem:[#allocation4 + $0x48] sm:$0xff]
    %v49 = vld [vmem:[#allocation4 + $0x50] sm:$0xff]
    %v50 = vld [vmem:[#allocation4 + $0x58] sm:$0xff]
    %v51 = vld [vmem:[#allocation4 + $0x60] sm:$0xff]
    %v52 = vld [vmem:[#allocation4 + $0x68] sm:$0xff]
    %v53 = vld [vmem:[#allocation4 + $0x70] sm:$0xff]
    %v54 = vld [vmem:[#allocation4 + $0x78] sm:$0xff]
    %v55 = vld [vmem:[#allocation4 + $0x80] sm:$0xff]
    %v56 = vld [vmem:[#allocation4 + $0x88] sm:$0xff]
    %v57 = vld [vmem:[#allocation4 + $0x90] sm:$0xff]
    %v58 = vld [vmem:[#allocation4 + $0x98] sm:$0xff]
    %v59 = vld [vmem:[#allocation4 + $0xa0] sm:$0x1]
    %v60 = vld [vmem:[#allocation4 + $0xa1] sm:$0x1]
    %v61 = vld [vmem:[#allocation4 + $0xa2] sm:$0x1]
    %v62 = vld [vmem:[%s3] sm:$0xff]
    %v63 = vld [vmem:[%s3 + $0x8] sm:$0xff]
    %v64 = vld [vmem:[%s4] sm:$0x1]
    %s65 = sld [smem:[#allocation3]]
    %s66 = scalar_lea.vmem %s1, %s65
    %v67 = vld [vmem:[%s66] sm:$0x1]
    %vm68 = vcmask 261120
    %v70 = vsel %vm68, %v67, 0
    %72 = vmatprep.subr.mxu0 0.0
    %73 = vmatpush1.msra.mxu0 0.0
    %74 = vmatprep.subr.mxu0 0.0
    %75 = vmatpush1.msra.mxu0 0.0
    %76 = vmatprep.subr.mxu0 0.0
    %77 = vmatpush1.msra.mxu0 0.0
    %78 = vmatprep.subr.mxu0 0.0
    %79 = vmatpush1.msra.mxu0 0.0
    %80 = vmatprep.subr.mxu0 0.0
    %81 = vmatpush1.msra.mxu0 0.0
    %82 = vmatprep.subr.mxu0 0.0
    %83 = vmatpush1.msra.mxu0 0.0
    %84 = vmatprep.subr.mxu0 0.0
    %85 = vmatpush1.msra.mxu0 0.0
    %86 = vmatprep.subr.mxu0 0.0
    %87 = vmatpush1.msra.mxu0 0.0
    %88 = vmatprep.subr.mxu0 0.0
    %89 = vmatpush1.msra.mxu0 0.0
    %90 = vmatprep.subr.mxu0 0.0
    %91 = vmatpush1.msra.mxu0 0.0
    %92 = vmatprep.subr.mxu0 0.0
    %93 = vmatpush1.msra.mxu0 0.0
    %94 = vmatprep.subr.mxu0 0.0
    %95 = vmatpush1.msra.mxu0 0.0
    %96 = vmatprep.subr.mxu0 0.0
    %97 = vmatpush1.msra.mxu0 %v42
    %98 = vmatprep.subr.mxu0 0.0
    %99 = vmatpush1.msra.mxu0 %v41
    %100 = vmatprep.subr.mxu0 0.0
    %101 = vmatpush1.msra.mxu0 %v40
    %102 = vmatprep.subr.mxu0 0.0
    %103 = vmatpush1.msra.mxu0 %v39
    %104 = vmatprep.subr.mxu0 0.0
    %105 = vmatpush2.msra.mxu0 0.0
    %106 = vmatprep.subr.mxu0 0.0
    %107 = vmatpush2.msra.mxu0 0.0
    %108 = vmatprep.subr.mxu0 0.0
    %109 = vmatpush2.msra.mxu0 0.0
    %110 = vmatprep.subr.mxu0 0.0
    %111 = vmatpush2.msra.mxu0 0.0
    %112 = vmatprep.subr.mxu0 0.0
    %113 = vmatpush2.msra.mxu0 0.0
    %114 = vmatprep.subr.mxu0 0.0
    %115 = vmatpush2.msra.mxu0 0.0
    %116 = vmatprep.subr.mxu0 0.0
    %117 = vmatpush2.msra.mxu0 0.0
    %118 = vmatprep.subr.mxu0 0.0
    %119 = vmatpush2.msra.mxu0 0.0
    %120 = vmatprep.subr.mxu0 0.0
    %121 = vmatpush2.msra.mxu0 0.0
    %122 = vmatprep.subr.mxu0 0.0
    %123 = vmatpush2.msra.mxu0 0.0
    %124 = vmatprep.subr.mxu0 0.0
    %125 = vmatpush2.msra.mxu0 0.0
    %126 = vmatprep.subr.mxu0 0.0
    %127 = vmatpush2.msra.mxu0 0.0
    %128 = vmatprep.subr.mxu0 0.0
    %129 = vmatpush2.msra.mxu0 0.0
    %130 = vmatprep.subr.mxu0 0.0
    %131 = vmatpush2.msra.mxu0 0.0
    %132 = vmatprep.subr.mxu0 0.0
    %133 = vmatpush2.msra.mxu0 0.0
    %134 = vmatprep.subr.mxu0 0.0
    %135 = vmatpush2.msra.mxu0 0.0
    %136 = vmatprep.mubr.f32.mxu0 0.0
    %137 = vmatmul.mubr.f32.gmra.mxu0 %v70
    %v138 = vpop.f32.mrf.mxu0
    %v139 = vadd.f32 0.0, %v138
    %v140 = vpop.f32.mrf.mxu0
    %141 = vdwg.mxu0
    %v143 = vsel %vm68, %v64, 0
    %145 = vmatprep.subr.mxu0 0.0
    %146 = vmatpush1.msra.mxu0 0.0
    %147 = vmatprep.subr.mxu0 0.0
    %148 = vmatpush1.msra.mxu0 0.0
    %149 = vmatprep.subr.mxu0 0.0
    %150 = vmatpush1.msra.mxu0 0.0
    %151 = vmatprep.subr.mxu0 0.0
    %152 = vmatpush1.msra.mxu0 0.0
    %153 = vmatprep.subr.mxu0 0.0
    %154 = vmatpush1.msra.mxu0 0.0
    %155 = vmatprep.subr.mxu0 0.0
    %156 = vmatpush1.msra.mxu0 0.0
    %157 = vmatprep.subr.mxu0 0.0
    %158 = vmatpush1.msra.mxu0 0.0
    %159 = vmatprep.subr.mxu0 0.0
    %160 = vmatpush1.msra.mxu0 0.0
    %161 = vmatprep.subr.mxu0 0.0
    %162 = vmatpush1.msra.mxu0 0.0
    %163 = vmatprep.subr.mxu0 0.0
    %164 = vmatpush1.msra.mxu0 0.0
    %165 = vmatprep.subr.mxu0 0.0
    %166 = vmatpush1.msra.mxu0 0.0
    %167 = vmatprep.subr.mxu0 0.0
    %168 = vmatpush1.msra.mxu0 0.0
    %169 = vmatprep.subr.mxu0 0.0
    %170 = vmatpush1.msra.mxu0 %v46
    %171 = vmatprep.subr.mxu0 0.0
    %172 = vmatpush1.msra.mxu0 %v45
    %173 = vmatprep.subr.mxu0 0.0
    %174 = vmatpush1.msra.mxu0 %v44
    %175 = vmatprep.subr.mxu0 0.0
    %176 = vmatpush1.msra.mxu0 %v43
    %177 = vmatprep.subr.mxu0 0.0
    %178 = vmatpush2.msra.mxu0 0.0
    %179 = vmatprep.subr.mxu0 0.0
    %180 = vmatpush2.msra.mxu0 0.0
    %181 = vmatprep.subr.mxu0 0.0
    %182 = vmatpush2.msra.mxu0 0.0
    %183 = vmatprep.subr.mxu0 0.0
    %184 = vmatpush2.msra.mxu0 0.0
    %185 = vmatprep.subr.mxu0 0.0
    %186 = vmatpush2.msra.mxu0 0.0
    %187 = vmatprep.subr.mxu0 0.0
    %188 = vmatpush2.msra.mxu0 0.0
    %189 = vmatprep.subr.mxu0 0.0
    %190 = vmatpush2.msra.mxu0 0.0
    %191 = vmatprep.subr.mxu0 0.0
    %192 = vmatpush2.msra.mxu0 0.0
    %193 = vmatprep.subr.mxu0 0.0
    %194 = vmatpush2.msra.mxu0 0.0
    %195 = vmatprep.subr.mxu0 0.0
    %196 = vmatpush2.msra.mxu0 0.0
    %197 = vmatprep.subr.mxu0 0.0
    %198 = vmatpush2.msra.mxu0 0.0
    %199 = vmatprep.subr.mxu0 0.0
    %200 = vmatpush2.msra.mxu0 0.0
    %201 = vmatprep.subr.mxu0 0.0
    %202 = vmatpush2.msra.mxu0 0.0
    %203 = vmatprep.subr.mxu0 0.0
    %204 = vmatpush2.msra.mxu0 0.0
    %205 = vmatprep.subr.mxu0 0.0
    %206 = vmatpush2.msra.mxu0 0.0
    %207 = vmatprep.subr.mxu0 0.0
    %208 = vmatpush2.msra.mxu0 0.0
    %209 = vmatprep.mubr.f32.mxu0 0.0
    %210 = vmatmul.mubr.f32.gmra.mxu0 %v143
    %v211 = vpop.f32.mrf.mxu0
    %v212 = vadd.f32 0.0, %v211
    %v213 = vpop.f32.mrf.mxu0
    %214 = vdwg.mxu0
    %v215 = vadd.f32 %v212, %v61
    %217 = vrot.lane.b32.xlu0 %v212, 64
    %v218 = vpop.permute.xlu0 %217
    %v220 = vadd.f32 %v139, %v218
    %222 = vrot.lane.b32.xlu0 %v59, 32
    %v223 = vpop.permute.xlu0 %222
    %v225 = vadd.f32 %v220, %v223
    %vm226 = vcmask 385280
    %v227 = vsel %vm226, %v225, -inf
    %228 = vmax.xlane.f32.xlu0 %v227
    %v229 = vpop.xlane.xlu0 %228
    %v230 = vsub.f32 %v225, %v229
    %v231 = vmul.f32 %v230, 1.442695
    %v232 = vpow.pop %v231
    %234 = vrot.lane.b32.xlu0 %v232, 96
    %v235 = vpop.permute.xlu0 %234
    %vm237 = vcmask 122880
    %v238 = vsel %vm237, %v235, 0.0
    %239 = vadd.xlane.f32.xlu0 %v238
    %v240 = vpop.xlane.xlu0 %239
    %v241 = vrcp.pop %v240
    %v242 = vmul.f32 %v232, %v241
    %244 = vrot.lane.b32.xlu0 %v242, 96
    %v245 = vpop.permute.xlu0 %244
    %vm246 = vcmask 130048
    %v247 = vsel %vm246, %v245, 0
    %249 = vmatprep.subr.mxu0 0.0
    %250 = vmatpush1.msra.mxu0 0.0
    %251 = vmatprep.subr.mxu0 0.0
    %252 = vmatpush1.msra.mxu0 0.0
    %253 = vmatprep.subr.mxu0 0.0
    %254 = vmatpush1.msra.mxu0 0.0
    %255 = vmatprep.subr.mxu0 0.0
    %256 = vmatpush1.msra.mxu0 0.0
    %257 = vmatprep.subr.mxu0 0.0
    %258 = vmatpush1.msra.mxu0 0.0
    %259 = vmatprep.subr.mxu0 0.0
    %260 = vmatpush1.msra.mxu0 0.0
    %261 = vmatprep.subr.mxu0 0.0
    %262 = vmatpush1.msra.mxu0 0.0
    %263 = vmatprep.subr.mxu0 0.0
    %264 = vmatpush1.msra.mxu0 0.0
    %265 = vmatprep.subr.mxu0 0.0
    %266 = vmatpush1.msra.mxu0 0.0
    %267 = vmatprep.subr.mxu0 0.0
    %268 = vmatpush1.msra.mxu0 0.0
    %269 = vmatprep.subr.mxu0 0.0
    %270 = vmatpush1.msra.mxu0 0.0
    %271 = vmatprep.subr.mxu0 0.0
    %272 = vmatpush1.msra.mxu0 0.0
    %273 = vmatprep.subr.mxu0 0.0
    %274 = vmatpush1.msra.mxu0 0.0
    %275 = vmatprep.subr.mxu0 0.0
    %276 = vmatpush1.msra.mxu0 0.0
    %277 = vmatprep.subr.mxu0 0.0
    %278 = vmatpush1.msra.mxu0 %v63
    %279 = vmatprep.subr.mxu0 0.0
    %280 = vmatpush1.msra.mxu0 %v62
    %281 = vmatprep.subr.mxu0 0.0
    %282 = vmatpush2.msra.mxu0 0.0
    %283 = vmatprep.subr.mxu0 0.0
    %284 = vmatpush2.msra.mxu0 0.0
    %285 = vmatprep.subr.mxu0 0.0
    %286 = vmatpush2.msra.mxu0 0.0
    %287 = vmatprep.subr.mxu0 0.0
    %288 = vmatpush2.msra.mxu0 0.0
    %289 = vmatprep.subr.mxu0 0.0
    %290 = vmatpush2.msra.mxu0 0.0
    %291 = vmatprep.subr.mxu0 0.0
    %292 = vmatpush2.msra.mxu0 0.0
    %293 = vmatprep.subr.mxu0 0.0
    %294 = vmatpush2.msra.mxu0 0.0
    %295 = vmatprep.subr.mxu0 0.0
    %296 = vmatpush2.msra.mxu0 0.0
    %297 = vmatprep.subr.mxu0 0.0
    %298 = vmatpush2.msra.mxu0 0.0
    %299 = vmatprep.subr.mxu0 0.0
    %300 = vmatpush2.msra.mxu0 0.0
    %301 = vmatprep.subr.mxu0 0.0
    %302 = vmatpush2.msra.mxu0 0.0
    %303 = vmatprep.subr.mxu0 0.0
    %304 = vmatpush2.msra.mxu0 0.0
    %305 = vmatprep.subr.mxu0 0.0
    %306 = vmatpush2.msra.mxu0 0.0
    %307 = vmatprep.subr.mxu0 0.0
    %308 = vmatpush2.msra.mxu0 0.0
    %309 = vmatprep.subr.mxu0 0.0
    %310 = vmatpush2.msra.mxu0 0.0
    %311 = vmatprep.subr.mxu0 0.0
    %312 = vmatpush2.msra.mxu0 0.0
    %313 = vmatprep.mubr.f32.mxu0 0.0
    %314 = vmatmul.mubr.f32.gmra.mxu0 %v247
    %v315 = vpop.f32.mrf.mxu0
    %v316 = vadd.f32 0.0, %v315
    %v317 = vpop.f32.mrf.mxu0
    %318 = vdwg.mxu0
    %v320 = vsel %vm68, %v316, 0
    %322 = vmatprep.subr.mxu0 0.0
    %323 = vmatpush1.msra.mxu0 0.0
    %324 = vmatprep.subr.mxu0 0.0
    %325 = vmatpush1.msra.mxu0 0.0
    %326 = vmatprep.subr.mxu0 0.0
    %327 = vmatpush1.msra.mxu0 0.0
    %328 = vmatprep.subr.mxu0 0.0
    %329 = vmatpush1.msra.mxu0 0.0
    %330 = vmatprep.subr.mxu0 0.0
    %331 = vmatpush1.msra.mxu0 0.0
    %332 = vmatprep.subr.mxu0 0.0
    %333 = vmatpush1.msra.mxu0 0.0
    %334 = vmatprep.subr.mxu0 0.0
    %335 = vmatpush1.msra.mxu0 0.0
    %336 = vmatprep.subr.mxu0 0.0
    %337 = vmatpush1.msra.mxu0 0.0
    %338 = vmatprep.subr.mxu0 0.0
    %339 = vmatpush1.msra.mxu0 0.0
    %340 = vmatprep.subr.mxu0 0.0
    %341 = vmatpush1.msra.mxu0 0.0
    %342 = vmatprep.subr.mxu0 0.0
    %343 = vmatpush1.msra.mxu0 0.0
    %344 = vmatprep.subr.mxu0 0.0
    %345 = vmatpush1.msra.mxu0 0.0
    %346 = vmatprep.subr.mxu0 0.0
    %347 = vmatpush1.msra.mxu0 %v50
    %348 = vmatprep.subr.mxu0 0.0
    %349 = vmatpush1.msra.mxu0 %v49
    %350 = vmatprep.subr.mxu0 0.0
    %351 = vmatpush1.msra.mxu0 %v48
    %352 = vmatprep.subr.mxu0 0.0
    %353 = vmatpush1.msra.mxu0 %v47
    %354 = vmatprep.subr.mxu0 0.0
    %355 = vmatpush2.msra.mxu0 0.0
    %356 = vmatprep.subr.mxu0 0.0
    %357 = vmatpush2.msra.mxu0 0.0
    %358 = vmatprep.subr.mxu0 0.0
    %359 = vmatpush2.msra.mxu0 0.0
    %360 = vmatprep.subr.mxu0 0.0
    %361 = vmatpush2.msra.mxu0 0.0
    %362 = vmatprep.subr.mxu0 0.0
    %363 = vmatpush2.msra.mxu0 0.0
    %364 = vmatprep.subr.mxu0 0.0
    %365 = vmatpush2.msra.mxu0 0.0
    %366 = vmatprep.subr.mxu0 0.0
    %367 = vmatpush2.msra.mxu0 0.0
    %368 = vmatprep.subr.mxu0 0.0
    %369 = vmatpush2.msra.mxu0 0.0
    %370 = vmatprep.subr.mxu0 0.0
    %371 = vmatpush2.msra.mxu0 0.0
    %372 = vmatprep.subr.mxu0 0.0
    %373 = vmatpush2.msra.mxu0 0.0
    %374 = vmatprep.subr.mxu0 0.0
    %375 = vmatpush2.msra.mxu0 0.0
    %376 = vmatprep.subr.mxu0 0.0
    %377 = vmatpush2.msra.mxu0 0.0
    %378 = vmatprep.subr.mxu0 0.0
    %379 = vmatpush2.msra.mxu0 0.0
    %380 = vmatprep.subr.mxu0 0.0
    %381 = vmatpush2.msra.mxu0 0.0
    %382 = vmatprep.subr.mxu0 0.0
    %383 = vmatpush2.msra.mxu0 0.0
    %384 = vmatprep.subr.mxu0 0.0
    %385 = vmatpush2.msra.mxu0 0.0
    %386 = vmatprep.mubr.f32.mxu0 0.0
    %387 = vmatmul.mubr.f32.gmra.mxu0 %v320
    %v388 = vpop.f32.mrf.mxu0
    %v389 = vadd.f32 0.0, %v388
    %v390 = vpop.f32.mrf.mxu0
    %391 = vdwg.mxu0
    %v392 = vadd.f32 %v139, %v389
    %393 = vrot.lane.b32.xlu0 %v59, 112
    %v394 = vpop.permute.xlu0 %393
    %v396 = vadd.f32 %v392, %v394
    %v397 = vmax.f32 %v396, 0.0
    %v399 = vsel %vm68, %v397, 0
    %401 = vmatprep.subr.mxu0 0.0
    %402 = vmatpush1.msra.mxu0 0.0
    %403 = vmatprep.subr.mxu0 0.0
    %404 = vmatpush1.msra.mxu0 0.0
    %405 = vmatprep.subr.mxu0 0.0
    %406 = vmatpush1.msra.mxu0 0.0
    %407 = vmatprep.subr.mxu0 0.0
    %408 = vmatpush1.msra.mxu0 0.0
    %409 = vmatprep.subr.mxu0 0.0
    %410 = vmatpush1.msra.mxu0 0.0
    %411 = vmatprep.subr.mxu0 0.0
    %412 = vmatpush1.msra.mxu0 0.0
    %413 = vmatprep.subr.mxu0 0.0
    %414 = vmatpush1.msra.mxu0 0.0
    %415 = vmatprep.subr.mxu0 0.0
    %416 = vmatpush1.msra.mxu0 0.0
    %417 = vmatprep.subr.mxu0 0.0
    %418 = vmatpush1.msra.mxu0 0.0
    %419 = vmatprep.subr.mxu0 0.0
    %420 = vmatpush1.msra.mxu0 0.0
    %421 = vmatprep.subr.mxu0 0.0
    %422 = vmatpush1.msra.mxu0 0.0
    %423 = vmatprep.subr.mxu0 0.0
    %424 = vmatpush1.msra.mxu0 0.0
    %425 = vmatprep.subr.mxu0 0.0
    %426 = vmatpush1.msra.mxu0 %v54
    %427 = vmatprep.subr.mxu0 0.0
    %428 = vmatpush1.msra.mxu0 %v53
    %429 = vmatprep.subr.mxu0 0.0
    %430 = vmatpush1.msra.mxu0 %v52
    %431 = vmatprep.subr.mxu0 0.0
    %432 = vmatpush1.msra.mxu0 %v51
    %433 = vmatprep.subr.mxu0 0.0
    %434 = vmatpush2.msra.mxu0 0.0
    %435 = vmatprep.subr.mxu0 0.0
    %436 = vmatpush2.msra.mxu0 0.0
    %437 = vmatprep.subr.mxu0 0.0
    %438 = vmatpush2.msra.mxu0 0.0
    %439 = vmatprep.subr.mxu0 0.0
    %440 = vmatpush2.msra.mxu0 0.0
    %441 = vmatprep.subr.mxu0 0.0
    %442 = vmatpush2.msra.mxu0 0.0
    %443 = vmatprep.subr.mxu0 0.0
    %444 = vmatpush2.msra.mxu0 0.0
    %445 = vmatprep.subr.mxu0 0.0
    %446 = vmatpush2.msra.mxu0 0.0
    %447 = vmatprep.subr.mxu0 0.0
    %448 = vmatpush2.msra.mxu0 0.0
    %449 = vmatprep.subr.mxu0 0.0
    %450 = vmatpush2.msra.mxu0 0.0
    %451 = vmatprep.subr.mxu0 0.0
    %452 = vmatpush2.msra.mxu0 0.0
    %453 = vmatprep.subr.mxu0 0.0
    %454 = vmatpush2.msra.mxu0 0.0
    %455 = vmatprep.subr.mxu0 0.0
    %456 = vmatpush2.msra.mxu0 0.0
    %457 = vmatprep.subr.mxu0 0.0
    %458 = vmatpush2.msra.mxu0 0.0
    %459 = vmatprep.subr.mxu0 0.0
    %460 = vmatpush2.msra.mxu0 0.0
    %461 = vmatprep.subr.mxu0 0.0
    %462 = vmatpush2.msra.mxu0 0.0
    %463 = vmatprep.subr.mxu0 0.0
    %464 = vmatpush2.msra.mxu0 0.0
    %465 = vmatprep.mubr.f32.mxu0 0.0
    %466 = vmatmul.mubr.f32.gmra.mxu0 %v399
    %v467 = vpop.f32.mrf.mxu0
    %v468 = vadd.f32 %v60, %v467
    %v469 = vpop.f32.mrf.mxu0
    %470 = vdwg.mxu0
    %v471 = vadd.f32 %v468, %v215
    %v472 = vxor.u32 %v471, 2147483648
    %v473 = vmul.f32 %v472, 1.442695
    %v474 = vpow.pop %v473
    %v475 = vadd.f32 %v474, 1.0
    %v476 = vrcp.pop %v475
    %v477 = vmul.f32 1.0, %v476
    %479 = vrot.lane.b32.xlu0 %v215, 64
    %v480 = vpop.permute.xlu0 %479
    %v482 = vmul.f32 %v477, %v480
    %484 = vrot.lane.b32.xlu0 %v482, 64
    %v485 = vpop.permute.xlu0 %484
    %v487 = vadd.f32 %v468, %v485
    %v488 = vtanh.pop %v487
    %v489 = vsub.f32 1.0, %v477
    %491 = vrot.lane.b32.xlu0 %v488, 96
    %v492 = vpop.permute.xlu0 %491
    %v494 = vmul.f32 %v489, %v492
    %v495 = vlaneseq
    %v496 = vshrl.u32 %v495, 7
    %v497 = vsub.s32 0, %v496
    %v498 = vrot.slane %v64, %v497
    %499 = vrot.lane.b32.xlu0 %v498, 32
    %v500 = vpop.permute.xlu0 %499
    %v502 = vmul.f32 %v477, %v500
    %v503 = vadd.f32 %v494, %v502
    %505 = vrot.lane.b32.xlu0 %v503, 96
    %v506 = vpop.permute.xlu0 %505
    %507 = vrot.lane.b32.xlu0 %v59, 80
    %v508 = vpop.permute.xlu0 %507
    %v510 = vsel %vm68, %v506, 0
    %512 = vmatprep.subr.mxu0 0.0
    %513 = vmatpush1.msra.mxu0 0.0
    %514 = vmatprep.subr.mxu0 0.0
    %515 = vmatpush1.msra.mxu0 0.0
    %516 = vmatprep.subr.mxu0 0.0
    %517 = vmatpush1.msra.mxu0 0.0
    %518 = vmatprep.subr.mxu0 0.0
    %519 = vmatpush1.msra.mxu0 0.0
    %520 = vmatprep.subr.mxu0 0.0
    %521 = vmatpush1.msra.mxu0 0.0
    %522 = vmatprep.subr.mxu0 0.0
    %523 = vmatpush1.msra.mxu0 0.0
    %524 = vmatprep.subr.mxu0 0.0
    %525 = vmatpush1.msra.mxu0 0.0
    %526 = vmatprep.subr.mxu0 0.0
    %527 = vmatpush1.msra.mxu0 0.0
    %528 = vmatprep.subr.mxu0 0.0
    %529 = vmatpush1.msra.mxu0 0.0
    %530 = vmatprep.subr.mxu0 0.0
    %531 = vmatpush1.msra.mxu0 0.0
    %532 = vmatprep.subr.mxu0 0.0
    %533 = vmatpush1.msra.mxu0 0.0
    %534 = vmatprep.subr.mxu0 0.0
    %535 = vmatpush1.msra.mxu0 0.0
    %536 = vmatprep.subr.mxu0 0.0
    %537 = vmatpush1.msra.mxu0 %v58
    %538 = vmatprep.subr.mxu0 0.0
    %539 = vmatpush1.msra.mxu0 %v57
    %540 = vmatprep.subr.mxu0 0.0
    %541 = vmatpush1.msra.mxu0 %v56
    %542 = vmatprep.subr.mxu0 0.0
    %543 = vmatpush1.msra.mxu0 %v55
    %544 = vmatprep.subr.mxu0 0.0
    %545 = vmatpush2.msra.mxu0 0.0
    %546 = vmatprep.subr.mxu0 0.0
    %547 = vmatpush2.msra.mxu0 0.0
    %548 = vmatprep.subr.mxu0 0.0
    %549 = vmatpush2.msra.mxu0 0.0
    %550 = vmatprep.subr.mxu0 0.0
    %551 = vmatpush2.msra.mxu0 0.0
    %552 = vmatprep.subr.mxu0 0.0
    %553 = vmatpush2.msra.mxu0 0.0
    %554 = vmatprep.subr.mxu0 0.0
    %555 = vmatpush2.msra.mxu0 0.0
    %556 = vmatprep.subr.mxu0 0.0
    %557 = vmatpush2.msra.mxu0 0.0
    %558 = vmatprep.subr.mxu0 0.0
    %559 = vmatpush2.msra.mxu0 0.0
    %560 = vmatprep.subr.mxu0 0.0
    %561 = vmatpush2.msra.mxu0 0.0
    %562 = vmatprep.subr.mxu0 0.0
    %563 = vmatpush2.msra.mxu0 0.0
    %564 = vmatprep.subr.mxu0 0.0
    %565 = vmatpush2.msra.mxu0 0.0
    %566 = vmatprep.subr.mxu0 0.0
    %567 = vmatpush2.msra.mxu0 0.0
    %568 = vmatprep.subr.mxu0 0.0
    %569 = vmatpush2.msra.mxu0 0.0
    %570 = vmatprep.subr.mxu0 0.0
    %571 = vmatpush2.msra.mxu0 0.0
    %572 = vmatprep.subr.mxu0 0.0
    %573 = vmatpush2.msra.mxu0 0.0
    %574 = vmatprep.subr.mxu0 0.0
    %575 = vmatpush2.msra.mxu0 0.0
    %576 = vmatprep.mubr.f32.mxu0 0.0
    %577 = vmatmul.mubr.f32.gmra.mxu0 %v510
    %v578 = vpop.f32.mrf.mxu0
    %v579 = vadd.f32 %v508, %v578
    %v580 = vpop.f32.mrf.mxu0
    %581 = vdwg.mxu0
    %vm582 = vcmask 516096
    %v583 = vsel %vm582, %v579, -inf
    %584 = vmax.xlane.f32.xlu0 %v583
    %v585 = vpop.xlane.xlu0 %584
    %v586 = vsub.f32 %v579, %v585
    %v587 = vmul.f32 %v586, 1.442695
    %v588 = vpow.pop %v587
    %v589 = vsel %vm582, %v588, 0.0
    %590 = vadd.xlane.f32.xlu0 %v589
    %v591 = vpop.xlane.xlu0 %590
    %v592 = vlog2.pop %v591
    %v593 = vmul.f32 %v592, 0.6931472
    %v594 = vsub.f32 %v586, %v593
    %595 = vrot.lane.b32.xlu0 %v503, 32
    %v596 = vpop.permute.xlu0 %595
    %598 = vrot.lane.b32.xlu0 %v242, 64
    %v599 = vpop.permute.xlu0 %598
    %vm601 = vcmask 523264
    %v602 = vsel %vm601, %v594, %v596
    %vm603 = vcmask 785408
    %v604 = vsel %vm603, %v602, %v599
    %vm605 = vcmask 916480
    %v606 = vsel %vm605, %v604, 0.0
    %s607 = sld [smem:[#allocation3 + $0x1]]
    %s608 = scalar_lea.vmem %s1, %s607
    %v609 = vld [vmem:[%s608] sm:$0x1]
    %v611 = vsel %vm68, %v609, 0
    %613 = vmatprep.subr.mxu0 0.0
    %614 = vmatpush1.msra.mxu0 0.0
    %615 = vmatprep.subr.mxu0 0.0
    %616 = vmatpush1.msra.mxu0 0.0
    %617 = vmatprep.subr.mxu0 0.0
    %618 = vmatpush1.msra.mxu0 0.0
    %619 = vmatprep.subr.mxu0 0.0
    %620 = vmatpush1.msra.mxu0 0.0
    %621 = vmatprep.subr.mxu0 0.0
    %622 = vmatpush1.msra.mxu0 0.0
    %623 = vmatprep.subr.mxu0 0.0
    %624 = vmatpush1.msra.mxu0 0.0
    %625 = vmatprep.subr.mxu0 0.0
    %626 = vmatpush1.msra.mxu0 0.0
    %627 = vmatprep.subr.mxu0 0.0
    %628 = vmatpush1.msra.mxu0 0.0
    %629 = vmatprep.subr.mxu0 0.0
    %630 = vmatpush1.msra.mxu0 0.0
    %631 = vmatprep.subr.mxu0 0.0
    %632 = vmatpush1.msra.mxu0 0.0
    %633 = vmatprep.subr.mxu0 0.0
    %634 = vmatpush1.msra.mxu0 0.0
    %635 = vmatprep.subr.mxu0 0.0
    %636 = vmatpush1.msra.mxu0 0.0
    %637 = vmatprep.subr.mxu0 0.0
    %638 = vmatpush1.msra.mxu0 %v42
    %639 = vmatprep.subr.mxu0 0.0
    %640 = vmatpush1.msra.mxu0 %v41
    %641 = vmatprep.subr.mxu0 0.0
    %642 = vmatpush1.msra.mxu0 %v40
    %643 = vmatprep.subr.mxu0 0.0
    %644 = vmatpush1.msra.mxu0 %v39
    %645 = vmatprep.subr.mxu0 0.0
    %646 = vmatpush2.msra.mxu0 0.0
    %647 = vmatprep.subr.mxu0 0.0
    %648 = vmatpush2.msra.mxu0 0.0
    %649 = vmatprep.subr.mxu0 0.0
    %650 = vmatpush2.msra.mxu0 0.0
    %651 = vmatprep.subr.mxu0 0.0
    %652 = vmatpush2.msra.mxu0 0.0
    %653 = vmatprep.subr.mxu0 0.0
    %654 = vmatpush2.msra.mxu0 0.0
    %655 = vmatprep.subr.mxu0 0.0
    %656 = vmatpush2.msra.mxu0 0.0
    %657 = vmatprep.subr.mxu0 0.0
    %658 = vmatpush2.msra.mxu0 0.0
    %659 = vmatprep.subr.mxu0 0.0
    %660 = vmatpush2.msra.mxu0 0.0
    %661 = vmatprep.subr.mxu0 0.0
    %662 = vmatpush2.msra.mxu0 0.0
    %663 = vmatprep.subr.mxu0 0.0
    %664 = vmatpush2.msra.mxu0 0.0
    %665 = vmatprep.subr.mxu0 0.0
    %666 = vmatpush2.msra.mxu0 0.0
    %667 = vmatprep.subr.mxu0 0.0
    %668 = vmatpush2.msra.mxu0 0.0
    %669 = vmatprep.subr.mxu0 0.0
    %670 = vmatpush2.msra.mxu0 0.0
    %671 = vmatprep.subr.mxu0 0.0
    %672 = vmatpush2.msra.mxu0 0.0
    %673 = vmatprep.subr.mxu0 0.0
    %674 = vmatpush2.msra.mxu0 0.0
    %675 = vmatprep.subr.mxu0 0.0
    %676 = vmatpush2.msra.mxu0 0.0
    %677 = vmatprep.mubr.f32.mxu0 0.0
    %678 = vmatmul.mubr.f32.gmra.mxu0 %v611
    %v679 = vpop.f32.mrf.mxu0
    %v680 = vadd.f32 0.0, %v679
    %v681 = vpop.f32.mrf.mxu0
    %682 = vdwg.mxu0
    %683 = vmatprep.subr.mxu0 0.0
    %684 = vmatpush1.msra.mxu0 0.0
    %685 = vmatprep.subr.mxu0 0.0
    %686 = vmatpush1.msra.mxu0 0.0
    %687 = vmatprep.subr.mxu0 0.0
    %688 = vmatpush1.msra.mxu0 0.0
    %689 = vmatprep.subr.mxu0 0.0
    %690 = vmatpush1.msra.mxu0 0.0
    %691 = vmatprep.subr.mxu0 0.0
    %692 = vmatpush1.msra.mxu0 0.0
    %693 = vmatprep.subr.mxu0 0.0
    %694 = vmatpush1.msra.mxu0 0.0
    %695 = vmatprep.subr.mxu0 0.0
    %696 = vmatpush1.msra.mxu0 0.0
    %697 = vmatprep.subr.mxu0 0.0
    %698 = vmatpush1.msra.mxu0 0.0
    %699 = vmatprep.subr.mxu0 0.0
    %700 = vmatpush1.msra.mxu0 0.0
    %701 = vmatprep.subr.mxu0 0.0
    %702 = vmatpush1.msra.mxu0 0.0
    %703 = vmatprep.subr.mxu0 0.0
    %704 = vmatpush1.msra.mxu0 0.0
    %705 = vmatprep.subr.mxu0 0.0
    %706 = vmatpush1.msra.mxu0 0.0
    %707 = vmatprep.subr.mxu0 0.0
    %708 = vmatpush1.msra.mxu0 %v46
    %709 = vmatprep.subr.mxu0 0.0
    %710 = vmatpush1.msra.mxu0 %v45
    %711 = vmatprep.subr.mxu0 0.0
    %712 = vmatpush1.msra.mxu0 %v44
    %713 = vmatprep.subr.mxu0 0.0
    %714 = vmatpush1.msra.mxu0 %v43
    %715 = vmatprep.subr.mxu0 0.0
    %716 = vmatpush2.msra.mxu0 0.0
    %717 = vmatprep.subr.mxu0 0.0
    %718 = vmatpush2.msra.mxu0 0.0
    %719 = vmatprep.subr.mxu0 0.0
    %720 = vmatpush2.msra.mxu0 0.0
    %721 = vmatprep.subr.mxu0 0.0
    %722 = vmatpush2.msra.mxu0 0.0
    %723 = vmatprep.subr.mxu0 0.0
    %724 = vmatpush2.msra.mxu0 0.0
    %725 = vmatprep.subr.mxu0 0.0
    %726 = vmatpush2.msra.mxu0 0.0
    %727 = vmatprep.subr.mxu0 0.0
    %728 = vmatpush2.msra.mxu0 0.0
    %729 = vmatprep.subr.mxu0 0.0
    %730 = vmatpush2.msra.mxu0 0.0
    %731 = vmatprep.subr.mxu0 0.0
    %732 = vmatpush2.msra.mxu0 0.0
    %733 = vmatprep.subr.mxu0 0.0
    %734 = vmatpush2.msra.mxu0 0.0
    %735 = vmatprep.subr.mxu0 0.0
    %736 = vmatpush2.msra.mxu0 0.0
    %737 = vmatprep.subr.mxu0 0.0
    %738 = vmatpush2.msra.mxu0 0.0
    %739 = vmatprep.subr.mxu0 0.0
    %740 = vmatpush2.msra.mxu0 0.0
    %741 = vmatprep.subr.mxu0 0.0
    %742 = vmatpush2.msra.mxu0 0.0
    %743 = vmatprep.subr.mxu0 0.0
    %744 = vmatpush2.msra.mxu0 0.0
    %745 = vmatprep.subr.mxu0 0.0
    %746 = vmatpush2.msra.mxu0 0.0
    %747 = vmatprep.mubr.f32.mxu0 0.0
    %748 = vmatmul.mubr.f32.gmra.mxu0 %v510
    %v749 = vpop.f32.mrf.mxu0
    %v750 = vadd.f32 0.0, %v749
    %v751 = vpop.f32.mrf.mxu0
    %752 = vdwg.mxu0
    %v753 = vadd.f32 %v750, %v61
    %755 = vrot.lane.b32.xlu0 %v750, 64
    %v756 = vpop.permute.xlu0 %755
    %v758 = vadd.f32 %v680, %v756
    %v759 = vadd.f32 %v758, %v223
    %v760 = vsel %vm226, %v759, -inf
    %761 = vmax.xlane.f32.xlu0 %v760
    %v762 = vpop.xlane.xlu0 %761
    %v763 = vsub.f32 %v759, %v762
    %v764 = vmul.f32 %v763, 1.442695
    %v765 = vpow.pop %v764
    %767 = vrot.lane.b32.xlu0 %v765, 96
    %v768 = vpop.permute.xlu0 %767
    %v770 = vsel %vm237, %v768, 0.0
    %771 = vadd.xlane.f32.xlu0 %v770
    %v772 = vpop.xlane.xlu0 %771
    %v773 = vrcp.pop %v772
    %v774 = vmul.f32 %v765, %v773
    %776 = vrot.lane.b32.xlu0 %v774, 96
    %v777 = vpop.permute.xlu0 %776
    %v778 = vsel %vm246, %v777, 0
    %780 = vmatprep.subr.mxu0 0.0
    %781 = vmatpush1.msra.mxu0 0.0
    %782 = vmatprep.subr.mxu0 0.0
    %783 = vmatpush1.msra.mxu0 0.0
    %784 = vmatprep.subr.mxu0 0.0
    %785 = vmatpush1.msra.mxu0 0.0
    %786 = vmatprep.subr.mxu0 0.0
    %787 = vmatpush1.msra.mxu0 0.0
    %788 = vmatprep.subr.mxu0 0.0
    %789 = vmatpush1.msra.mxu0 0.0
    %790 = vmatprep.subr.mxu0 0.0
    %791 = vmatpush1.msra.mxu0 0.0
    %792 = vmatprep.subr.mxu0 0.0
    %793 = vmatpush1.msra.mxu0 0.0
    %794 = vmatprep.subr.mxu0 0.0
    %795 = vmatpush1.msra.mxu0 0.0
    %796 = vmatprep.subr.mxu0 0.0
    %797 = vmatpush1.msra.mxu0 0.0
    %798 = vmatprep.subr.mxu0 0.0
    %799 = vmatpush1.msra.mxu0 0.0
    %800 = vmatprep.subr.mxu0 0.0
    %801 = vmatpush1.msra.mxu0 0.0
    %802 = vmatprep.subr.mxu0 0.0
    %803 = vmatpush1.msra.mxu0 0.0
    %804 = vmatprep.subr.mxu0 0.0
    %805 = vmatpush1.msra.mxu0 0.0
    %806 = vmatprep.subr.mxu0 0.0
    %807 = vmatpush1.msra.mxu0 0.0
    %808 = vmatprep.subr.mxu0 0.0
    %809 = vmatpush1.msra.mxu0 %v63
    %810 = vmatprep.subr.mxu0 0.0
    %811 = vmatpush1.msra.mxu0 %v62
    %812 = vmatprep.subr.mxu0 0.0
    %813 = vmatpush2.msra.mxu0 0.0
    %814 = vmatprep.subr.mxu0 0.0
    %815 = vmatpush2.msra.mxu0 0.0
    %816 = vmatprep.subr.mxu0 0.0
    %817 = vmatpush2.msra.mxu0 0.0
    %818 = vmatprep.subr.mxu0 0.0
    %819 = vmatpush2.msra.mxu0 0.0
    %820 = vmatprep.subr.mxu0 0.0
    %821 = vmatpush2.msra.mxu0 0.0
    %822 = vmatprep.subr.mxu0 0.0
    %823 = vmatpush2.msra.mxu0 0.0
    %824 = vmatprep.subr.mxu0 0.0
    %825 = vmatpush2.msra.mxu0 0.0
    %826 = vmatprep.subr.mxu0 0.0
    %827 = vmatpush2.msra.mxu0 0.0
    %828 = vmatprep.subr.mxu0 0.0
    %829 = vmatpush2.msra.mxu0 0.0
    %830 = vmatprep.subr.mxu0 0.0
    %831 = vmatpush2.msra.mxu0 0.0
    %832 = vmatprep.subr.mxu0 0.0
    %833 = vmatpush2.msra.mxu0 0.0
    %834 = vmatprep.subr.mxu0 0.0
    %835 = vmatpush2.msra.mxu0 0.0
    %836 = vmatprep.subr.mxu0 0.0
    %837 = vmatpush2.msra.mxu0 0.0
    %838 = vmatprep.subr.mxu0 0.0
    %839 = vmatpush2.msra.mxu0 0.0
    %840 = vmatprep.subr.mxu0 0.0
    %841 = vmatpush2.msra.mxu0 0.0
    %842 = vmatprep.subr.mxu0 0.0
    %843 = vmatpush2.msra.mxu0 0.0
    %844 = vmatprep.mubr.f32.mxu0 0.0
    %845 = vmatmul.mubr.f32.gmra.mxu0 %v778
    %v846 = vpop.f32.mrf.mxu0
    %v847 = vadd.f32 0.0, %v846
    %v848 = vpop.f32.mrf.mxu0
    %849 = vdwg.mxu0
    %v851 = vsel %vm68, %v847, 0
    %853 = vmatprep.subr.mxu0 0.0
    %854 = vmatpush1.msra.mxu0 0.0
    %855 = vmatprep.subr.mxu0 0.0
    %856 = vmatpush1.msra.mxu0 0.0
    %857 = vmatprep.subr.mxu0 0.0
    %858 = vmatpush1.msra.mxu0 0.0
    %859 = vmatprep.subr.mxu0 0.0
    %860 = vmatpush1.msra.mxu0 0.0
    %861 = vmatprep.subr.mxu0 0.0
    %862 = vmatpush1.msra.mxu0 0.0
    %863 = vmatprep.subr.mxu0 0.0
    %864 = vmatpush1.msra.mxu0 0.0
    %865 = vmatprep.subr.mxu0 0.0
    %866 = vmatpush1.msra.mxu0 0.0
    %867 = vmatprep.subr.mxu0 0.0
    %868 = vmatpush1.msra.mxu0 0.0
    %869 = vmatprep.subr.mxu0 0.0
    %870 = vmatpush1.msra.mxu0 0.0
    %871 = vmatprep.subr.mxu0 0.0
    %872 = vmatpush1.msra.mxu0 0.0
    %873 = vmatprep.subr.mxu0 0.0
    %874 = vmatpush1.msra.mxu0 0.0
    %875 = vmatprep.subr.mxu0 0.0
    %876 = vmatpush1.msra.mxu0 0.0
    %877 = vmatprep.subr.mxu0 0.0
    %878 = vmatpush1.msra.mxu0 %v50
    %879 = vmatprep.subr.mxu0 0.0
    %880 = vmatpush1.msra.mxu0 %v49
    %881 = vmatprep.subr.mxu0 0.0
    %882 = vmatpush1.msra.mxu0 %v48
    %883 = vmatprep.subr.mxu0 0.0
    %884 = vmatpush1.msra.mxu0 %v47
    %885 = vmatprep.subr.mxu0 0.0
    %886 = vmatpush2.msra.mxu0 0.0
    %887 = vmatprep.subr.mxu0 0.0
    %888 = vmatpush2.msra.mxu0 0.0
    %889 = vmatprep.subr.mxu0 0.0
    %890 = vmatpush2.msra.mxu0 0.0
    %891 = vmatprep.subr.mxu0 0.0
    %892 = vmatpush2.msra.mxu0 0.0
    %893 = vmatprep.subr.mxu0 0.0
    %894 = vmatpush2.msra.mxu0 0.0
    %895 = vmatprep.subr.mxu0 0.0
    %896 = vmatpush2.msra.mxu0 0.0
    %897 = vmatprep.subr.mxu0 0.0
    %898 = vmatpush2.msra.mxu0 0.0
    %899 = vmatprep.subr.mxu0 0.0
    %900 = vmatpush2.msra.mxu0 0.0
    %901 = vmatprep.subr.mxu0 0.0
    %902 = vmatpush2.msra.mxu0 0.0
    %903 = vmatprep.subr.mxu0 0.0
    %904 = vmatpush2.msra.mxu0 0.0
    %905 = vmatprep.subr.mxu0 0.0
    %906 = vmatpush2.msra.mxu0 0.0
    %907 = vmatprep.subr.mxu0 0.0
    %908 = vmatpush2.msra.mxu0 0.0
    %909 = vmatprep.subr.mxu0 0.0
    %910 = vmatpush2.msra.mxu0 0.0
    %911 = vmatprep.subr.mxu0 0.0
    %912 = vmatpush2.msra.mxu0 0.0
    %913 = vmatprep.subr.mxu0 0.0
    %914 = vmatpush2.msra.mxu0 0.0
    %915 = vmatprep.subr.mxu0 0.0
    %916 = vmatpush2.msra.mxu0 0.0
    %917 = vmatprep.mubr.f32.mxu0 0.0
    %918 = vmatmul.mubr.f32.gmra.mxu0 %v851
    %v919 = vpop.f32.mrf.mxu0
    %v920 = vadd.f32 0.0, %v919
    %v921 = vpop.f32.mrf.mxu0
    %922 = vdwg.mxu0
    %v923 = vadd.f32 %v680, %v920
    %v924 = vadd.f32 %v923, %v394
    %v925 = vmax.f32 %v924, 0.0
    %v927 = vsel %vm68, %v925, 0
    %929 = vmatprep.subr.mxu0 0.0
    %930 = vmatpush1.msra.mxu0 0.0
    %931 = vmatprep.subr.mxu0 0.0
    %932 = vmatpush1.msra.mxu0 0.0
    %933 = vmatprep.subr.mxu0 0.0
    %934 = vmatpush1.msra.mxu0 0.0
    %935 = vmatprep.subr.mxu0 0.0
    %936 = vmatpush1.msra.mxu0 0.0
    %937 = vmatprep.subr.mxu0 0.0
    %938 = vmatpush1.msra.mxu0 0.0
    %939 = vmatprep.subr.mxu0 0.0
    %940 = vmatpush1.msra.mxu0 0.0
    %941 = vmatprep.subr.mxu0 0.0
    %942 = vmatpush1.msra.mxu0 0.0
    %943 = vmatprep.subr.mxu0 0.0
    %944 = vmatpush1.msra.mxu0 0.0
    %945 = vmatprep.subr.mxu0 0.0
    %946 = vmatpush1.msra.mxu0 0.0
    %947 = vmatprep.subr.mxu0 0.0
    %948 = vmatpush1.msra.mxu0 0.0
    %949 = vmatprep.subr.mxu0 0.0
    %950 = vmatpush1.msra.mxu0 0.0
    %951 = vmatprep.subr.mxu0 0.0
    %952 = vmatpush1.msra.mxu0 0.0
    %953 = vmatprep.subr.mxu0 0.0
    %954 = vmatpush1.msra.mxu0 %v54
    %955 = vmatprep.subr.mxu0 0.0
    %956 = vmatpush1.msra.mxu0 %v53
    %957 = vmatprep.subr.mxu0 0.0
    %958 = vmatpush1.msra.mxu0 %v52
    %959 = vmatprep.subr.mxu0 0.0
    %960 = vmatpush1.msra.mxu0 %v51
    %961 = vmatprep.subr.mxu0 0.0
    %962 = vmatpush2.msra.mxu0 0.0
    %963 = vmatprep.subr.mxu0 0.0
    %964 = vmatpush2.msra.mxu0 0.0
    %965 = vmatprep.subr.mxu0 0.0
    %966 = vmatpush2.msra.mxu0 0.0
    %967 = vmatprep.subr.mxu0 0.0
    %968 = vmatpush2.msra.mxu0 0.0
    %969 = vmatprep.subr.mxu0 0.0
    %970 = vmatpush2.msra.mxu0 0.0
    %971 = vmatprep.subr.mxu0 0.0
    %972 = vmatpush2.msra.mxu0 0.0
    %973 = vmatprep.subr.mxu0 0.0
    %974 = vmatpush2.msra.mxu0 0.0
    %975 = vmatprep.subr.mxu0 0.0
    %976 = vmatpush2.msra.mxu0 0.0
    %977 = vmatprep.subr.mxu0 0.0
    %978 = vmatpush2.msra.mxu0 0.0
    %979 = vmatprep.subr.mxu0 0.0
    %980 = vmatpush2.msra.mxu0 0.0
    %981 = vmatprep.subr.mxu0 0.0
    %982 = vmatpush2.msra.mxu0 0.0
    %983 = vmatprep.subr.mxu0 0.0
    %984 = vmatpush2.msra.mxu0 0.0
    %985 = vmatprep.subr.mxu0 0.0
    %986 = vmatpush2.msra.mxu0 0.0
    %987 = vmatprep.subr.mxu0 0.0
    %988 = vmatpush2.msra.mxu0 0.0
    %989 = vmatprep.subr.mxu0 0.0
    %990 = vmatpush2.msra.mxu0 0.0
    %991 = vmatprep.subr.mxu0 0.0
    %992 = vmatpush2.msra.mxu0 0.0
    %993 = vmatprep.mubr.f32.mxu0 0.0
    %994 = vmatmul.mubr.f32.gmra.mxu0 %v927
    %v995 = vpop.f32.mrf.mxu0
    %v996 = vadd.f32 %v60, %v995
    %v997 = vpop.f32.mrf.mxu0
    %998 = vdwg.mxu0
    %v999 = vadd.f32 %v996, %v753
    %v1000 = vxor.u32 %v999, 2147483648
    %v1001 = vmul.f32 %v1000, 1.442695
    %v1002 = vpow.pop %v1001
    %v1003 = vadd.f32 %v1002, 1.0
    %v1004 = vrcp.pop %v1003
    %v1005 = vmul.f32 1.0, %v1004
    %1007 = vrot.lane.b32.xlu0 %v753, 64
    %v1008 = vpop.permute.xlu0 %1007
    %v1010 = vmul.f32 %v1005, %v1008
    %1012 = vrot.lane.b32.xlu0 %v1010, 64
    %v1013 = vpop.permute.xlu0 %1012
    %v1015 = vadd.f32 %v996, %v1013
    %v1016 = vtanh.pop %v1015
    %v1017 = vsub.f32 1.0, %v1005
    %1019 = vrot.lane.b32.xlu0 %v1016, 96
    %v1020 = vpop.permute.xlu0 %1019
    %v1022 = vmul.f32 %v1017, %v1020
    %v1023 = vmul.f32 %v1005, %v503
    %v1024 = vadd.f32 %v1022, %v1023
    %1026 = vrot.lane.b32.xlu0 %v1024, 96
    %v1027 = vpop.permute.xlu0 %1026
    %v1028 = vsel %vm68, %v1027, 0
    %1030 = vmatprep.subr.mxu0 0.0
    %1031 = vmatpush1.msra.mxu0 0.0
    %1032 = vmatprep.subr.mxu0 0.0
    %1033 = vmatpush1.msra.mxu0 0.0
    %1034 = vmatprep.subr.mxu0 0.0
    %1035 = vmatpush1.msra.mxu0 0.0
    %1036 = vmatprep.subr.mxu0 0.0
    %1037 = vmatpush1.msra.mxu0 0.0
    %1038 = vmatprep.subr.mxu0 0.0
    %1039 = vmatpush1.msra.mxu0 0.0
    %1040 = vmatprep.subr.mxu0 0.0
    %1041 = vmatpush1.msra.mxu0 0.0
    %1042 = vmatprep.subr.mxu0 0.0
    %1043 = vmatpush1.msra.mxu0 0.0
    %1044 = vmatprep.subr.mxu0 0.0
    %1045 = vmatpush1.msra.mxu0 0.0
    %1046 = vmatprep.subr.mxu0 0.0
    %1047 = vmatpush1.msra.mxu0 0.0
    %1048 = vmatprep.subr.mxu0 0.0
    %1049 = vmatpush1.msra.mxu0 0.0
    %1050 = vmatprep.subr.mxu0 0.0
    %1051 = vmatpush1.msra.mxu0 0.0
    %1052 = vmatprep.subr.mxu0 0.0
    %1053 = vmatpush1.msra.mxu0 0.0
    %1054 = vmatprep.subr.mxu0 0.0
    %1055 = vmatpush1.msra.mxu0 %v58
    %1056 = vmatprep.subr.mxu0 0.0
    %1057 = vmatpush1.msra.mxu0 %v57
    %1058 = vmatprep.subr.mxu0 0.0
    %1059 = vmatpush1.msra.mxu0 %v56
    %1060 = vmatprep.subr.mxu0 0.0
    %1061 = vmatpush1.msra.mxu0 %v55
    %1062 = vmatprep.subr.mxu0 0.0
    %1063 = vmatpush2.msra.mxu0 0.0
    %1064 = vmatprep.subr.mxu0 0.0
    %1065 = vmatpush2.msra.mxu0 0.0
    %1066 = vmatprep.subr.mxu0 0.0
    %1067 = vmatpush2.msra.mxu0 0.0
    %1068 = vmatprep.subr.mxu0 0.0
    %1069 = vmatpush2.msra.mxu0 0.0
    %1070 = vmatprep.subr.mxu0 0.0
    %1071 = vmatpush2.msra.mxu0 0.0
    %1072 = vmatprep.subr.mxu0 0.0
    %1073 = vmatpush2.msra.mxu0 0.0
    %1074 = vmatprep.subr.mxu0 0.0
    %1075 = vmatpush2.msra.mxu0 0.0
    %1076 = vmatprep.subr.mxu0 0.0
    %1077 = vmatpush2.msra.mxu0 0.0
    %1078 = vmatprep.subr.mxu0 0.0
    %1079 = vmatpush2.msra.mxu0 0.0
    %1080 = vmatprep.subr.mxu0 0.0
    %1081 = vmatpush2.msra.mxu0 0.0
    %1082 = vmatprep.subr.mxu0 0.0
    %1083 = vmatpush2.msra.mxu0 0.0
    %1084 = vmatprep.subr.mxu0 0.0
    %1085 = vmatpush2.msra.mxu0 0.0
    %1086 = vmatprep.subr.mxu0 0.0
    %1087 = vmatpush2.msra.mxu0 0.0
    %1088 = vmatprep.subr.mxu0 0.0
    %1089 = vmatpush2.msra.mxu0 0.0
    %1090 = vmatprep.subr.mxu0 0.0
    %1091 = vmatpush2.msra.mxu0 0.0
    %1092 = vmatprep.subr.mxu0 0.0
    %1093 = vmatpush2.msra.mxu0 0.0
    %1094 = vmatprep.mubr.f32.mxu0 0.0
    %1095 = vmatmul.mubr.f32.gmra.mxu0 %v1028
    %v1096 = vpop.f32.mrf.mxu0
    %v1097 = vadd.f32 %v508, %v1096
    %v1098 = vpop.f32.mrf.mxu0
    %1099 = vdwg.mxu0
    %v1100 = vsel %vm582, %v1097, -inf
    %1101 = vmax.xlane.f32.xlu0 %v1100
    %v1102 = vpop.xlane.xlu0 %1101
    %v1103 = vsub.f32 %v1097, %v1102
    %v1104 = vmul.f32 %v1103, 1.442695
    %v1105 = vpow.pop %v1104
    %v1106 = vsel %vm582, %v1105, 0.0
    %1107 = vadd.xlane.f32.xlu0 %v1106
    %v1108 = vpop.xlane.xlu0 %1107
    %v1109 = vlog2.pop %v1108
    %v1110 = vmul.f32 %v1109, 0.6931472
    %v1111 = vsub.f32 %v1103, %v1110
    %1112 = vrot.lane.b32.xlu0 %v1024, 32
    %v1113 = vpop.permute.xlu0 %1112
    %1115 = vrot.lane.b32.xlu0 %v774, 64
    %v1116 = vpop.permute.xlu0 %1115
    %v1118 = vsel %vm601, %v1111, %v1113
    %v1119 = vsel %vm603, %v1118, %v1116
    %v1120 = vsel %vm605, %v1119, 0.0
    %s1121 = sld [smem:[#allocation3 + $0x2]]
    %s1122 = scalar_lea.vmem %s1, %s1121
    %v1123 = vld [vmem:[%s1122] sm:$0x1]
    %v1125 = vsel %vm68, %v1123, 0
    %1127 = vmatprep.subr.mxu0 0.0
    %1128 = vmatpush1.msra.mxu0 0.0
    %1129 = vmatprep.subr.mxu0 0.0
    %1130 = vmatpush1.msra.mxu0 0.0
    %1131 = vmatprep.subr.mxu0 0.0
    %1132 = vmatpush1.msra.mxu0 0.0
    %1133 = vmatprep.subr.mxu0 0.0
    %1134 = vmatpush1.msra.mxu0 0.0
    %1135 = vmatprep.subr.mxu0 0.0
    %1136 = vmatpush1.msra.mxu0 0.0
    %1137 = vmatprep.subr.mxu0 0.0
    %1138 = vmatpush1.msra.mxu0 0.0
    %1139 = vmatprep.subr.mxu0 0.0
    %1140 = vmatpush1.msra.mxu0 0.0
    %1141 = vmatprep.subr.mxu0 0.0
    %1142 = vmatpush1.msra.mxu0 0.0
    %1143 = vmatprep.subr.mxu0 0.0
    %1144 = vmatpush1.msra.mxu0 0.0
    %1145 = vmatprep.subr.mxu0 0.0
    %1146 = vmatpush1.msra.mxu0 0.0
    %1147 = vmatprep.subr.mxu0 0.0
    %1148 = vmatpush1.msra.mxu0 0.0
    %1149 = vmatprep.subr.mxu0 0.0
    %1150 = vmatpush1.msra.mxu0 0.0
    %1151 = vmatprep.subr.mxu0 0.0
    %1152 = vmatpush1.msra.mxu0 %v42
    %1153 = vmatprep.subr.mxu0 0.0
    %1154 = vmatpush1.msra.mxu0 %v41
    %1155 = vmatprep.subr.mxu0 0.0
    %1156 = vmatpush1.msra.mxu0 %v40
    %1157 = vmatprep.subr.mxu0 0.0
    %1158 = vmatpush1.msra.mxu0 %v39
    %1159 = vmatprep.subr.mxu0 0.0
    %1160 = vmatpush2.msra.mxu0 0.0
    %1161 = vmatprep.subr.mxu0 0.0
    %1162 = vmatpush2.msra.mxu0 0.0
    %1163 = vmatprep.subr.mxu0 0.0
    %1164 = vmatpush2.msra.mxu0 0.0
    %1165 = vmatprep.subr.mxu0 0.0
    %1166 = vmatpush2.msra.mxu0 0.0
    %1167 = vmatprep.subr.mxu0 0.0
    %1168 = vmatpush2.msra.mxu0 0.0
    %1169 = vmatprep.subr.mxu0 0.0
    %1170 = vmatpush2.msra.mxu0 0.0
    %1171 = vmatprep.subr.mxu0 0.0
    %1172 = vmatpush2.msra.mxu0 0.0
    %1173 = vmatprep.subr.mxu0 0.0
    %1174 = vmatpush2.msra.mxu0 0.0
    %1175 = vmatprep.subr.mxu0 0.0
    %1176 = vmatpush2.msra.mxu0 0.0
    %1177 = vmatprep.subr.mxu0 0.0
    %1178 = vmatpush2.msra.mxu0 0.0
    %1179 = vmatprep.subr.mxu0 0.0
    %1180 = vmatpush2.msra.mxu0 0.0
    %1181 = vmatprep.subr.mxu0 0.0
    %1182 = vmatpush2.msra.mxu0 0.0
    %1183 = vmatprep.subr.mxu0 0.0
    %1184 = vmatpush2.msra.mxu0 0.0
    %1185 = vmatprep.subr.mxu0 0.0
    %1186 = vmatpush2.msra.mxu0 0.0
    %1187 = vmatprep.subr.mxu0 0.0
    %1188 = vmatpush2.msra.mxu0 0.0
    %1189 = vmatprep.subr.mxu0 0.0
    %1190 = vmatpush2.msra.mxu0 0.0
    %1191 = vmatprep.mubr.f32.mxu0 0.0
    %1192 = vmatmul.mubr.f32.gmra.mxu0 %v1125
    %v1193 = vpop.f32.mrf.mxu0
    %v1194 = vadd.f32 0.0, %v1193
    %v1195 = vpop.f32.mrf.mxu0
    %1196 = vdwg.mxu0
    %1197 = vmatprep.subr.mxu0 0.0
    %1198 = vmatpush1.msra.mxu0 0.0
    %1199 = vmatprep.subr.mxu0 0.0
    %1200 = vmatpush1.msra.mxu0 0.0
    %1201 = vmatprep.subr.mxu0 0.0
    %1202 = vmatpush1.msra.mxu0 0.0
    %1203 = vmatprep.subr.mxu0 0.0
    %1204 = vmatpush1.msra.mxu0 0.0
    %1205 = vmatprep.subr.mxu0 0.0
    %1206 = vmatpush1.msra.mxu0 0.0
    %1207 = vmatprep.subr.mxu0 0.0
    %1208 = vmatpush1.msra.mxu0 0.0
    %1209 = vmatprep.subr.mxu0 0.0
    %1210 = vmatpush1.msra.mxu0 0.0
    %1211 = vmatprep.subr.mxu0 0.0
    %1212 = vmatpush1.msra.mxu0 0.0
    %1213 = vmatprep.subr.mxu0 0.0
    %1214 = vmatpush1.msra.mxu0 0.0
    %1215 = vmatprep.subr.mxu0 0.0
    %1216 = vmatpush1.msra.mxu0 0.0
    %1217 = vmatprep.subr.mxu0 0.0
    %1218 = vmatpush1.msra.mxu0 0.0
    %1219 = vmatprep.subr.mxu0 0.0
    %1220 = vmatpush1.msra.mxu0 0.0
    %1221 = vmatprep.subr.mxu0 0.0
    %1222 = vmatpush1.msra.mxu0 %v46
    %1223 = vmatprep.subr.mxu0 0.0
    %1224 = vmatpush1.msra.mxu0 %v45
    %1225 = vmatprep.subr.mxu0 0.0
    %1226 = vmatpush1.msra.mxu0 %v44
    %1227 = vmatprep.subr.mxu0 0.0
    %1228 = vmatpush1.msra.mxu0 %v43
    %1229 = vmatprep.subr.mxu0 0.0
    %1230 = vmatpush2.msra.mxu0 0.0
    %1231 = vmatprep.subr.mxu0 0.0
    %1232 = vmatpush2.msra.mxu0 0.0
    %1233 = vmatprep.subr.mxu0 0.0
    %1234 = vmatpush2.msra.mxu0 0.0
    %1235 = vmatprep.subr.mxu0 0.0
    %1236 = vmatpush2.msra.mxu0 0.0
    %1237 = vmatprep.subr.mxu0 0.0
    %1238 = vmatpush2.msra.mxu0 0.0
    %1239 = vmatprep.subr.mxu0 0.0
    %1240 = vmatpush2.msra.mxu0 0.0
    %1241 = vmatprep.subr.mxu0 0.0
    %1242 = vmatpush2.msra.mxu0 0.0
    %1243 = vmatprep.subr.mxu0 0.0
    %1244 = vmatpush2.msra.mxu0 0.0
    %1245 = vmatprep.subr.mxu0 0.0
    %1246 = vmatpush2.msra.mxu0 0.0
    %1247 = vmatprep.subr.mxu0 0.0
    %1248 = vmatpush2.msra.mxu0 0.0
    %1249 = vmatprep.subr.mxu0 0.0
    %1250 = vmatpush2.msra.mxu0 0.0
    %1251 = vmatprep.subr.mxu0 0.0
    %1252 = vmatpush2.msra.mxu0 0.0
    %1253 = vmatprep.subr.mxu0 0.0
    %1254 = vmatpush2.msra.mxu0 0.0
    %1255 = vmatprep.subr.mxu0 0.0
    %1256 = vmatpush2.msra.mxu0 0.0
    %1257 = vmatprep.subr.mxu0 0.0
    %1258 = vmatpush2.msra.mxu0 0.0
    %1259 = vmatprep.subr.mxu0 0.0
    %1260 = vmatpush2.msra.mxu0 0.0
    %1261 = vmatprep.mubr.f32.mxu0 0.0
    %1262 = vmatmul.mubr.f32.gmra.mxu0 %v1028
    %v1263 = vpop.f32.mrf.mxu0
    %v1264 = vadd.f32 0.0, %v1263
    %v1265 = vpop.f32.mrf.mxu0
    %1266 = vdwg.mxu0
    %v1267 = vadd.f32 %v1264, %v61
    %1269 = vrot.lane.b32.xlu0 %v1264, 64
    %v1270 = vpop.permute.xlu0 %1269
    %v1272 = vadd.f32 %v1194, %v1270
    %v1273 = vadd.f32 %v1272, %v223
    %v1274 = vsel %vm226, %v1273, -inf
    %1275 = vmax.xlane.f32.xlu0 %v1274
    %v1276 = vpop.xlane.xlu0 %1275
    %v1277 = vsub.f32 %v1273, %v1276
    %v1278 = vmul.f32 %v1277, 1.442695
    %v1279 = vpow.pop %v1278
    %1281 = vrot.lane.b32.xlu0 %v1279, 96
    %v1282 = vpop.permute.xlu0 %1281
    %v1284 = vsel %vm237, %v1282, 0.0
    %1285 = vadd.xlane.f32.xlu0 %v1284
    %v1286 = vpop.xlane.xlu0 %1285
    %v1287 = vrcp.pop %v1286
    %v1288 = vmul.f32 %v1279, %v1287
    %1290 = vrot.lane.b32.xlu0 %v1288, 96
    %v1291 = vpop.permute.xlu0 %1290
    %v1292 = vsel %vm246, %v1291, 0
    %1294 = vmatprep.subr.mxu0 0.0
    %1295 = vmatpush1.msra.mxu0 0.0
    %1296 = vmatprep.subr.mxu0 0.0
    %1297 = vmatpush1.msra.mxu0 0.0
    %1298 = vmatprep.subr.mxu0 0.0
    %1299 = vmatpush1.msra.mxu0 0.0
    %1300 = vmatprep.subr.mxu0 0.0
    %1301 = vmatpush1.msra.mxu0 0.0
    %1302 = vmatprep.subr.mxu0 0.0
    %1303 = vmatpush1.msra.mxu0 0.0
    %1304 = vmatprep.subr.mxu0 0.0
    %1305 = vmatpush1.msra.mxu0 0.0
    %1306 = vmatprep.subr.mxu0 0.0
    %1307 = vmatpush1.msra.mxu0 0.0
    %1308 = vmatprep.subr.mxu0 0.0
    %1309 = vmatpush1.msra.mxu0 0.0
    %1310 = vmatprep.subr.mxu0 0.0
    %1311 = vmatpush1.msra.mxu0 0.0
    %1312 = vmatprep.subr.mxu0 0.0
    %1313 = vmatpush1.msra.mxu0 0.0
    %1314 = vmatprep.subr.mxu0 0.0
    %1315 = vmatpush1.msra.mxu0 0.0
    %1316 = vmatprep.subr.mxu0 0.0
    %1317 = vmatpush1.msra.mxu0 0.0
    %1318 = vmatprep.subr.mxu0 0.0
    %1319 = vmatpush1.msra.mxu0 0.0
    %1320 = vmatprep.subr.mxu0 0.0
    %1321 = vmatpush1.msra.mxu0 0.0
    %1322 = vmatprep.subr.mxu0 0.0
    %1323 = vmatpush1.msra.mxu0 %v63
    %1324 = vmatprep.subr.mxu0 0.0
    %1325 = vmatpush1.msra.mxu0 %v62
    %1326 = vmatprep.subr.mxu0 0.0
    %1327 = vmatpush2.msra.mxu0 0.0
    %1328 = vmatprep.subr.mxu0 0.0
    %1329 = vmatpush2.msra.mxu0 0.0
    %1330 = vmatprep.subr.mxu0 0.0
    %1331 = vmatpush2.msra.mxu0 0.0
    %1332 = vmatprep.subr.mxu0 0.0
    %1333 = vmatpush2.msra.mxu0 0.0
    %1334 = vmatprep.subr.mxu0 0.0
    %1335 = vmatpush2.msra.mxu0 0.0
    %1336 = vmatprep.subr.mxu0 0.0
    %1337 = vmatpush2.msra.mxu0 0.0
    %1338 = vmatprep.subr.mxu0 0.0
    %1339 = vmatpush2.msra.mxu0 0.0
    %1340 = vmatprep.subr.mxu0 0.0
    %1341 = vmatpush2.msra.mxu0 0.0
    %1342 = vmatprep.subr.mxu0 0.0
    %1343 = vmatpush2.msra.mxu0 0.0
    %1344 = vmatprep.subr.mxu0 0.0
    %1345 = vmatpush2.msra.mxu0 0.0
    %1346 = vmatprep.subr.mxu0 0.0
    %1347 = vmatpush2.msra.mxu0 0.0
    %1348 = vmatprep.subr.mxu0 0.0
    %1349 = vmatpush2.msra.mxu0 0.0
    %1350 = vmatprep.subr.mxu0 0.0
    %1351 = vmatpush2.msra.mxu0 0.0
    %1352 = vmatprep.subr.mxu0 0.0
    %1353 = vmatpush2.msra.mxu0 0.0
    %1354 = vmatprep.subr.mxu0 0.0
    %1355 = vmatpush2.msra.mxu0 0.0
    %1356 = vmatprep.subr.mxu0 0.0
    %1357 = vmatpush2.msra.mxu0 0.0
    %1358 = vmatprep.mubr.f32.mxu0 0.0
    %1359 = vmatmul.mubr.f32.gmra.mxu0 %v1292
    %v1360 = vpop.f32.mrf.mxu0
    %v1361 = vadd.f32 0.0, %v1360
    %v1362 = vpop.f32.mrf.mxu0
    %1363 = vdwg.mxu0
    %v1365 = vsel %vm68, %v1361, 0
    %1367 = vmatprep.subr.mxu0 0.0
    %1368 = vmatpush1.msra.mxu0 0.0
    %1369 = vmatprep.subr.mxu0 0.0
    %1370 = vmatpush1.msra.mxu0 0.0
    %1371 = vmatprep.subr.mxu0 0.0
    %1372 = vmatpush1.msra.mxu0 0.0
    %1373 = vmatprep.subr.mxu0 0.0
    %1374 = vmatpush1.msra.mxu0 0.0
    %1375 = vmatprep.subr.mxu0 0.0
    %1376 = vmatpush1.msra.mxu0 0.0
    %1377 = vmatprep.subr.mxu0 0.0
    %1378 = vmatpush1.msra.mxu0 0.0
    %1379 = vmatprep.subr.mxu0 0.0
    %1380 = vmatpush1.msra.mxu0 0.0
    %1381 = vmatprep.subr.mxu0 0.0
    %1382 = vmatpush1.msra.mxu0 0.0
    %1383 = vmatprep.subr.mxu0 0.0
    %1384 = vmatpush1.msra.mxu0 0.0
    %1385 = vmatprep.subr.mxu0 0.0
    %1386 = vmatpush1.msra.mxu0 0.0
    %1387 = vmatprep.subr.mxu0 0.0
    %1388 = vmatpush1.msra.mxu0 0.0
    %1389 = vmatprep.subr.mxu0 0.0
    %1390 = vmatpush1.msra.mxu0 0.0
    %1391 = vmatprep.subr.mxu0 0.0
    %1392 = vmatpush1.msra.mxu0 %v50
    %1393 = vmatprep.subr.mxu0 0.0
    %1394 = vmatpush1.msra.mxu0 %v49
    %1395 = vmatprep.subr.mxu0 0.0
    %1396 = vmatpush1.msra.mxu0 %v48
    %1397 = vmatprep.subr.mxu0 0.0
    %1398 = vmatpush1.msra.mxu0 %v47
    %1399 = vmatprep.subr.mxu0 0.0
    %1400 = vmatpush2.msra.mxu0 0.0
    %1401 = vmatprep.subr.mxu0 0.0
    %1402 = vmatpush2.msra.mxu0 0.0
    %1403 = vmatprep.subr.mxu0 0.0
    %1404 = vmatpush2.msra.mxu0 0.0
    %1405 = vmatprep.subr.mxu0 0.0
    %1406 = vmatpush2.msra.mxu0 0.0
    %1407 = vmatprep.subr.mxu0 0.0
    %1408 = vmatpush2.msra.mxu0 0.0
    %1409 = vmatprep.subr.mxu0 0.0
    %1410 = vmatpush2.msra.mxu0 0.0
    %1411 = vmatprep.subr.mxu0 0.0
    %1412 = vmatpush2.msra.mxu0 0.0
    %1413 = vmatprep.subr.mxu0 0.0
    %1414 = vmatpush2.msra.mxu0 0.0
    %1415 = vmatprep.subr.mxu0 0.0
    %1416 = vmatpush2.msra.mxu0 0.0
    %1417 = vmatprep.subr.mxu0 0.0
    %1418 = vmatpush2.msra.mxu0 0.0
    %1419 = vmatprep.subr.mxu0 0.0
    %1420 = vmatpush2.msra.mxu0 0.0
    %1421 = vmatprep.subr.mxu0 0.0
    %1422 = vmatpush2.msra.mxu0 0.0
    %1423 = vmatprep.subr.mxu0 0.0
    %1424 = vmatpush2.msra.mxu0 0.0
    %1425 = vmatprep.subr.mxu0 0.0
    %1426 = vmatpush2.msra.mxu0 0.0
    %1427 = vmatprep.subr.mxu0 0.0
    %1428 = vmatpush2.msra.mxu0 0.0
    %1429 = vmatprep.subr.mxu0 0.0
    %1430 = vmatpush2.msra.mxu0 0.0
    %1431 = vmatprep.mubr.f32.mxu0 0.0
    %1432 = vmatmul.mubr.f32.gmra.mxu0 %v1365
    %v1433 = vpop.f32.mrf.mxu0
    %v1434 = vadd.f32 0.0, %v1433
    %v1435 = vpop.f32.mrf.mxu0
    %1436 = vdwg.mxu0
    %v1437 = vadd.f32 %v1194, %v1434
    %v1438 = vadd.f32 %v1437, %v394
    %v1439 = vmax.f32 %v1438, 0.0
    %v1441 = vsel %vm68, %v1439, 0
    %1443 = vmatprep.subr.mxu0 0.0
    %1444 = vmatpush1.msra.mxu0 0.0
    %1445 = vmatprep.subr.mxu0 0.0
    %1446 = vmatpush1.msra.mxu0 0.0
    %1447 = vmatprep.subr.mxu0 0.0
    %1448 = vmatpush1.msra.mxu0 0.0
    %1449 = vmatprep.subr.mxu0 0.0
    %1450 = vmatpush1.msra.mxu0 0.0
    %1451 = vmatprep.subr.mxu0 0.0
    %1452 = vmatpush1.msra.mxu0 0.0
    %1453 = vmatprep.subr.mxu0 0.0
    %1454 = vmatpush1.msra.mxu0 0.0
    %1455 = vmatprep.subr.mxu0 0.0
    %1456 = vmatpush1.msra.mxu0 0.0
    %1457 = vmatprep.subr.mxu0 0.0
    %1458 = vmatpush1.msra.mxu0 0.0
    %1459 = vmatprep.subr.mxu0 0.0
    %1460 = vmatpush1.msra.mxu0 0.0
    %1461 = vmatprep.subr.mxu0 0.0
    %1462 = vmatpush1.msra.mxu0 0.0
    %1463 = vmatprep.subr.mxu0 0.0
    %1464 = vmatpush1.msra.mxu0 0.0
    %1465 = vmatprep.subr.mxu0 0.0
    %1466 = vmatpush1.msra.mxu0 0.0
    %1467 = vmatprep.subr.mxu0 0.0
    %1468 = vmatpush1.msra.mxu0 %v54
    %1469 = vmatprep.subr.mxu0 0.0
    %1470 = vmatpush1.msra.mxu0 %v53
    %1471 = vmatprep.subr.mxu0 0.0
    %1472 = vmatpush1.msra.mxu0 %v52
    %1473 = vmatprep.subr.mxu0 0.0
    %1474 = vmatpush1.msra.mxu0 %v51
    %1475 = vmatprep.subr.mxu0 0.0
    %1476 = vmatpush2.msra.mxu0 0.0
    %1477 = vmatprep.subr.mxu0 0.0
    %1478 = vmatpush2.msra.mxu0 0.0
    %1479 = vmatprep.subr.mxu0 0.0
    %1480 = vmatpush2.msra.mxu0 0.0
    %1481 = vmatprep.subr.mxu0 0.0
    %1482 = vmatpush2.msra.mxu0 0.0
    %1483 = vmatprep.subr.mxu0 0.0
    %1484 = vmatpush2.msra.mxu0 0.0
    %1485 = vmatprep.subr.mxu0 0.0
    %1486 = vmatpush2.msra.mxu0 0.0
    %1487 = vmatprep.subr.mxu0 0.0
    %1488 = vmatpush2.msra.mxu0 0.0
    %1489 = vmatprep.subr.mxu0 0.0
    %1490 = vmatpush2.msra.mxu0 0.0
    %1491 = vmatprep.subr.mxu0 0.0
    %1492 = vmatpush2.msra.mxu0 0.0
    %1493 = vmatprep.subr.mxu0 0.0
    %1494 = vmatpush2.msra.mxu0 0.0
    %1495 = vmatprep.subr.mxu0 0.0
    %1496 = vmatpush2.msra.mxu0 0.0
    %1497 = vmatprep.subr.mxu0 0.0
    %1498 = vmatpush2.msra.mxu0 0.0
    %1499 = vmatprep.subr.mxu0 0.0
    %1500 = vmatpush2.msra.mxu0 0.0
    %1501 = vmatprep.subr.mxu0 0.0
    %1502 = vmatpush2.msra.mxu0 0.0
    %1503 = vmatprep.subr.mxu0 0.0
    %1504 = vmatpush2.msra.mxu0 0.0
    %1505 = vmatprep.subr.mxu0 0.0
    %1506 = vmatpush2.msra.mxu0 0.0
    %1507 = vmatprep.mubr.f32.mxu0 0.0
    %1508 = vmatmul.mubr.f32.gmra.mxu0 %v1441
    %v1509 = vpop.f32.mrf.mxu0
    %v1510 = vadd.f32 %v60, %v1509
    %v1511 = vpop.f32.mrf.mxu0
    %1512 = vdwg.mxu0
    %v1513 = vadd.f32 %v1510, %v1267
    %v1514 = vxor.u32 %v1513, 2147483648
    %v1515 = vmul.f32 %v1514, 1.442695
    %v1516 = vpow.pop %v1515
    %v1517 = vadd.f32 %v1516, 1.0
    %v1518 = vrcp.pop %v1517
    %v1519 = vmul.f32 1.0, %v1518
    %1521 = vrot.lane.b32.xlu0 %v1267, 64
    %v1522 = vpop.permute.xlu0 %1521
    %v1524 = vmul.f32 %v1519, %v1522
    %1526 = vrot.lane.b32.xlu0 %v1524, 64
    %v1527 = vpop.permute.xlu0 %1526
    %v1529 = vadd.f32 %v1510, %v1527
    %v1530 = vtanh.pop %v1529
    %v1531 = vsub.f32 1.0, %v1519
    %1533 = vrot.lane.b32.xlu0 %v1530, 96
    %v1534 = vpop.permute.xlu0 %1533
    %v1536 = vmul.f32 %v1531, %v1534
    %v1537 = vmul.f32 %v1519, %v1024
    %v1538 = vadd.f32 %v1536, %v1537
    %1540 = vrot.lane.b32.xlu0 %v1538, 96
    %v1541 = vpop.permute.xlu0 %1540
    %v1542 = vsel %vm68, %v1541, 0
    %1544 = vmatprep.subr.mxu0 0.0
    %1545 = vmatpush1.msra.mxu0 0.0
    %1546 = vmatprep.subr.mxu0 0.0
    %1547 = vmatpush1.msra.mxu0 0.0
    %1548 = vmatprep.subr.mxu0 0.0
    %1549 = vmatpush1.msra.mxu0 0.0
    %1550 = vmatprep.subr.mxu0 0.0
    %1551 = vmatpush1.msra.mxu0 0.0
    %1552 = vmatprep.subr.mxu0 0.0
    %1553 = vmatpush1.msra.mxu0 0.0
    %1554 = vmatprep.subr.mxu0 0.0
    %1555 = vmatpush1.msra.mxu0 0.0
    %1556 = vmatprep.subr.mxu0 0.0
    %1557 = vmatpush1.msra.mxu0 0.0
    %1558 = vmatprep.subr.mxu0 0.0
    %1559 = vmatpush1.msra.mxu0 0.0
    %1560 = vmatprep.subr.mxu0 0.0
    %1561 = vmatpush1.msra.mxu0 0.0
    %1562 = vmatprep.subr.mxu0 0.0
    %1563 = vmatpush1.msra.mxu0 0.0
    %1564 = vmatprep.subr.mxu0 0.0
    %1565 = vmatpush1.msra.mxu0 0.0
    %1566 = vmatprep.subr.mxu0 0.0
    %1567 = vmatpush1.msra.mxu0 0.0
    %1568 = vmatprep.subr.mxu0 0.0
    %1569 = vmatpush1.msra.mxu0 %v58
    %1570 = vmatprep.subr.mxu0 0.0
    %1571 = vmatpush1.msra.mxu0 %v57
    %1572 = vmatprep.subr.mxu0 0.0
    %1573 = vmatpush1.msra.mxu0 %v56
    %1574 = vmatprep.subr.mxu0 0.0
    %1575 = vmatpush1.msra.mxu0 %v55
    %1576 = vmatprep.subr.mxu0 0.0
    %1577 = vmatpush2.msra.mxu0 0.0
    %1578 = vmatprep.subr.mxu0 0.0
    %1579 = vmatpush2.msra.mxu0 0.0
    %1580 = vmatprep.subr.mxu0 0.0
    %1581 = vmatpush2.msra.mxu0 0.0
    %1582 = vmatprep.subr.mxu0 0.0
    %1583 = vmatpush2.msra.mxu0 0.0
    %1584 = vmatprep.subr.mxu0 0.0
    %1585 = vmatpush2.msra.mxu0 0.0
    %1586 = vmatprep.subr.mxu0 0.0
    %1587 = vmatpush2.msra.mxu0 0.0
    %1588 = vmatprep.subr.mxu0 0.0
    %1589 = vmatpush2.msra.mxu0 0.0
    %1590 = vmatprep.subr.mxu0 0.0
    %1591 = vmatpush2.msra.mxu0 0.0
    %1592 = vmatprep.subr.mxu0 0.0
    %1593 = vmatpush2.msra.mxu0 0.0
    %1594 = vmatprep.subr.mxu0 0.0
    %1595 = vmatpush2.msra.mxu0 0.0
    %1596 = vmatprep.subr.mxu0 0.0
    %1597 = vmatpush2.msra.mxu0 0.0
    %1598 = vmatprep.subr.mxu0 0.0
    %1599 = vmatpush2.msra.mxu0 0.0
    %1600 = vmatprep.subr.mxu0 0.0
    %1601 = vmatpush2.msra.mxu0 0.0
    %1602 = vmatprep.subr.mxu0 0.0
    %1603 = vmatpush2.msra.mxu0 0.0
    %1604 = vmatprep.subr.mxu0 0.0
    %1605 = vmatpush2.msra.mxu0 0.0
    %1606 = vmatprep.subr.mxu0 0.0
    %1607 = vmatpush2.msra.mxu0 0.0
    %1608 = vmatprep.mubr.f32.mxu0 0.0
    %1609 = vmatmul.mubr.f32.gmra.mxu0 %v1542
    %v1610 = vpop.f32.mrf.mxu0
    %v1611 = vadd.f32 %v508, %v1610
    %v1612 = vpop.f32.mrf.mxu0
    %1613 = vdwg.mxu0
    %v1614 = vsel %vm582, %v1611, -inf
    %1615 = vmax.xlane.f32.xlu0 %v1614
    %v1616 = vpop.xlane.xlu0 %1615
    %v1617 = vsub.f32 %v1611, %v1616
    %v1618 = vmul.f32 %v1617, 1.442695
    %v1619 = vpow.pop %v1618
    %v1620 = vsel %vm582, %v1619, 0.0
    %1621 = vadd.xlane.f32.xlu0 %v1620
    %v1622 = vpop.xlane.xlu0 %1621
    %v1623 = vlog2.pop %v1622
    %v1624 = vmul.f32 %v1623, 0.6931472
    %v1625 = vsub.f32 %v1617, %v1624
    %1626 = vrot.lane.b32.xlu0 %v1538, 32
    %v1627 = vpop.permute.xlu0 %1626
    %1629 = vrot.lane.b32.xlu0 %v1288, 64
    %v1630 = vpop.permute.xlu0 %1629
    %v1632 = vsel %vm601, %v1625, %v1627
    %v1633 = vsel %vm603, %v1632, %v1630
    %v1634 = vsel %vm605, %v1633, 0.0
    %s1635 = sld [smem:[#allocation3 + $0x3]]
    %s1636 = scalar_lea.vmem %s1, %s1635
    %v1637 = vld [vmem:[%s1636] sm:$0x1]
    %v1639 = vsel %vm68, %v1637, 0
    %1641 = vmatprep.subr.mxu0 0.0
    %1642 = vmatpush1.msra.mxu0 0.0
    %1643 = vmatprep.subr.mxu0 0.0
    %1644 = vmatpush1.msra.mxu0 0.0
    %1645 = vmatprep.subr.mxu0 0.0
    %1646 = vmatpush1.msra.mxu0 0.0
    %1647 = vmatprep.subr.mxu0 0.0
    %1648 = vmatpush1.msra.mxu0 0.0
    %1649 = vmatprep.subr.mxu0 0.0
    %1650 = vmatpush1.msra.mxu0 0.0
    %1651 = vmatprep.subr.mxu0 0.0
    %1652 = vmatpush1.msra.mxu0 0.0
    %1653 = vmatprep.subr.mxu0 0.0
    %1654 = vmatpush1.msra.mxu0 0.0
    %1655 = vmatprep.subr.mxu0 0.0
    %1656 = vmatpush1.msra.mxu0 0.0
    %1657 = vmatprep.subr.mxu0 0.0
    %1658 = vmatpush1.msra.mxu0 0.0
    %1659 = vmatprep.subr.mxu0 0.0
    %1660 = vmatpush1.msra.mxu0 0.0
    %1661 = vmatprep.subr.mxu0 0.0
    %1662 = vmatpush1.msra.mxu0 0.0
    %1663 = vmatprep.subr.mxu0 0.0
    %1664 = vmatpush1.msra.mxu0 0.0
    %1665 = vmatprep.subr.mxu0 0.0
    %1666 = vmatpush1.msra.mxu0 %v42
    %1667 = vmatprep.subr.mxu0 0.0
    %1668 = vmatpush1.msra.mxu0 %v41
    %1669 = vmatprep.subr.mxu0 0.0
    %1670 = vmatpush1.msra.mxu0 %v40
    %1671 = vmatprep.subr.mxu0 0.0
    %1672 = vmatpush1.msra.mxu0 %v39
    %1673 = vmatprep.subr.mxu0 0.0
    %1674 = vmatpush2.msra.mxu0 0.0
    %1675 = vmatprep.subr.mxu0 0.0
    %1676 = vmatpush2.msra.mxu0 0.0
    %1677 = vmatprep.subr.mxu0 0.0
    %1678 = vmatpush2.msra.mxu0 0.0
    %1679 = vmatprep.subr.mxu0 0.0
    %1680 = vmatpush2.msra.mxu0 0.0
    %1681 = vmatprep.subr.mxu0 0.0
    %1682 = vmatpush2.msra.mxu0 0.0
    %1683 = vmatprep.subr.mxu0 0.0
    %1684 = vmatpush2.msra.mxu0 0.0
    %1685 = vmatprep.subr.mxu0 0.0
    %1686 = vmatpush2.msra.mxu0 0.0
    %1687 = vmatprep.subr.mxu0 0.0
    %1688 = vmatpush2.msra.mxu0 0.0
    %1689 = vmatprep.subr.mxu0 0.0
    %1690 = vmatpush2.msra.mxu0 0.0
    %1691 = vmatprep.subr.mxu0 0.0
    %1692 = vmatpush2.msra.mxu0 0.0
    %1693 = vmatprep.subr.mxu0 0.0
    %1694 = vmatpush2.msra.mxu0 0.0
    %1695 = vmatprep.subr.mxu0 0.0
    %1696 = vmatpush2.msra.mxu0 0.0
    %1697 = vmatprep.subr.mxu0 0.0
    %1698 = vmatpush2.msra.mxu0 0.0
    %1699 = vmatprep.subr.mxu0 0.0
    %1700 = vmatpush2.msra.mxu0 0.0
    %1701 = vmatprep.subr.mxu0 0.0
    %1702 = vmatpush2.msra.mxu0 0.0
    %1703 = vmatprep.subr.mxu0 0.0
    %1704 = vmatpush2.msra.mxu0 0.0
    %1705 = vmatprep.mubr.f32.mxu0 0.0
    %1706 = vmatmul.mubr.f32.gmra.mxu0 %v1639
    %v1707 = vpop.f32.mrf.mxu0
    %v1708 = vadd.f32 0.0, %v1707
    %v1709 = vpop.f32.mrf.mxu0
    %1710 = vdwg.mxu0
    %1711 = vmatprep.subr.mxu0 0.0
    %1712 = vmatpush1.msra.mxu0 0.0
    %1713 = vmatprep.subr.mxu0 0.0
    %1714 = vmatpush1.msra.mxu0 0.0
    %1715 = vmatprep.subr.mxu0 0.0
    %1716 = vmatpush1.msra.mxu0 0.0
    %1717 = vmatprep.subr.mxu0 0.0
    %1718 = vmatpush1.msra.mxu0 0.0
    %1719 = vmatprep.subr.mxu0 0.0
    %1720 = vmatpush1.msra.mxu0 0.0
    %1721 = vmatprep.subr.mxu0 0.0
    %1722 = vmatpush1.msra.mxu0 0.0
    %1723 = vmatprep.subr.mxu0 0.0
    %1724 = vmatpush1.msra.mxu0 0.0
    %1725 = vmatprep.subr.mxu0 0.0
    %1726 = vmatpush1.msra.mxu0 0.0
    %1727 = vmatprep.subr.mxu0 0.0
    %1728 = vmatpush1.msra.mxu0 0.0
    %1729 = vmatprep.subr.mxu0 0.0
    %1730 = vmatpush1.msra.mxu0 0.0
    %1731 = vmatprep.subr.mxu0 0.0
    %1732 = vmatpush1.msra.mxu0 0.0
    %1733 = vmatprep.subr.mxu0 0.0
    %1734 = vmatpush1.msra.mxu0 0.0
    %1735 = vmatprep.subr.mxu0 0.0
    %1736 = vmatpush1.msra.mxu0 %v46
    %1737 = vmatprep.subr.mxu0 0.0
    %1738 = vmatpush1.msra.mxu0 %v45
    %1739 = vmatprep.subr.mxu0 0.0
    %1740 = vmatpush1.msra.mxu0 %v44
    %1741 = vmatprep.subr.mxu0 0.0
    %1742 = vmatpush1.msra.mxu0 %v43
    %1743 = vmatprep.subr.mxu0 0.0
    %1744 = vmatpush2.msra.mxu0 0.0
    %1745 = vmatprep.subr.mxu0 0.0
    %1746 = vmatpush2.msra.mxu0 0.0
    %1747 = vmatprep.subr.mxu0 0.0
    %1748 = vmatpush2.msra.mxu0 0.0
    %1749 = vmatprep.subr.mxu0 0.0
    %1750 = vmatpush2.msra.mxu0 0.0
    %1751 = vmatprep.subr.mxu0 0.0
    %1752 = vmatpush2.msra.mxu0 0.0
    %1753 = vmatprep.subr.mxu0 0.0
    %1754 = vmatpush2.msra.mxu0 0.0
    %1755 = vmatprep.subr.mxu0 0.0
    %1756 = vmatpush2.msra.mxu0 0.0
    %1757 = vmatprep.subr.mxu0 0.0
    %1758 = vmatpush2.msra.mxu0 0.0
    %1759 = vmatprep.subr.mxu0 0.0
    %1760 = vmatpush2.msra.mxu0 0.0
    %1761 = vmatprep.subr.mxu0 0.0
    %1762 = vmatpush2.msra.mxu0 0.0
    %1763 = vmatprep.subr.mxu0 0.0
    %1764 = vmatpush2.msra.mxu0 0.0
    %1765 = vmatprep.subr.mxu0 0.0
    %1766 = vmatpush2.msra.mxu0 0.0
    %1767 = vmatprep.subr.mxu0 0.0
    %1768 = vmatpush2.msra.mxu0 0.0
    %1769 = vmatprep.subr.mxu0 0.0
    %1770 = vmatpush2.msra.mxu0 0.0
    %1771 = vmatprep.subr.mxu0 0.0
    %1772 = vmatpush2.msra.mxu0 0.0
    %1773 = vmatprep.subr.mxu0 0.0
    %1774 = vmatpush2.msra.mxu0 0.0
    %1775 = vmatprep.mubr.f32.mxu0 0.0
    %1776 = vmatmul.mubr.f32.gmra.mxu0 %v1542
    %v1777 = vpop.f32.mrf.mxu0
    %v1778 = vadd.f32 0.0, %v1777
    %v1779 = vpop.f32.mrf.mxu0
    %1780 = vdwg.mxu0
    %v1781 = vadd.f32 %v1778, %v61
    %1783 = vrot.lane.b32.xlu0 %v1778, 64
    %v1784 = vpop.permute.xlu0 %1783
    %v1786 = vadd.f32 %v1708, %v1784
    %v1787 = vadd.f32 %v1786, %v223
    %v1788 = vsel %vm226, %v1787, -inf
    %1789 = vmax.xlane.f32.xlu0 %v1788
    %v1790 = vpop.xlane.xlu0 %1789
    %v1791 = vsub.f32 %v1787, %v1790
    %v1792 = vmul.f32 %v1791, 1.442695
    %v1793 = vpow.pop %v1792
    %1795 = vrot.lane.b32.xlu0 %v1793, 96
    %v1796 = vpop.permute.xlu0 %1795
    %v1798 = vsel %vm237, %v1796, 0.0
    %1799 = vadd.xlane.f32.xlu0 %v1798
    %v1800 = vpop.xlane.xlu0 %1799
    %v1801 = vrcp.pop %v1800
    %v1802 = vmul.f32 %v1793, %v1801
    %1804 = vrot.lane.b32.xlu0 %v1802, 96
    %v1805 = vpop.permute.xlu0 %1804
    %v1806 = vsel %vm246, %v1805, 0
    %1808 = vmatprep.subr.mxu0 0.0
    %1809 = vmatpush1.msra.mxu0 0.0
    %1810 = vmatprep.subr.mxu0 0.0
    %1811 = vmatpush1.msra.mxu0 0.0
    %1812 = vmatprep.subr.mxu0 0.0
    %1813 = vmatpush1.msra.mxu0 0.0
    %1814 = vmatprep.subr.mxu0 0.0
    %1815 = vmatpush1.msra.mxu0 0.0
    %1816 = vmatprep.subr.mxu0 0.0
    %1817 = vmatpush1.msra.mxu0 0.0
    %1818 = vmatprep.subr.mxu0 0.0
    %1819 = vmatpush1.msra.mxu0 0.0
    %1820 = vmatprep.subr.mxu0 0.0
    %1821 = vmatpush1.msra.mxu0 0.0
    %1822 = vmatprep.subr.mxu0 0.0
    %1823 = vmatpush1.msra.mxu0 0.0
    %1824 = vmatprep.subr.mxu0 0.0
    %1825 = vmatpush1.msra.mxu0 0.0
    %1826 = vmatprep.subr.mxu0 0.0
    %1827 = vmatpush1.msra.mxu0 0.0
    %1828 = vmatprep.subr.mxu0 0.0
    %1829 = vmatpush1.msra.mxu0 0.0
    %1830 = vmatprep.subr.mxu0 0.0
    %1831 = vmatpush1.msra.mxu0 0.0
    %1832 = vmatprep.subr.mxu0 0.0
    %1833 = vmatpush1.msra.mxu0 0.0
    %1834 = vmatprep.subr.mxu0 0.0
    %1835 = vmatpush1.msra.mxu0 0.0
    %1836 = vmatprep.subr.mxu0 0.0
    %1837 = vmatpush1.msra.mxu0 %v63
    %1838 = vmatprep.subr.mxu0 0.0
    %1839 = vmatpush1.msra.mxu0 %v62
    %1840 = vmatprep.subr.mxu0 0.0
    %1841 = vmatpush2.msra.mxu0 0.0
    %1842 = vmatprep.subr.mxu0 0.0
    %1843 = vmatpush2.msra.mxu0 0.0
    %1844 = vmatprep.subr.mxu0 0.0
    %1845 = vmatpush2.msra.mxu0 0.0
    %1846 = vmatprep.subr.mxu0 0.0
    %1847 = vmatpush2.msra.mxu0 0.0
    %1848 = vmatprep.subr.mxu0 0.0
    %1849 = vmatpush2.msra.mxu0 0.0
    %1850 = vmatprep.subr.mxu0 0.0
    %1851 = vmatpush2.msra.mxu0 0.0
    %1852 = vmatprep.subr.mxu0 0.0
    %1853 = vmatpush2.msra.mxu0 0.0
    %1854 = vmatprep.subr.mxu0 0.0
    %1855 = vmatpush2.msra.mxu0 0.0
    %1856 = vmatprep.subr.mxu0 0.0
    %1857 = vmatpush2.msra.mxu0 0.0
    %1858 = vmatprep.subr.mxu0 0.0
    %1859 = vmatpush2.msra.mxu0 0.0
    %1860 = vmatprep.subr.mxu0 0.0
    %1861 = vmatpush2.msra.mxu0 0.0
    %1862 = vmatprep.subr.mxu0 0.0
    %1863 = vmatpush2.msra.mxu0 0.0
    %1864 = vmatprep.subr.mxu0 0.0
    %1865 = vmatpush2.msra.mxu0 0.0
    %1866 = vmatprep.subr.mxu0 0.0
    %1867 = vmatpush2.msra.mxu0 0.0
    %1868 = vmatprep.subr.mxu0 0.0
    %1869 = vmatpush2.msra.mxu0 0.0
    %1870 = vmatprep.subr.mxu0 0.0
    %1871 = vmatpush2.msra.mxu0 0.0
    %1872 = vmatprep.mubr.f32.mxu0 0.0
    %1873 = vmatmul.mubr.f32.gmra.mxu0 %v1806
    %v1874 = vpop.f32.mrf.mxu0
    %v1875 = vadd.f32 0.0, %v1874
    %v1876 = vpop.f32.mrf.mxu0
    %1877 = vdwg.mxu0
    %v1879 = vsel %vm68, %v1875, 0
    %1881 = vmatprep.subr.mxu0 0.0
    %1882 = vmatpush1.msra.mxu0 0.0
    %1883 = vmatprep.subr.mxu0 0.0
    %1884 = vmatpush1.msra.mxu0 0.0
    %1885 = vmatprep.subr.mxu0 0.0
    %1886 = vmatpush1.msra.mxu0 0.0
    %1887 = vmatprep.subr.mxu0 0.0
    %1888 = vmatpush1.msra.mxu0 0.0
    %1889 = vmatprep.subr.mxu0 0.0
    %1890 = vmatpush1.msra.mxu0 0.0
    %1891 = vmatprep.subr.mxu0 0.0
    %1892 = vmatpush1.msra.mxu0 0.0
    %1893 = vmatprep.subr.mxu0 0.0
    %1894 = vmatpush1.msra.mxu0 0.0
    %1895 = vmatprep.subr.mxu0 0.0
    %1896 = vmatpush1.msra.mxu0 0.0
    %1897 = vmatprep.subr.mxu0 0.0
    %1898 = vmatpush1.msra.mxu0 0.0
    %1899 = vmatprep.subr.mxu0 0.0
    %1900 = vmatpush1.msra.mxu0 0.0
    %1901 = vmatprep.subr.mxu0 0.0
    %1902 = vmatpush1.msra.mxu0 0.0
    %1903 = vmatprep.subr.mxu0 0.0
    %1904 = vmatpush1.msra.mxu0 0.0
    %1905 = vmatprep.subr.mxu0 0.0
    %1906 = vmatpush1.msra.mxu0 %v50
    %1907 = vmatprep.subr.mxu0 0.0
    %1908 = vmatpush1.msra.mxu0 %v49
    %1909 = vmatprep.subr.mxu0 0.0
    %1910 = vmatpush1.msra.mxu0 %v48
    %1911 = vmatprep.subr.mxu0 0.0
    %1912 = vmatpush1.msra.mxu0 %v47
    %1913 = vmatprep.subr.mxu0 0.0
    %1914 = vmatpush2.msra.mxu0 0.0
    %1915 = vmatprep.subr.mxu0 0.0
    %1916 = vmatpush2.msra.mxu0 0.0
    %1917 = vmatprep.subr.mxu0 0.0
    %1918 = vmatpush2.msra.mxu0 0.0
    %1919 = vmatprep.subr.mxu0 0.0
    %1920 = vmatpush2.msra.mxu0 0.0
    %1921 = vmatprep.subr.mxu0 0.0
    %1922 = vmatpush2.msra.mxu0 0.0
    %1923 = vmatprep.subr.mxu0 0.0
    %1924 = vmatpush2.msra.mxu0 0.0
    %1925 = vmatprep.subr.mxu0 0.0
    %1926 = vmatpush2.msra.mxu0 0.0
    %1927 = vmatprep.subr.mxu0 0.0
    %1928 = vmatpush2.msra.mxu0 0.0
    %1929 = vmatprep.subr.mxu0 0.0
    %1930 = vmatpush2.msra.mxu0 0.0
    %1931 = vmatprep.subr.mxu0 0.0
    %1932 = vmatpush2.msra.mxu0 0.0
    %1933 = vmatprep.subr.mxu0 0.0
    %1934 = vmatpush2.msra.mxu0 0.0
    %1935 = vmatprep.subr.mxu0 0.0
    %1936 = vmatpush2.msra.mxu0 0.0
    %1937 = vmatprep.subr.mxu0 0.0
    %1938 = vmatpush2.msra.mxu0 0.0
    %1939 = vmatprep.subr.mxu0 0.0
    %1940 = vmatpush2.msra.mxu0 0.0
    %1941 = vmatprep.subr.mxu0 0.0
    %1942 = vmatpush2.msra.mxu0 0.0
    %1943 = vmatprep.subr.mxu0 0.0
    %1944 = vmatpush2.msra.mxu0 0.0
    %1945 = vmatprep.mubr.f32.mxu0 0.0
    %1946 = vmatmul.mubr.f32.gmra.mxu0 %v1879
    %v1947 = vpop.f32.mrf.mxu0
    %v1948 = vadd.f32 0.0, %v1947
    %v1949 = vpop.f32.mrf.mxu0
    %1950 = vdwg.mxu0
    %v1951 = vadd.f32 %v1708, %v1948
    %v1952 = vadd.f32 %v1951, %v394
    %v1953 = vmax.f32 %v1952, 0.0
    %v1955 = vsel %vm68, %v1953, 0
    %1957 = vmatprep.subr.mxu0 0.0
    %1958 = vmatpush1.msra.mxu0 0.0
    %1959 = vmatprep.subr.mxu0 0.0
    %1960 = vmatpush1.msra.mxu0 0.0
    %1961 = vmatprep.subr.mxu0 0.0
    %1962 = vmatpush1.msra.mxu0 0.0
    %1963 = vmatprep.subr.mxu0 0.0
    %1964 = vmatpush1.msra.mxu0 0.0
    %1965 = vmatprep.subr.mxu0 0.0
    %1966 = vmatpush1.msra.mxu0 0.0
    %1967 = vmatprep.subr.mxu0 0.0
    %1968 = vmatpush1.msra.mxu0 0.0
    %1969 = vmatprep.subr.mxu0 0.0
    %1970 = vmatpush1.msra.mxu0 0.0
    %1971 = vmatprep.subr.mxu0 0.0
    %1972 = vmatpush1.msra.mxu0 0.0
    %1973 = vmatprep.subr.mxu0 0.0
    %1974 = vmatpush1.msra.mxu0 0.0
    %1975 = vmatprep.subr.mxu0 0.0
    %1976 = vmatpush1.msra.mxu0 0.0
    %1977 = vmatprep.subr.mxu0 0.0
    %1978 = vmatpush1.msra.mxu0 0.0
    %1979 = vmatprep.subr.mxu0 0.0
    %1980 = vmatpush1.msra.mxu0 0.0
    %1981 = vmatprep.subr.mxu0 0.0
    %1982 = vmatpush1.msra.mxu0 %v54
    %1983 = vmatprep.subr.mxu0 0.0
    %1984 = vmatpush1.msra.mxu0 %v53
    %1985 = vmatprep.subr.mxu0 0.0
    %1986 = vmatpush1.msra.mxu0 %v52
    %1987 = vmatprep.subr.mxu0 0.0
    %1988 = vmatpush1.msra.mxu0 %v51
    %1989 = vmatprep.subr.mxu0 0.0
    %1990 = vmatpush2.msra.mxu0 0.0
    %1991 = vmatprep.subr.mxu0 0.0
    %1992 = vmatpush2.msra.mxu0 0.0
    %1993 = vmatprep.subr.mxu0 0.0
    %1994 = vmatpush2.msra.mxu0 0.0
    %1995 = vmatprep.subr.mxu0 0.0
    %1996 = vmatpush2.msra.mxu0 0.0
    %1997 = vmatprep.subr.mxu0 0.0
    %1998 = vmatpush2.msra.mxu0 0.0
    %1999 = vmatprep.subr.mxu0 0.0
    %2000 = vmatpush2.msra.mxu0 0.0
    %2001 = vmatprep.subr.mxu0 0.0
    %2002 = vmatpush2.msra.mxu0 0.0
    %2003 = vmatprep.subr.mxu0 0.0
    %2004 = vmatpush2.msra.mxu0 0.0
    %2005 = vmatprep.subr.mxu0 0.0
    %2006 = vmatpush2.msra.mxu0 0.0
    %2007 = vmatprep.subr.mxu0 0.0
    %2008 = vmatpush2.msra.mxu0 0.0
    %2009 = vmatprep.subr.mxu0 0.0
    %2010 = vmatpush2.msra.mxu0 0.0
    %2011 = vmatprep.subr.mxu0 0.0
    %2012 = vmatpush2.msra.mxu0 0.0
    %2013 = vmatprep.subr.mxu0 0.0
    %2014 = vmatpush2.msra.mxu0 0.0
    %2015 = vmatprep.subr.mxu0 0.0
    %2016 = vmatpush2.msra.mxu0 0.0
    %2017 = vmatprep.subr.mxu0 0.0
    %2018 = vmatpush2.msra.mxu0 0.0
    %2019 = vmatprep.subr.mxu0 0.0
    %2020 = vmatpush2.msra.mxu0 0.0
    %2021 = vmatprep.mubr.f32.mxu0 0.0
    %2022 = vmatmul.mubr.f32.gmra.mxu0 %v1955
    %v2023 = vpop.f32.mrf.mxu0
    %v2024 = vadd.f32 %v60, %v2023
    %v2025 = vpop.f32.mrf.mxu0
    %2026 = vdwg.mxu0
    %v2027 = vadd.f32 %v2024, %v1781
    %v2028 = vxor.u32 %v2027, 2147483648
    %v2029 = vmul.f32 %v2028, 1.442695
    %v2030 = vpow.pop %v2029
    %v2031 = vadd.f32 %v2030, 1.0
    %v2032 = vrcp.pop %v2031
    %v2033 = vmul.f32 1.0, %v2032
    %2035 = vrot.lane.b32.xlu0 %v1781, 64
    %v2036 = vpop.permute.xlu0 %2035
    %v2038 = vmul.f32 %v2033, %v2036
    %2040 = vrot.lane.b32.xlu0 %v2038, 64
    %v2041 = vpop.permute.xlu0 %2040
    %v2043 = vadd.f32 %v2024, %v2041
    %v2044 = vtanh.pop %v2043
    %v2045 = vsub.f32 1.0, %v2033
    %2047 = vrot.lane.b32.xlu0 %v2044, 96
    %v2048 = vpop.permute.xlu0 %2047
    %v2050 = vmul.f32 %v2045, %v2048
    %v2051 = vmul.f32 %v2033, %v1538
    %v2052 = vadd.f32 %v2050, %v2051
    %2054 = vrot.lane.b32.xlu0 %v2052, 96
    %v2055 = vpop.permute.xlu0 %2054
    %v2056 = vsel %vm68, %v2055, 0
    %2058 = vmatprep.subr.mxu0 0.0
    %2059 = vmatpush1.msra.mxu0 0.0
    %2060 = vmatprep.subr.mxu0 0.0
    %2061 = vmatpush1.msra.mxu0 0.0
    %2062 = vmatprep.subr.mxu0 0.0
    %2063 = vmatpush1.msra.mxu0 0.0
    %2064 = vmatprep.subr.mxu0 0.0
    %2065 = vmatpush1.msra.mxu0 0.0
    %2066 = vmatprep.subr.mxu0 0.0
    %2067 = vmatpush1.msra.mxu0 0.0
    %2068 = vmatprep.subr.mxu0 0.0
    %2069 = vmatpush1.msra.mxu0 0.0
    %2070 = vmatprep.subr.mxu0 0.0
    %2071 = vmatpush1.msra.mxu0 0.0
    %2072 = vmatprep.subr.mxu0 0.0
    %2073 = vmatpush1.msra.mxu0 0.0
    %2074 = vmatprep.subr.mxu0 0.0
    %2075 = vmatpush1.msra.mxu0 0.0
    %2076 = vmatprep.subr.mxu0 0.0
    %2077 = vmatpush1.msra.mxu0 0.0
    %2078 = vmatprep.subr.mxu0 0.0
    %2079 = vmatpush1.msra.mxu0 0.0
    %2080 = vmatprep.subr.mxu0 0.0
    %2081 = vmatpush1.msra.mxu0 0.0
    %2082 = vmatprep.subr.mxu0 0.0
    %2083 = vmatpush1.msra.mxu0 %v58
    %2084 = vmatprep.subr.mxu0 0.0
    %2085 = vmatpush1.msra.mxu0 %v57
    %2086 = vmatprep.subr.mxu0 0.0
    %2087 = vmatpush1.msra.mxu0 %v56
    %2088 = vmatprep.subr.mxu0 0.0
    %2089 = vmatpush1.msra.mxu0 %v55
    %2090 = vmatprep.subr.mxu0 0.0
    %2091 = vmatpush2.msra.mxu0 0.0
    %2092 = vmatprep.subr.mxu0 0.0
    %2093 = vmatpush2.msra.mxu0 0.0
    %2094 = vmatprep.subr.mxu0 0.0
    %2095 = vmatpush2.msra.mxu0 0.0
    %2096 = vmatprep.subr.mxu0 0.0
    %2097 = vmatpush2.msra.mxu0 0.0
    %2098 = vmatprep.subr.mxu0 0.0
    %2099 = vmatpush2.msra.mxu0 0.0
    %2100 = vmatprep.subr.mxu0 0.0
    %2101 = vmatpush2.msra.mxu0 0.0
    %2102 = vmatprep.subr.mxu0 0.0
    %2103 = vmatpush2.msra.mxu0 0.0
    %2104 = vmatprep.subr.mxu0 0.0
    %2105 = vmatpush2.msra.mxu0 0.0
    %2106 = vmatprep.subr.mxu0 0.0
    %2107 = vmatpush2.msra.mxu0 0.0
    %2108 = vmatprep.subr.mxu0 0.0
    %2109 = vmatpush2.msra.mxu0 0.0
    %2110 = vmatprep.subr.mxu0 0.0
    %2111 = vmatpush2.msra.mxu0 0.0
    %2112 = vmatprep.subr.mxu0 0.0
    %2113 = vmatpush2.msra.mxu0 0.0
    %2114 = vmatprep.subr.mxu0 0.0
    %2115 = vmatpush2.msra.mxu0 0.0
    %2116 = vmatprep.subr.mxu0 0.0
    %2117 = vmatpush2.msra.mxu0 0.0
    %2118 = vmatprep.subr.mxu0 0.0
    %2119 = vmatpush2.msra.mxu0 0.0
    %2120 = vmatprep.subr.mxu0 0.0
    %2121 = vmatpush2.msra.mxu0 0.0
    %2122 = vmatprep.mubr.f32.mxu0 0.0
    %2123 = vmatmul.mubr.f32.gmra.mxu0 %v2056
    %v2124 = vpop.f32.mrf.mxu0
    %v2125 = vadd.f32 %v508, %v2124
    %v2126 = vpop.f32.mrf.mxu0
    %2127 = vdwg.mxu0
    %v2128 = vsel %vm582, %v2125, -inf
    %2129 = vmax.xlane.f32.xlu0 %v2128
    %v2130 = vpop.xlane.xlu0 %2129
    %v2131 = vsub.f32 %v2125, %v2130
    %v2132 = vmul.f32 %v2131, 1.442695
    %v2133 = vpow.pop %v2132
    %v2134 = vsel %vm582, %v2133, 0.0
    %2135 = vadd.xlane.f32.xlu0 %v2134
    %v2136 = vpop.xlane.xlu0 %2135
    %v2137 = vlog2.pop %v2136
    %v2138 = vmul.f32 %v2137, 0.6931472
    %v2139 = vsub.f32 %v2131, %v2138
    %2140 = vrot.lane.b32.xlu0 %v2052, 32
    %v2141 = vpop.permute.xlu0 %2140
    %2143 = vrot.lane.b32.xlu0 %v1802, 64
    %v2144 = vpop.permute.xlu0 %2143
    %v2146 = vsel %vm601, %v2139, %v2141
    %v2147 = vsel %vm603, %v2146, %v2144
    %v2148 = vsel %vm605, %v2147, 0.0
    %s2149 = sld [smem:[#allocation3 + $0x4]]
    %s2150 = scalar_lea.vmem %s1, %s2149
    %v2151 = vld [vmem:[%s2150] sm:$0x1]
    %v2153 = vsel %vm68, %v2151, 0
    %2155 = vmatprep.subr.mxu0 0.0
    %2156 = vmatpush1.msra.mxu0 0.0
    %2157 = vmatprep.subr.mxu0 0.0
    %2158 = vmatpush1.msra.mxu0 0.0
    %2159 = vmatprep.subr.mxu0 0.0
    %2160 = vmatpush1.msra.mxu0 0.0
    %2161 = vmatprep.subr.mxu0 0.0
    %2162 = vmatpush1.msra.mxu0 0.0
    %2163 = vmatprep.subr.mxu0 0.0
    %2164 = vmatpush1.msra.mxu0 0.0
    %2165 = vmatprep.subr.mxu0 0.0
    %2166 = vmatpush1.msra.mxu0 0.0
    %2167 = vmatprep.subr.mxu0 0.0
    %2168 = vmatpush1.msra.mxu0 0.0
    %2169 = vmatprep.subr.mxu0 0.0
    %2170 = vmatpush1.msra.mxu0 0.0
    %2171 = vmatprep.subr.mxu0 0.0
    %2172 = vmatpush1.msra.mxu0 0.0
    %2173 = vmatprep.subr.mxu0 0.0
    %2174 = vmatpush1.msra.mxu0 0.0
    %2175 = vmatprep.subr.mxu0 0.0
    %2176 = vmatpush1.msra.mxu0 0.0
    %2177 = vmatprep.subr.mxu0 0.0
    %2178 = vmatpush1.msra.mxu0 0.0
    %2179 = vmatprep.subr.mxu0 0.0
    %2180 = vmatpush1.msra.mxu0 %v42
    %2181 = vmatprep.subr.mxu0 0.0
    %2182 = vmatpush1.msra.mxu0 %v41
    %2183 = vmatprep.subr.mxu0 0.0
    %2184 = vmatpush1.msra.mxu0 %v40
    %2185 = vmatprep.subr.mxu0 0.0
    %2186 = vmatpush1.msra.mxu0 %v39
    %2187 = vmatprep.subr.mxu0 0.0
    %2188 = vmatpush2.msra.mxu0 0.0
    %2189 = vmatprep.subr.mxu0 0.0
    %2190 = vmatpush2.msra.mxu0 0.0
    %2191 = vmatprep.subr.mxu0 0.0
    %2192 = vmatpush2.msra.mxu0 0.0
    %2193 = vmatprep.subr.mxu0 0.0
    %2194 = vmatpush2.msra.mxu0 0.0
    %2195 = vmatprep.subr.mxu0 0.0
    %2196 = vmatpush2.msra.mxu0 0.0
    %2197 = vmatprep.subr.mxu0 0.0
    %2198 = vmatpush2.msra.mxu0 0.0
    %2199 = vmatprep.subr.mxu0 0.0
    %2200 = vmatpush2.msra.mxu0 0.0
    %2201 = vmatprep.subr.mxu0 0.0
    %2202 = vmatpush2.msra.mxu0 0.0
    %2203 = vmatprep.subr.mxu0 0.0
    %2204 = vmatpush2.msra.mxu0 0.0
    %2205 = vmatprep.subr.mxu0 0.0
    %2206 = vmatpush2.msra.mxu0 0.0
    %2207 = vmatprep.subr.mxu0 0.0
    %2208 = vmatpush2.msra.mxu0 0.0
    %2209 = vmatprep.subr.mxu0 0.0
    %2210 = vmatpush2.msra.mxu0 0.0
    %2211 = vmatprep.subr.mxu0 0.0
    %2212 = vmatpush2.msra.mxu0 0.0
    %2213 = vmatprep.subr.mxu0 0.0
    %2214 = vmatpush2.msra.mxu0 0.0
    %2215 = vmatprep.subr.mxu0 0.0
    %2216 = vmatpush2.msra.mxu0 0.0
    %2217 = vmatprep.subr.mxu0 0.0
    %2218 = vmatpush2.msra.mxu0 0.0
    %2219 = vmatprep.mubr.f32.mxu0 0.0
    %2220 = vmatmul.mubr.f32.gmra.mxu0 %v2153
    %v2221 = vpop.f32.mrf.mxu0
    %v2222 = vadd.f32 0.0, %v2221
    %v2223 = vpop.f32.mrf.mxu0
    %2224 = vdwg.mxu0
    %2225 = vmatprep.subr.mxu0 0.0
    %2226 = vmatpush1.msra.mxu0 0.0
    %2227 = vmatprep.subr.mxu0 0.0
    %2228 = vmatpush1.msra.mxu0 0.0
    %2229 = vmatprep.subr.mxu0 0.0
    %2230 = vmatpush1.msra.mxu0 0.0
    %2231 = vmatprep.subr.mxu0 0.0
    %2232 = vmatpush1.msra.mxu0 0.0
    %2233 = vmatprep.subr.mxu0 0.0
    %2234 = vmatpush1.msra.mxu0 0.0
    %2235 = vmatprep.subr.mxu0 0.0
    %2236 = vmatpush1.msra.mxu0 0.0
    %2237 = vmatprep.subr.mxu0 0.0
    %2238 = vmatpush1.msra.mxu0 0.0
    %2239 = vmatprep.subr.mxu0 0.0
    %2240 = vmatpush1.msra.mxu0 0.0
    %2241 = vmatprep.subr.mxu0 0.0
    %2242 = vmatpush1.msra.mxu0 0.0
    %2243 = vmatprep.subr.mxu0 0.0
    %2244 = vmatpush1.msra.mxu0 0.0
    %2245 = vmatprep.subr.mxu0 0.0
    %2246 = vmatpush1.msra.mxu0 0.0
    %2247 = vmatprep.subr.mxu0 0.0
    %2248 = vmatpush1.msra.mxu0 0.0
    %2249 = vmatprep.subr.mxu0 0.0
    %2250 = vmatpush1.msra.mxu0 %v46
    %2251 = vmatprep.subr.mxu0 0.0
    %2252 = vmatpush1.msra.mxu0 %v45
    %2253 = vmatprep.subr.mxu0 0.0
    %2254 = vmatpush1.msra.mxu0 %v44
    %2255 = vmatprep.subr.mxu0 0.0
    %2256 = vmatpush1.msra.mxu0 %v43
    %2257 = vmatprep.subr.mxu0 0.0
    %2258 = vmatpush2.msra.mxu0 0.0
    %2259 = vmatprep.subr.mxu0 0.0
    %2260 = vmatpush2.msra.mxu0 0.0
    %2261 = vmatprep.subr.mxu0 0.0
    %2262 = vmatpush2.msra.mxu0 0.0
    %2263 = vmatprep.subr.mxu0 0.0
    %2264 = vmatpush2.msra.mxu0 0.0
    %2265 = vmatprep.subr.mxu0 0.0
    %2266 = vmatpush2.msra.mxu0 0.0
    %2267 = vmatprep.subr.mxu0 0.0
    %2268 = vmatpush2.msra.mxu0 0.0
    %2269 = vmatprep.subr.mxu0 0.0
    %2270 = vmatpush2.msra.mxu0 0.0
    %2271 = vmatprep.subr.mxu0 0.0
    %2272 = vmatpush2.msra.mxu0 0.0
    %2273 = vmatprep.subr.mxu0 0.0
    %2274 = vmatpush2.msra.mxu0 0.0
    %2275 = vmatprep.subr.mxu0 0.0
    %2276 = vmatpush2.msra.mxu0 0.0
    %2277 = vmatprep.subr.mxu0 0.0
    %2278 = vmatpush2.msra.mxu0 0.0
    %2279 = vmatprep.subr.mxu0 0.0
    %2280 = vmatpush2.msra.mxu0 0.0
    %2281 = vmatprep.subr.mxu0 0.0
    %2282 = vmatpush2.msra.mxu0 0.0
    %2283 = vmatprep.subr.mxu0 0.0
    %2284 = vmatpush2.msra.mxu0 0.0
    %2285 = vmatprep.subr.mxu0 0.0
    %2286 = vmatpush2.msra.mxu0 0.0
    %2287 = vmatprep.subr.mxu0 0.0
    %2288 = vmatpush2.msra.mxu0 0.0
    %2289 = vmatprep.mubr.f32.mxu0 0.0
    %2290 = vmatmul.mubr.f32.gmra.mxu0 %v2056
    %v2291 = vpop.f32.mrf.mxu0
    %v2292 = vadd.f32 0.0, %v2291
    %v2293 = vpop.f32.mrf.mxu0
    %2294 = vdwg.mxu0
    %v2295 = vadd.f32 %v2292, %v61
    %2297 = vrot.lane.b32.xlu0 %v2292, 64
    %v2298 = vpop.permute.xlu0 %2297
    %v2300 = vadd.f32 %v2222, %v2298
    %v2301 = vadd.f32 %v2300, %v223
    %v2302 = vsel %vm226, %v2301, -inf
    %2303 = vmax.xlane.f32.xlu0 %v2302
    %v2304 = vpop.xlane.xlu0 %2303
    %v2305 = vsub.f32 %v2301, %v2304
    %v2306 = vmul.f32 %v2305, 1.442695
    %v2307 = vpow.pop %v2306
    %2309 = vrot.lane.b32.xlu0 %v2307, 96
    %v2310 = vpop.permute.xlu0 %2309
    %v2312 = vsel %vm237, %v2310, 0.0
    %2313 = vadd.xlane.f32.xlu0 %v2312
    %v2314 = vpop.xlane.xlu0 %2313
    %v2315 = vrcp.pop %v2314
    %v2316 = vmul.f32 %v2307, %v2315
    %2318 = vrot.lane.b32.xlu0 %v2316, 96
    %v2319 = vpop.permute.xlu0 %2318
    %v2320 = vsel %vm246, %v2319, 0
    %2322 = vmatprep.subr.mxu0 0.0
    %2323 = vmatpush1.msra.mxu0 0.0
    %2324 = vmatprep.subr.mxu0 0.0
    %2325 = vmatpush1.msra.mxu0 0.0
    %2326 = vmatprep.subr.mxu0 0.0
    %2327 = vmatpush1.msra.mxu0 0.0
    %2328 = vmatprep.subr.mxu0 0.0
    %2329 = vmatpush1.msra.mxu0 0.0
    %2330 = vmatprep.subr.mxu0 0.0
    %2331 = vmatpush1.msra.mxu0 0.0
    %2332 = vmatprep.subr.mxu0 0.0
    %2333 = vmatpush1.msra.mxu0 0.0
    %2334 = vmatprep.subr.mxu0 0.0
    %2335 = vmatpush1.msra.mxu0 0.0
    %2336 = vmatprep.subr.mxu0 0.0
    %2337 = vmatpush1.msra.mxu0 0.0
    %2338 = vmatprep.subr.mxu0 0.0
    %2339 = vmatpush1.msra.mxu0 0.0
    %2340 = vmatprep.subr.mxu0 0.0
    %2341 = vmatpush1.msra.mxu0 0.0
    %2342 = vmatprep.subr.mxu0 0.0
    %2343 = vmatpush1.msra.mxu0 0.0
    %2344 = vmatprep.subr.mxu0 0.0
    %2345 = vmatpush1.msra.mxu0 0.0
    %2346 = vmatprep.subr.mxu0 0.0
    %2347 = vmatpush1.msra.mxu0 0.0
    %2348 = vmatprep.subr.mxu0 0.0
    %2349 = vmatpush1.msra.mxu0 0.0
    %2350 = vmatprep.subr.mxu0 0.0
    %2351 = vmatpush1.msra.mxu0 %v63
    %2352 = vmatprep.subr.mxu0 0.0
    %2353 = vmatpush1.msra.mxu0 %v62
    %2354 = vmatprep.subr.mxu0 0.0
    %2355 = vmatpush2.msra.mxu0 0.0
    %2356 = vmatprep.subr.mxu0 0.0
    %2357 = vmatpush2.msra.mxu0 0.0
    %2358 = vmatprep.subr.mxu0 0.0
    %2359 = vmatpush2.msra.mxu0 0.0
    %2360 = vmatprep.subr.mxu0 0.0
    %2361 = vmatpush2.msra.mxu0 0.0
    %2362 = vmatprep.subr.mxu0 0.0
    %2363 = vmatpush2.msra.mxu0 0.0
    %2364 = vmatprep.subr.mxu0 0.0
    %2365 = vmatpush2.msra.mxu0 0.0
    %2366 = vmatprep.subr.mxu0 0.0
    %2367 = vmatpush2.msra.mxu0 0.0
    %2368 = vmatprep.subr.mxu0 0.0
    %2369 = vmatpush2.msra.mxu0 0.0
    %2370 = vmatprep.subr.mxu0 0.0
    %2371 = vmatpush2.msra.mxu0 0.0
    %2372 = vmatprep.subr.mxu0 0.0
    %2373 = vmatpush2.msra.mxu0 0.0
    %2374 = vmatprep.subr.mxu0 0.0
    %2375 = vmatpush2.msra.mxu0 0.0
    %2376 = vmatprep.subr.mxu0 0.0
    %2377 = vmatpush2.msra.mxu0 0.0
    %2378 = vmatprep.subr.mxu0 0.0
    %2379 = vmatpush2.msra.mxu0 0.0
    %2380 = vmatprep.subr.mxu0 0.0
    %2381 = vmatpush2.msra.mxu0 0.0
    %2382 = vmatprep.subr.mxu0 0.0
    %2383 = vmatpush2.msra.mxu0 0.0
    %2384 = vmatprep.subr.mxu0 0.0
    %2385 = vmatpush2.msra.mxu0 0.0
    %2386 = vmatprep.mubr.f32.mxu0 0.0
    %2387 = vmatmul.mubr.f32.gmra.mxu0 %v2320
    %v2388 = vpop.f32.mrf.mxu0
    %v2389 = vadd.f32 0.0, %v2388
    %v2390 = vpop.f32.mrf.mxu0
    %2391 = vdwg.mxu0
    %v2393 = vsel %vm68, %v2389, 0
    %2395 = vmatprep.subr.mxu0 0.0
    %2396 = vmatpush1.msra.mxu0 0.0
    %2397 = vmatprep.subr.mxu0 0.0
    %2398 = vmatpush1.msra.mxu0 0.0
    %2399 = vmatprep.subr.mxu0 0.0
    %2400 = vmatpush1.msra.mxu0 0.0
    %2401 = vmatprep.subr.mxu0 0.0
    %2402 = vmatpush1.msra.mxu0 0.0
    %2403 = vmatprep.subr.mxu0 0.0
    %2404 = vmatpush1.msra.mxu0 0.0
    %2405 = vmatprep.subr.mxu0 0.0
    %2406 = vmatpush1.msra.mxu0 0.0
    %2407 = vmatprep.subr.mxu0 0.0
    %2408 = vmatpush1.msra.mxu0 0.0
    %2409 = vmatprep.subr.mxu0 0.0
    %2410 = vmatpush1.msra.mxu0 0.0
    %2411 = vmatprep.subr.mxu0 0.0
    %2412 = vmatpush1.msra.mxu0 0.0
    %2413 = vmatprep.subr.mxu0 0.0
    %2414 = vmatpush1.msra.mxu0 0.0
    %2415 = vmatprep.subr.mxu0 0.0
    %2416 = vmatpush1.msra.mxu0 0.0
    %2417 = vmatprep.subr.mxu0 0.0
    %2418 = vmatpush1.msra.mxu0 0.0
    %2419 = vmatprep.subr.mxu0 0.0
    %2420 = vmatpush1.msra.mxu0 %v50
    %2421 = vmatprep.subr.mxu0 0.0
    %2422 = vmatpush1.msra.mxu0 %v49
    %2423 = vmatprep.subr.mxu0 0.0
    %2424 = vmatpush1.msra.mxu0 %v48
    %2425 = vmatprep.subr.mxu0 0.0
    %2426 = vmatpush1.msra.mxu0 %v47
    %2427 = vmatprep.subr.mxu0 0.0
    %2428 = vmatpush2.msra.mxu0 0.0
    %2429 = vmatprep.subr.mxu0 0.0
    %2430 = vmatpush2.msra.mxu0 0.0
    %2431 = vmatprep.subr.mxu0 0.0
    %2432 = vmatpush2.msra.mxu0 0.0
    %2433 = vmatprep.subr.mxu0 0.0
    %2434 = vmatpush2.msra.mxu0 0.0
    %2435 = vmatprep.subr.mxu0 0.0
    %2436 = vmatpush2.msra.mxu0 0.0
    %2437 = vmatprep.subr.mxu0 0.0
    %2438 = vmatpush2.msra.mxu0 0.0
    %2439 = vmatprep.subr.mxu0 0.0
    %2440 = vmatpush2.msra.mxu0 0.0
    %2441 = vmatprep.subr.mxu0 0.0
    %2442 = vmatpush2.msra.mxu0 0.0
    %2443 = vmatprep.subr.mxu0 0.0
    %2444 = vmatpush2.msra.mxu0 0.0
    %2445 = vmatprep.subr.mxu0 0.0
    %2446 = vmatpush2.msra.mxu0 0.0
    %2447 = vmatprep.subr.mxu0 0.0
    %2448 = vmatpush2.msra.mxu0 0.0
    %2449 = vmatprep.subr.mxu0 0.0
    %2450 = vmatpush2.msra.mxu0 0.0
    %2451 = vmatprep.subr.mxu0 0.0
    %2452 = vmatpush2.msra.mxu0 0.0
    %2453 = vmatprep.subr.mxu0 0.0
    %2454 = vmatpush2.msra.mxu0 0.0
    %2455 = vmatprep.subr.mxu0 0.0
    %2456 = vmatpush2.msra.mxu0 0.0
    %2457 = vmatprep.subr.mxu0 0.0
    %2458 = vmatpush2.msra.mxu0 0.0
    %2459 = vmatprep.mubr.f32.mxu0 0.0
    %2460 = vmatmul.mubr.f32.gmra.mxu0 %v2393
    %v2461 = vpop.f32.mrf.mxu0
    %v2462 = vadd.f32 0.0, %v2461
    %v2463 = vpop.f32.mrf.mxu0
    %2464 = vdwg.mxu0
    %v2465 = vadd.f32 %v2222, %v2462
    %v2466 = vadd.f32 %v2465, %v394
    %v2467 = vmax.f32 %v2466, 0.0
    %v2469 = vsel %vm68, %v2467, 0
    %2471 = vmatprep.subr.mxu0 0.0
    %2472 = vmatpush1.msra.mxu0 0.0
    %2473 = vmatprep.subr.mxu0 0.0
    %2474 = vmatpush1.msra.mxu0 0.0
    %2475 = vmatprep.subr.mxu0 0.0
    %2476 = vmatpush1.msra.mxu0 0.0
    %2477 = vmatprep.subr.mxu0 0.0
    %2478 = vmatpush1.msra.mxu0 0.0
    %2479 = vmatprep.subr.mxu0 0.0
    %2480 = vmatpush1.msra.mxu0 0.0
    %2481 = vmatprep.subr.mxu0 0.0
    %2482 = vmatpush1.msra.mxu0 0.0
    %2483 = vmatprep.subr.mxu0 0.0
    %2484 = vmatpush1.msra.mxu0 0.0
    %2485 = vmatprep.subr.mxu0 0.0
    %2486 = vmatpush1.msra.mxu0 0.0
    %2487 = vmatprep.subr.mxu0 0.0
    %2488 = vmatpush1.msra.mxu0 0.0
    %2489 = vmatprep.subr.mxu0 0.0
    %2490 = vmatpush1.msra.mxu0 0.0
    %2491 = vmatprep.subr.mxu0 0.0
    %2492 = vmatpush1.msra.mxu0 0.0
    %2493 = vmatprep.subr.mxu0 0.0
    %2494 = vmatpush1.msra.mxu0 0.0
    %2495 = vmatprep.subr.mxu0 0.0
    %2496 = vmatpush1.msra.mxu0 %v54
    %2497 = vmatprep.subr.mxu0 0.0
    %2498 = vmatpush1.msra.mxu0 %v53
    %2499 = vmatprep.subr.mxu0 0.0
    %2500 = vmatpush1.msra.mxu0 %v52
    %2501 = vmatprep.subr.mxu0 0.0
    %2502 = vmatpush1.msra.mxu0 %v51
    %2503 = vmatprep.subr.mxu0 0.0
    %2504 = vmatpush2.msra.mxu0 0.0
    %2505 = vmatprep.subr.mxu0 0.0
    %2506 = vmatpush2.msra.mxu0 0.0
    %2507 = vmatprep.subr.mxu0 0.0
    %2508 = vmatpush2.msra.mxu0 0.0
    %2509 = vmatprep.subr.mxu0 0.0
    %2510 = vmatpush2.msra.mxu0 0.0
    %2511 = vmatprep.subr.mxu0 0.0
    %2512 = vmatpush2.msra.mxu0 0.0
    %2513 = vmatprep.subr.mxu0 0.0
    %2514 = vmatpush2.msra.mxu0 0.0
    %2515 = vmatprep.subr.mxu0 0.0
    %2516 = vmatpush2.msra.mxu0 0.0
    %2517 = vmatprep.subr.mxu0 0.0
    %2518 = vmatpush2.msra.mxu0 0.0
    %2519 = vmatprep.subr.mxu0 0.0
    %2520 = vmatpush2.msra.mxu0 0.0
    %2521 = vmatprep.subr.mxu0 0.0
    %2522 = vmatpush2.msra.mxu0 0.0
    %2523 = vmatprep.subr.mxu0 0.0
    %2524 = vmatpush2.msra.mxu0 0.0
    %2525 = vmatprep.subr.mxu0 0.0
    %2526 = vmatpush2.msra.mxu0 0.0
    %2527 = vmatprep.subr.mxu0 0.0
    %2528 = vmatpush2.msra.mxu0 0.0
    %2529 = vmatprep.subr.mxu0 0.0
    %2530 = vmatpush2.msra.mxu0 0.0
    %2531 = vmatprep.subr.mxu0 0.0
    %2532 = vmatpush2.msra.mxu0 0.0
    %2533 = vmatprep.subr.mxu0 0.0
    %2534 = vmatpush2.msra.mxu0 0.0
    %2535 = vmatprep.mubr.f32.mxu0 0.0
    %2536 = vmatmul.mubr.f32.gmra.mxu0 %v2469
    %v2537 = vpop.f32.mrf.mxu0
    %v2538 = vadd.f32 %v60, %v2537
    %v2539 = vpop.f32.mrf.mxu0
    %2540 = vdwg.mxu0
    %v2541 = vadd.f32 %v2538, %v2295
    %v2542 = vxor.u32 %v2541, 2147483648
    %v2543 = vmul.f32 %v2542, 1.442695
    %v2544 = vpow.pop %v2543
    %v2545 = vadd.f32 %v2544, 1.0
    %v2546 = vrcp.pop %v2545
    %v2547 = vmul.f32 1.0, %v2546
    %2549 = vrot.lane.b32.xlu0 %v2295, 64
    %v2550 = vpop.permute.xlu0 %2549
    %v2552 = vmul.f32 %v2547, %v2550
    %2554 = vrot.lane.b32.xlu0 %v2552, 64
    %v2555 = vpop.permute.xlu0 %2554
    %v2557 = vadd.f32 %v2538, %v2555
    %v2558 = vtanh.pop %v2557
    %v2559 = vsub.f32 1.0, %v2547
    %2561 = vrot.lane.b32.xlu0 %v2558, 96
    %v2562 = vpop.permute.xlu0 %2561
    %v2564 = vmul.f32 %v2559, %v2562
    %v2565 = vmul.f32 %v2547, %v2052
    %v2566 = vadd.f32 %v2564, %v2565
    %2568 = vrot.lane.b32.xlu0 %v2566, 96
    %v2569 = vpop.permute.xlu0 %2568
    %v2570 = vsel %vm68, %v2569, 0
    %2572 = vmatprep.subr.mxu0 0.0
    %2573 = vmatpush1.msra.mxu0 0.0
    %2574 = vmatprep.subr.mxu0 0.0
    %2575 = vmatpush1.msra.mxu0 0.0
    %2576 = vmatprep.subr.mxu0 0.0
    %2577 = vmatpush1.msra.mxu0 0.0
    %2578 = vmatprep.subr.mxu0 0.0
    %2579 = vmatpush1.msra.mxu0 0.0
    %2580 = vmatprep.subr.mxu0 0.0
    %2581 = vmatpush1.msra.mxu0 0.0
    %2582 = vmatprep.subr.mxu0 0.0
    %2583 = vmatpush1.msra.mxu0 0.0
    %2584 = vmatprep.subr.mxu0 0.0
    %2585 = vmatpush1.msra.mxu0 0.0
    %2586 = vmatprep.subr.mxu0 0.0
    %2587 = vmatpush1.msra.mxu0 0.0
    %2588 = vmatprep.subr.mxu0 0.0
    %2589 = vmatpush1.msra.mxu0 0.0
    %2590 = vmatprep.subr.mxu0 0.0
    %2591 = vmatpush1.msra.mxu0 0.0
    %2592 = vmatprep.subr.mxu0 0.0
    %2593 = vmatpush1.msra.mxu0 0.0
    %2594 = vmatprep.subr.mxu0 0.0
    %2595 = vmatpush1.msra.mxu0 0.0
    %2596 = vmatprep.subr.mxu0 0.0
    %2597 = vmatpush1.msra.mxu0 %v58
    %2598 = vmatprep.subr.mxu0 0.0
    %2599 = vmatpush1.msra.mxu0 %v57
    %2600 = vmatprep.subr.mxu0 0.0
    %2601 = vmatpush1.msra.mxu0 %v56
    %2602 = vmatprep.subr.mxu0 0.0
    %2603 = vmatpush1.msra.mxu0 %v55
    %2604 = vmatprep.subr.mxu0 0.0
    %2605 = vmatpush2.msra.mxu0 0.0
    %2606 = vmatprep.subr.mxu0 0.0
    %2607 = vmatpush2.msra.mxu0 0.0
    %2608 = vmatprep.subr.mxu0 0.0
    %2609 = vmatpush2.msra.mxu0 0.0
    %2610 = vmatprep.subr.mxu0 0.0
    %2611 = vmatpush2.msra.mxu0 0.0
    %2612 = vmatprep.subr.mxu0 0.0
    %2613 = vmatpush2.msra.mxu0 0.0
    %2614 = vmatprep.subr.mxu0 0.0
    %2615 = vmatpush2.msra.mxu0 0.0
    %2616 = vmatprep.subr.mxu0 0.0
    %2617 = vmatpush2.msra.mxu0 0.0
    %2618 = vmatprep.subr.mxu0 0.0
    %2619 = vmatpush2.msra.mxu0 0.0
    %2620 = vmatprep.subr.mxu0 0.0
    %2621 = vmatpush2.msra.mxu0 0.0
    %2622 = vmatprep.subr.mxu0 0.0
    %2623 = vmatpush2.msra.mxu0 0.0
    %2624 = vmatprep.subr.mxu0 0.0
    %2625 = vmatpush2.msra.mxu0 0.0
    %2626 = vmatprep.subr.mxu0 0.0
    %2627 = vmatpush2.msra.mxu0 0.0
    %2628 = vmatprep.subr.mxu0 0.0
    %2629 = vmatpush2.msra.mxu0 0.0
    %2630 = vmatprep.subr.mxu0 0.0
    %2631 = vmatpush2.msra.mxu0 0.0
    %2632 = vmatprep.subr.mxu0 0.0
    %2633 = vmatpush2.msra.mxu0 0.0
    %2634 = vmatprep.subr.mxu0 0.0
    %2635 = vmatpush2.msra.mxu0 0.0
    %2636 = vmatprep.mubr.f32.mxu0 0.0
    %2637 = vmatmul.mubr.f32.gmra.mxu0 %v2570
    %v2638 = vpop.f32.mrf.mxu0
    %v2639 = vadd.f32 %v508, %v2638
    %v2640 = vpop.f32.mrf.mxu0
    %2641 = vdwg.mxu0
    %v2642 = vsel %vm582, %v2639, -inf
    %2643 = vmax.xlane.f32.xlu0 %v2642
    %v2644 = vpop.xlane.xlu0 %2643
    %v2645 = vsub.f32 %v2639, %v2644
    %v2646 = vmul.f32 %v2645, 1.442695
    %v2647 = vpow.pop %v2646
    %v2648 = vsel %vm582, %v2647, 0.0
    %2649 = vadd.xlane.f32.xlu0 %v2648
    %v2650 = vpop.xlane.xlu0 %2649
    %v2651 = vlog2.pop %v2650
    %v2652 = vmul.f32 %v2651, 0.6931472
    %v2653 = vsub.f32 %v2645, %v2652
    %2654 = vrot.lane.b32.xlu0 %v2566, 32
    %v2655 = vpop.permute.xlu0 %2654
    %2657 = vrot.lane.b32.xlu0 %v2316, 64
    %v2658 = vpop.permute.xlu0 %2657
    %v2660 = vsel %vm601, %v2653, %v2655
    %v2661 = vsel %vm603, %v2660, %v2658
    %v2662 = vsel %vm605, %v2661, 0.0
    %s2663 = sld [smem:[#allocation3 + $0x5]]
    %s2664 = scalar_lea.vmem %s1, %s2663
    %v2665 = vld [vmem:[%s2664] sm:$0x1]
    %v2667 = vsel %vm68, %v2665, 0
    %2669 = vmatprep.subr.mxu0 0.0
    %2670 = vmatpush1.msra.mxu0 0.0
    %2671 = vmatprep.subr.mxu0 0.0
    %2672 = vmatpush1.msra.mxu0 0.0
    %2673 = vmatprep.subr.mxu0 0.0
    %2674 = vmatpush1.msra.mxu0 0.0
    %2675 = vmatprep.subr.mxu0 0.0
    %2676 = vmatpush1.msra.mxu0 0.0
    %2677 = vmatprep.subr.mxu0 0.0
    %2678 = vmatpush1.msra.mxu0 0.0
    %2679 = vmatprep.subr.mxu0 0.0
    %2680 = vmatpush1.msra.mxu0 0.0
    %2681 = vmatprep.subr.mxu0 0.0
    %2682 = vmatpush1.msra.mxu0 0.0
    %2683 = vmatprep.subr.mxu0 0.0
    %2684 = vmatpush1.msra.mxu0 0.0
    %2685 = vmatprep.subr.mxu0 0.0
    %2686 = vmatpush1.msra.mxu0 0.0
    %2687 = vmatprep.subr.mxu0 0.0
    %2688 = vmatpush1.msra.mxu0 0.0
    %2689 = vmatprep.subr.mxu0 0.0
    %2690 = vmatpush1.msra.mxu0 0.0
    %2691 = vmatprep.subr.mxu0 0.0
    %2692 = vmatpush1.msra.mxu0 0.0
    %2693 = vmatprep.subr.mxu0 0.0
    %2694 = vmatpush1.msra.mxu0 %v42
    %2695 = vmatprep.subr.mxu0 0.0
    %2696 = vmatpush1.msra.mxu0 %v41
    %2697 = vmatprep.subr.mxu0 0.0
    %2698 = vmatpush1.msra.mxu0 %v40
    %2699 = vmatprep.subr.mxu0 0.0
    %2700 = vmatpush1.msra.mxu0 %v39
    %2701 = vmatprep.subr.mxu0 0.0
    %2702 = vmatpush2.msra.mxu0 0.0
    %2703 = vmatprep.subr.mxu0 0.0
    %2704 = vmatpush2.msra.mxu0 0.0
    %2705 = vmatprep.subr.mxu0 0.0
    %2706 = vmatpush2.msra.mxu0 0.0
    %2707 = vmatprep.subr.mxu0 0.0
    %2708 = vmatpush2.msra.mxu0 0.0
    %2709 = vmatprep.subr.mxu0 0.0
    %2710 = vmatpush2.msra.mxu0 0.0
    %2711 = vmatprep.subr.mxu0 0.0
    %2712 = vmatpush2.msra.mxu0 0.0
    %2713 = vmatprep.subr.mxu0 0.0
    %2714 = vmatpush2.msra.mxu0 0.0
    %2715 = vmatprep.subr.mxu0 0.0
    %2716 = vmatpush2.msra.mxu0 0.0
    %2717 = vmatprep.subr.mxu0 0.0
    %2718 = vmatpush2.msra.mxu0 0.0
    %2719 = vmatprep.subr.mxu0 0.0
    %2720 = vmatpush2.msra.mxu0 0.0
    %2721 = vmatprep.subr.mxu0 0.0
    %2722 = vmatpush2.msra.mxu0 0.0
    %2723 = vmatprep.subr.mxu0 0.0
    %2724 = vmatpush2.msra.mxu0 0.0
    %2725 = vmatprep.subr.mxu0 0.0
    %2726 = vmatpush2.msra.mxu0 0.0
    %2727 = vmatprep.subr.mxu0 0.0
    %2728 = vmatpush2.msra.mxu0 0.0
    %2729 = vmatprep.subr.mxu0 0.0
    %2730 = vmatpush2.msra.mxu0 0.0
    %2731 = vmatprep.subr.mxu0 0.0
    %2732 = vmatpush2.msra.mxu0 0.0
    %2733 = vmatprep.mubr.f32.mxu0 0.0
    %2734 = vmatmul.mubr.f32.gmra.mxu0 %v2667
    %v2735 = vpop.f32.mrf.mxu0
    %v2736 = vadd.f32 0.0, %v2735
    %v2737 = vpop.f32.mrf.mxu0
    %2738 = vdwg.mxu0
    %2739 = vmatprep.subr.mxu0 0.0
    %2740 = vmatpush1.msra.mxu0 0.0
    %2741 = vmatprep.subr.mxu0 0.0
    %2742 = vmatpush1.msra.mxu0 0.0
    %2743 = vmatprep.subr.mxu0 0.0
    %2744 = vmatpush1.msra.mxu0 0.0
    %2745 = vmatprep.subr.mxu0 0.0
    %2746 = vmatpush1.msra.mxu0 0.0
    %2747 = vmatprep.subr.mxu0 0.0
    %2748 = vmatpush1.msra.mxu0 0.0
    %2749 = vmatprep.subr.mxu0 0.0
    %2750 = vmatpush1.msra.mxu0 0.0
    %2751 = vmatprep.subr.mxu0 0.0
    %2752 = vmatpush1.msra.mxu0 0.0
    %2753 = vmatprep.subr.mxu0 0.0
    %2754 = vmatpush1.msra.mxu0 0.0
    %2755 = vmatprep.subr.mxu0 0.0
    %2756 = vmatpush1.msra.mxu0 0.0
    %2757 = vmatprep.subr.mxu0 0.0
    %2758 = vmatpush1.msra.mxu0 0.0
    %2759 = vmatprep.subr.mxu0 0.0
    %2760 = vmatpush1.msra.mxu0 0.0
    %2761 = vmatprep.subr.mxu0 0.0
    %2762 = vmatpush1.msra.mxu0 0.0
    %2763 = vmatprep.subr.mxu0 0.0
    %2764 = vmatpush1.msra.mxu0 %v46
    %2765 = vmatprep.subr.mxu0 0.0
    %2766 = vmatpush1.msra.mxu0 %v45
    %2767 = vmatprep.subr.mxu0 0.0
    %2768 = vmatpush1.msra.mxu0 %v44
    %2769 = vmatprep.subr.mxu0 0.0
    %2770 = vmatpush1.msra.mxu0 %v43
    %2771 = vmatprep.subr.mxu0 0.0
    %2772 = vmatpush2.msra.mxu0 0.0
    %2773 = vmatprep.subr.mxu0 0.0
    %2774 = vmatpush2.msra.mxu0 0.0
    %2775 = vmatprep.subr.mxu0 0.0
    %2776 = vmatpush2.msra.mxu0 0.0
    %2777 = vmatprep.subr.mxu0 0.0
    %2778 = vmatpush2.msra.mxu0 0.0
    %2779 = vmatprep.subr.mxu0 0.0
    %2780 = vmatpush2.msra.mxu0 0.0
    %2781 = vmatprep.subr.mxu0 0.0
    %2782 = vmatpush2.msra.mxu0 0.0
    %2783 = vmatprep.subr.mxu0 0.0
    %2784 = vmatpush2.msra.mxu0 0.0
    %2785 = vmatprep.subr.mxu0 0.0
    %2786 = vmatpush2.msra.mxu0 0.0
    %2787 = vmatprep.subr.mxu0 0.0
    %2788 = vmatpush2.msra.mxu0 0.0
    %2789 = vmatprep.subr.mxu0 0.0
    %2790 = vmatpush2.msra.mxu0 0.0
    %2791 = vmatprep.subr.mxu0 0.0
    %2792 = vmatpush2.msra.mxu0 0.0
    %2793 = vmatprep.subr.mxu0 0.0
    %2794 = vmatpush2.msra.mxu0 0.0
    %2795 = vmatprep.subr.mxu0 0.0
    %2796 = vmatpush2.msra.mxu0 0.0
    %2797 = vmatprep.subr.mxu0 0.0
    %2798 = vmatpush2.msra.mxu0 0.0
    %2799 = vmatprep.subr.mxu0 0.0
    %2800 = vmatpush2.msra.mxu0 0.0
    %2801 = vmatprep.subr.mxu0 0.0
    %2802 = vmatpush2.msra.mxu0 0.0
    %2803 = vmatprep.mubr.f32.mxu0 0.0
    %2804 = vmatmul.mubr.f32.gmra.mxu0 %v2570
    %v2805 = vpop.f32.mrf.mxu0
    %v2806 = vadd.f32 0.0, %v2805
    %v2807 = vpop.f32.mrf.mxu0
    %2808 = vdwg.mxu0
    %v2809 = vadd.f32 %v2806, %v61
    %2811 = vrot.lane.b32.xlu0 %v2806, 64
    %v2812 = vpop.permute.xlu0 %2811
    %v2814 = vadd.f32 %v2736, %v2812
    %v2815 = vadd.f32 %v2814, %v223
    %v2816 = vsel %vm226, %v2815, -inf
    %2817 = vmax.xlane.f32.xlu0 %v2816
    %v2818 = vpop.xlane.xlu0 %2817
    %v2819 = vsub.f32 %v2815, %v2818
    %v2820 = vmul.f32 %v2819, 1.442695
    %v2821 = vpow.pop %v2820
    %2823 = vrot.lane.b32.xlu0 %v2821, 96
    %v2824 = vpop.permute.xlu0 %2823
    %v2826 = vsel %vm237, %v2824, 0.0
    %2827 = vadd.xlane.f32.xlu0 %v2826
    %v2828 = vpop.xlane.xlu0 %2827
    %v2829 = vrcp.pop %v2828
    %v2830 = vmul.f32 %v2821, %v2829
    %2832 = vrot.lane.b32.xlu0 %v2830, 96
    %v2833 = vpop.permute.xlu0 %2832
    %v2834 = vsel %vm246, %v2833, 0
    %2836 = vmatprep.subr.mxu0 0.0
    %2837 = vmatpush1.msra.mxu0 0.0
    %2838 = vmatprep.subr.mxu0 0.0
    %2839 = vmatpush1.msra.mxu0 0.0
    %2840 = vmatprep.subr.mxu0 0.0
    %2841 = vmatpush1.msra.mxu0 0.0
    %2842 = vmatprep.subr.mxu0 0.0
    %2843 = vmatpush1.msra.mxu0 0.0
    %2844 = vmatprep.subr.mxu0 0.0
    %2845 = vmatpush1.msra.mxu0 0.0
    %2846 = vmatprep.subr.mxu0 0.0
    %2847 = vmatpush1.msra.mxu0 0.0
    %2848 = vmatprep.subr.mxu0 0.0
    %2849 = vmatpush1.msra.mxu0 0.0
    %2850 = vmatprep.subr.mxu0 0.0
    %2851 = vmatpush1.msra.mxu0 0.0
    %2852 = vmatprep.subr.mxu0 0.0
    %2853 = vmatpush1.msra.mxu0 0.0
    %2854 = vmatprep.subr.mxu0 0.0
    %2855 = vmatpush1.msra.mxu0 0.0
    %2856 = vmatprep.subr.mxu0 0.0
    %2857 = vmatpush1.msra.mxu0 0.0
    %2858 = vmatprep.subr.mxu0 0.0
    %2859 = vmatpush1.msra.mxu0 0.0
    %2860 = vmatprep.subr.mxu0 0.0
    %2861 = vmatpush1.msra.mxu0 0.0
    %2862 = vmatprep.subr.mxu0 0.0
    %2863 = vmatpush1.msra.mxu0 0.0
    %2864 = vmatprep.subr.mxu0 0.0
    %2865 = vmatpush1.msra.mxu0 %v63
    %2866 = vmatprep.subr.mxu0 0.0
    %2867 = vmatpush1.msra.mxu0 %v62
    %2868 = vmatprep.subr.mxu0 0.0
    %2869 = vmatpush2.msra.mxu0 0.0
    %2870 = vmatprep.subr.mxu0 0.0
    %2871 = vmatpush2.msra.mxu0 0.0
    %2872 = vmatprep.subr.mxu0 0.0
    %2873 = vmatpush2.msra.mxu0 0.0
    %2874 = vmatprep.subr.mxu0 0.0
    %2875 = vmatpush2.msra.mxu0 0.0
    %2876 = vmatprep.subr.mxu0 0.0
    %2877 = vmatpush2.msra.mxu0 0.0
    %2878 = vmatprep.subr.mxu0 0.0
    %2879 = vmatpush2.msra.mxu0 0.0
    %2880 = vmatprep.subr.mxu0 0.0
    %2881 = vmatpush2.msra.mxu0 0.0
    %2882 = vmatprep.subr.mxu0 0.0
    %2883 = vmatpush2.msra.mxu0 0.0
    %2884 = vmatprep.subr.mxu0 0.0
    %2885 = vmatpush2.msra.mxu0 0.0
    %2886 = vmatprep.subr.mxu0 0.0
    %2887 = vmatpush2.msra.mxu0 0.0
    %2888 = vmatprep.subr.mxu0 0.0
    %2889 = vmatpush2.msra.mxu0 0.0
    %2890 = vmatprep.subr.mxu0 0.0
    %2891 = vmatpush2.msra.mxu0 0.0
    %2892 = vmatprep.subr.mxu0 0.0
    %2893 = vmatpush2.msra.mxu0 0.0
    %2894 = vmatprep.subr.mxu0 0.0
    %2895 = vmatpush2.msra.mxu0 0.0
    %2896 = vmatprep.subr.mxu0 0.0
    %2897 = vmatpush2.msra.mxu0 0.0
    %2898 = vmatprep.subr.mxu0 0.0
    %2899 = vmatpush2.msra.mxu0 0.0
    %2900 = vmatprep.mubr.f32.mxu0 0.0
    %2901 = vmatmul.mubr.f32.gmra.mxu0 %v2834
    %v2902 = vpop.f32.mrf.mxu0
    %v2903 = vadd.f32 0.0, %v2902
    %v2904 = vpop.f32.mrf.mxu0
    %2905 = vdwg.mxu0
    %v2907 = vsel %vm68, %v2903, 0
    %2909 = vmatprep.subr.mxu0 0.0
    %2910 = vmatpush1.msra.mxu0 0.0
    %2911 = vmatprep.subr.mxu0 0.0
    %2912 = vmatpush1.msra.mxu0 0.0
    %2913 = vmatprep.subr.mxu0 0.0
    %2914 = vmatpush1.msra.mxu0 0.0
    %2915 = vmatprep.subr.mxu0 0.0
    %2916 = vmatpush1.msra.mxu0 0.0
    %2917 = vmatprep.subr.mxu0 0.0
    %2918 = vmatpush1.msra.mxu0 0.0
    %2919 = vmatprep.subr.mxu0 0.0
    %2920 = vmatpush1.msra.mxu0 0.0
    %2921 = vmatprep.subr.mxu0 0.0
    %2922 = vmatpush1.msra.mxu0 0.0
    %2923 = vmatprep.subr.mxu0 0.0
    %2924 = vmatpush1.msra.mxu0 0.0
    %2925 = vmatprep.subr.mxu0 0.0
    %2926 = vmatpush1.msra.mxu0 0.0
    %2927 = vmatprep.subr.mxu0 0.0
    %2928 = vmatpush1.msra.mxu0 0.0
    %2929 = vmatprep.subr.mxu0 0.0
    %2930 = vmatpush1.msra.mxu0 0.0
    %2931 = vmatprep.subr.mxu0 0.0
    %2932 = vmatpush1.msra.mxu0 0.0
    %2933 = vmatprep.subr.mxu0 0.0
    %2934 = vmatpush1.msra.mxu0 %v50
    %2935 = vmatprep.subr.mxu0 0.0
    %2936 = vmatpush1.msra.mxu0 %v49
    %2937 = vmatprep.subr.mxu0 0.0
    %2938 = vmatpush1.msra.mxu0 %v48
    %2939 = vmatprep.subr.mxu0 0.0
    %2940 = vmatpush1.msra.mxu0 %v47
    %2941 = vmatprep.subr.mxu0 0.0
    %2942 = vmatpush2.msra.mxu0 0.0
    %2943 = vmatprep.subr.mxu0 0.0
    %2944 = vmatpush2.msra.mxu0 0.0
    %2945 = vmatprep.subr.mxu0 0.0
    %2946 = vmatpush2.msra.mxu0 0.0
    %2947 = vmatprep.subr.mxu0 0.0
    %2948 = vmatpush2.msra.mxu0 0.0
    %2949 = vmatprep.subr.mxu0 0.0
    %2950 = vmatpush2.msra.mxu0 0.0
    %2951 = vmatprep.subr.mxu0 0.0
    %2952 = vmatpush2.msra.mxu0 0.0
    %2953 = vmatprep.subr.mxu0 0.0
    %2954 = vmatpush2.msra.mxu0 0.0
    %2955 = vmatprep.subr.mxu0 0.0
    %2956 = vmatpush2.msra.mxu0 0.0
    %2957 = vmatprep.subr.mxu0 0.0
    %2958 = vmatpush2.msra.mxu0 0.0
    %2959 = vmatprep.subr.mxu0 0.0
    %2960 = vmatpush2.msra.mxu0 0.0
    %2961 = vmatprep.subr.mxu0 0.0
    %2962 = vmatpush2.msra.mxu0 0.0
    %2963 = vmatprep.subr.mxu0 0.0
    %2964 = vmatpush2.msra.mxu0 0.0
    %2965 = vmatprep.subr.mxu0 0.0
    %2966 = vmatpush2.msra.mxu0 0.0
    %2967 = vmatprep.subr.mxu0 0.0
    %2968 = vmatpush2.msra.mxu0 0.0
    %2969 = vmatprep.subr.mxu0 0.0
    %2970 = vmatpush2.msra.mxu0 0.0
    %2971 = vmatprep.subr.mxu0 0.0
    %2972 = vmatpush2.msra.mxu0 0.0
    %2973 = vmatprep.mubr.f32.mxu0 0.0
    %2974 = vmatmul.mubr.f32.gmra.mxu0 %v2907
    %v2975 = vpop.f32.mrf.mxu0
    %v2976 = vadd.f32 0.0, %v2975
    %v2977 = vpop.f32.mrf.mxu0
    %2978 = vdwg.mxu0
    %v2979 = vadd.f32 %v2736, %v2976
    %v2980 = vadd.f32 %v2979, %v394
    %v2981 = vmax.f32 %v2980, 0.0
    %v2983 = vsel %vm68, %v2981, 0
    %2985 = vmatprep.subr.mxu0 0.0
    %2986 = vmatpush1.msra.mxu0 0.0
    %2987 = vmatprep.subr.mxu0 0.0
    %2988 = vmatpush1.msra.mxu0 0.0
    %2989 = vmatprep.subr.mxu0 0.0
    %2990 = vmatpush1.msra.mxu0 0.0
    %2991 = vmatprep.subr.mxu0 0.0
    %2992 = vmatpush1.msra.mxu0 0.0
    %2993 = vmatprep.subr.mxu0 0.0
    %2994 = vmatpush1.msra.mxu0 0.0
    %2995 = vmatprep.subr.mxu0 0.0
    %2996 = vmatpush1.msra.mxu0 0.0
    %2997 = vmatprep.subr.mxu0 0.0
    %2998 = vmatpush1.msra.mxu0 0.0
    %2999 = vmatprep.subr.mxu0 0.0
    %3000 = vmatpush1.msra.mxu0 0.0
    %3001 = vmatprep.subr.mxu0 0.0
    %3002 = vmatpush1.msra.mxu0 0.0
    %3003 = vmatprep.subr.mxu0 0.0
    %3004 = vmatpush1.msra.mxu0 0.0
    %3005 = vmatprep.subr.mxu0 0.0
    %3006 = vmatpush1.msra.mxu0 0.0
    %3007 = vmatprep.subr.mxu0 0.0
    %3008 = vmatpush1.msra.mxu0 0.0
    %3009 = vmatprep.subr.mxu0 0.0
    %3010 = vmatpush1.msra.mxu0 %v54
    %3011 = vmatprep.subr.mxu0 0.0
    %3012 = vmatpush1.msra.mxu0 %v53
    %3013 = vmatprep.subr.mxu0 0.0
    %3014 = vmatpush1.msra.mxu0 %v52
    %3015 = vmatprep.subr.mxu0 0.0
    %3016 = vmatpush1.msra.mxu0 %v51
    %3017 = vmatprep.subr.mxu0 0.0
    %3018 = vmatpush2.msra.mxu0 0.0
    %3019 = vmatprep.subr.mxu0 0.0
    %3020 = vmatpush2.msra.mxu0 0.0
    %3021 = vmatprep.subr.mxu0 0.0
    %3022 = vmatpush2.msra.mxu0 0.0
    %3023 = vmatprep.subr.mxu0 0.0
    %3024 = vmatpush2.msra.mxu0 0.0
    %3025 = vmatprep.subr.mxu0 0.0
    %3026 = vmatpush2.msra.mxu0 0.0
    %3027 = vmatprep.subr.mxu0 0.0
    %3028 = vmatpush2.msra.mxu0 0.0
    %3029 = vmatprep.subr.mxu0 0.0
    %3030 = vmatpush2.msra.mxu0 0.0
    %3031 = vmatprep.subr.mxu0 0.0
    %3032 = vmatpush2.msra.mxu0 0.0
    %3033 = vmatprep.subr.mxu0 0.0
    %3034 = vmatpush2.msra.mxu0 0.0
    %3035 = vmatprep.subr.mxu0 0.0
    %3036 = vmatpush2.msra.mxu0 0.0
    %3037 = vmatprep.subr.mxu0 0.0
    %3038 = vmatpush2.msra.mxu0 0.0
    %3039 = vmatprep.subr.mxu0 0.0
    %3040 = vmatpush2.msra.mxu0 0.0
    %3041 = vmatprep.subr.mxu0 0.0
    %3042 = vmatpush2.msra.mxu0 0.0
    %3043 = vmatprep.subr.mxu0 0.0
    %3044 = vmatpush2.msra.mxu0 0.0
    %3045 = vmatprep.subr.mxu0 0.0
    %3046 = vmatpush2.msra.mxu0 0.0
    %3047 = vmatprep.subr.mxu0 0.0
    %3048 = vmatpush2.msra.mxu0 0.0
    %3049 = vmatprep.mubr.f32.mxu0 0.0
    %3050 = vmatmul.mubr.f32.gmra.mxu0 %v2983
    %v3051 = vpop.f32.mrf.mxu0
    %v3052 = vadd.f32 %v60, %v3051
    %v3053 = vpop.f32.mrf.mxu0
    %3054 = vdwg.mxu0
    %v3055 = vadd.f32 %v3052, %v2809
    %v3056 = vxor.u32 %v3055, 2147483648
    %v3057 = vmul.f32 %v3056, 1.442695
    %v3058 = vpow.pop %v3057
    %v3059 = vadd.f32 %v3058, 1.0
    %v3060 = vrcp.pop %v3059
    %v3061 = vmul.f32 1.0, %v3060
    %3063 = vrot.lane.b32.xlu0 %v2809, 64
    %v3064 = vpop.permute.xlu0 %3063
    %v3066 = vmul.f32 %v3061, %v3064
    %3068 = vrot.lane.b32.xlu0 %v3066, 64
    %v3069 = vpop.permute.xlu0 %3068
    %v3071 = vadd.f32 %v3052, %v3069
    %v3072 = vtanh.pop %v3071
    %v3073 = vsub.f32 1.0, %v3061
    %3075 = vrot.lane.b32.xlu0 %v3072, 96
    %v3076 = vpop.permute.xlu0 %3075
    %v3078 = vmul.f32 %v3073, %v3076
    %v3079 = vmul.f32 %v3061, %v2566
    %v3080 = vadd.f32 %v3078, %v3079
    %3082 = vrot.lane.b32.xlu0 %v3080, 96
    %v3083 = vpop.permute.xlu0 %3082
    %v3084 = vsel %vm68, %v3083, 0
    %3086 = vmatprep.subr.mxu0 0.0
    %3087 = vmatpush1.msra.mxu0 0.0
    %3088 = vmatprep.subr.mxu0 0.0
    %3089 = vmatpush1.msra.mxu0 0.0
    %3090 = vmatprep.subr.mxu0 0.0
    %3091 = vmatpush1.msra.mxu0 0.0
    %3092 = vmatprep.subr.mxu0 0.0
    %3093 = vmatpush1.msra.mxu0 0.0
    %3094 = vmatprep.subr.mxu0 0.0
    %3095 = vmatpush1.msra.mxu0 0.0
    %3096 = vmatprep.subr.mxu0 0.0
    %3097 = vmatpush1.msra.mxu0 0.0
    %3098 = vmatprep.subr.mxu0 0.0
    %3099 = vmatpush1.msra.mxu0 0.0
    %3100 = vmatprep.subr.mxu0 0.0
    %3101 = vmatpush1.msra.mxu0 0.0
    %3102 = vmatprep.subr.mxu0 0.0
    %3103 = vmatpush1.msra.mxu0 0.0
    %3104 = vmatprep.subr.mxu0 0.0
    %3105 = vmatpush1.msra.mxu0 0.0
    %3106 = vmatprep.subr.mxu0 0.0
    %3107 = vmatpush1.msra.mxu0 0.0
    %3108 = vmatprep.subr.mxu0 0.0
    %3109 = vmatpush1.msra.mxu0 0.0
    %3110 = vmatprep.subr.mxu0 0.0
    %3111 = vmatpush1.msra.mxu0 %v58
    %3112 = vmatprep.subr.mxu0 0.0
    %3113 = vmatpush1.msra.mxu0 %v57
    %3114 = vmatprep.subr.mxu0 0.0
    %3115 = vmatpush1.msra.mxu0 %v56
    %3116 = vmatprep.subr.mxu0 0.0
    %3117 = vmatpush1.msra.mxu0 %v55
    %3118 = vmatprep.subr.mxu0 0.0
    %3119 = vmatpush2.msra.mxu0 0.0
    %3120 = vmatprep.subr.mxu0 0.0
    %3121 = vmatpush2.msra.mxu0 0.0
    %3122 = vmatprep.subr.mxu0 0.0
    %3123 = vmatpush2.msra.mxu0 0.0
    %3124 = vmatprep.subr.mxu0 0.0
    %3125 = vmatpush2.msra.mxu0 0.0
    %3126 = vmatprep.subr.mxu0 0.0
    %3127 = vmatpush2.msra.mxu0 0.0
    %3128 = vmatprep.subr.mxu0 0.0
    %3129 = vmatpush2.msra.mxu0 0.0
    %3130 = vmatprep.subr.mxu0 0.0
    %3131 = vmatpush2.msra.mxu0 0.0
    %3132 = vmatprep.subr.mxu0 0.0
    %3133 = vmatpush2.msra.mxu0 0.0
    %3134 = vmatprep.subr.mxu0 0.0
    %3135 = vmatpush2.msra.mxu0 0.0
    %3136 = vmatprep.subr.mxu0 0.0
    %3137 = vmatpush2.msra.mxu0 0.0
    %3138 = vmatprep.subr.mxu0 0.0
    %3139 = vmatpush2.msra.mxu0 0.0
    %3140 = vmatprep.subr.mxu0 0.0
    %3141 = vmatpush2.msra.mxu0 0.0
    %3142 = vmatprep.subr.mxu0 0.0
    %3143 = vmatpush2.msra.mxu0 0.0
    %3144 = vmatprep.subr.mxu0 0.0
    %3145 = vmatpush2.msra.mxu0 0.0
    %3146 = vmatprep.subr.mxu0 0.0
    %3147 = vmatpush2.msra.mxu0 0.0
    %3148 = vmatprep.subr.mxu0 0.0
    %3149 = vmatpush2.msra.mxu0 0.0
    %3150 = vmatprep.mubr.f32.mxu0 0.0
    %3151 = vmatmul.mubr.f32.gmra.mxu0 %v3084
    %v3152 = vpop.f32.mrf.mxu0
    %v3153 = vadd.f32 %v508, %v3152
    %v3154 = vpop.f32.mrf.mxu0
    %3155 = vdwg.mxu0
    %v3156 = vsel %vm582, %v3153, -inf
    %3157 = vmax.xlane.f32.xlu0 %v3156
    %v3158 = vpop.xlane.xlu0 %3157
    %v3159 = vsub.f32 %v3153, %v3158
    %v3160 = vmul.f32 %v3159, 1.442695
    %v3161 = vpow.pop %v3160
    %v3162 = vsel %vm582, %v3161, 0.0
    %3163 = vadd.xlane.f32.xlu0 %v3162
    %v3164 = vpop.xlane.xlu0 %3163
    %v3165 = vlog2.pop %v3164
    %v3166 = vmul.f32 %v3165, 0.6931472
    %v3167 = vsub.f32 %v3159, %v3166
    %3168 = vrot.lane.b32.xlu0 %v3080, 32
    %v3169 = vpop.permute.xlu0 %3168
    %3171 = vrot.lane.b32.xlu0 %v2830, 64
    %v3172 = vpop.permute.xlu0 %3171
    %v3174 = vsel %vm601, %v3167, %v3169
    %v3175 = vsel %vm603, %v3174, %v3172
    %v3176 = vsel %vm605, %v3175, 0.0
    %s3177 = sld [smem:[#allocation3 + $0x6]]
    %s3178 = scalar_lea.vmem %s1, %s3177
    %v3179 = vld [vmem:[%s3178] sm:$0x1]
    %v3181 = vsel %vm68, %v3179, 0
    %3183 = vmatprep.subr.mxu0 0.0
    %3184 = vmatpush1.msra.mxu0 0.0
    %3185 = vmatprep.subr.mxu0 0.0
    %3186 = vmatpush1.msra.mxu0 0.0
    %3187 = vmatprep.subr.mxu0 0.0
    %3188 = vmatpush1.msra.mxu0 0.0
    %3189 = vmatprep.subr.mxu0 0.0
    %3190 = vmatpush1.msra.mxu0 0.0
    %3191 = vmatprep.subr.mxu0 0.0
    %3192 = vmatpush1.msra.mxu0 0.0
    %3193 = vmatprep.subr.mxu0 0.0
    %3194 = vmatpush1.msra.mxu0 0.0
    %3195 = vmatprep.subr.mxu0 0.0
    %3196 = vmatpush1.msra.mxu0 0.0
    %3197 = vmatprep.subr.mxu0 0.0
    %3198 = vmatpush1.msra.mxu0 0.0
    %3199 = vmatprep.subr.mxu0 0.0
    %3200 = vmatpush1.msra.mxu0 0.0
    %3201 = vmatprep.subr.mxu0 0.0
    %3202 = vmatpush1.msra.mxu0 0.0
    %3203 = vmatprep.subr.mxu0 0.0
    %3204 = vmatpush1.msra.mxu0 0.0
    %3205 = vmatprep.subr.mxu0 0.0
    %3206 = vmatpush1.msra.mxu0 0.0
    %3207 = vmatprep.subr.mxu0 0.0
    %3208 = vmatpush1.msra.mxu0 %v42
    %3209 = vmatprep.subr.mxu0 0.0
    %3210 = vmatpush1.msra.mxu0 %v41
    %3211 = vmatprep.subr.mxu0 0.0
    %3212 = vmatpush1.msra.mxu0 %v40
    %3213 = vmatprep.subr.mxu0 0.0
    %3214 = vmatpush1.msra.mxu0 %v39
    %3215 = vmatprep.subr.mxu0 0.0
    %3216 = vmatpush2.msra.mxu0 0.0
    %3217 = vmatprep.subr.mxu0 0.0
    %3218 = vmatpush2.msra.mxu0 0.0
    %3219 = vmatprep.subr.mxu0 0.0
    %3220 = vmatpush2.msra.mxu0 0.0
    %3221 = vmatprep.subr.mxu0 0.0
    %3222 = vmatpush2.msra.mxu0 0.0
    %3223 = vmatprep.subr.mxu0 0.0
    %3224 = vmatpush2.msra.mxu0 0.0
    %3225 = vmatprep.subr.mxu0 0.0
    %3226 = vmatpush2.msra.mxu0 0.0
    %3227 = vmatprep.subr.mxu0 0.0
    %3228 = vmatpush2.msra.mxu0 0.0
    %3229 = vmatprep.subr.mxu0 0.0
    %3230 = vmatpush2.msra.mxu0 0.0
    %3231 = vmatprep.subr.mxu0 0.0
    %3232 = vmatpush2.msra.mxu0 0.0
    %3233 = vmatprep.subr.mxu0 0.0
    %3234 = vmatpush2.msra.mxu0 0.0
    %3235 = vmatprep.subr.mxu0 0.0
    %3236 = vmatpush2.msra.mxu0 0.0
    %3237 = vmatprep.subr.mxu0 0.0
    %3238 = vmatpush2.msra.mxu0 0.0
    %3239 = vmatprep.subr.mxu0 0.0
    %3240 = vmatpush2.msra.mxu0 0.0
    %3241 = vmatprep.subr.mxu0 0.0
    %3242 = vmatpush2.msra.mxu0 0.0
    %3243 = vmatprep.subr.mxu0 0.0
    %3244 = vmatpush2.msra.mxu0 0.0
    %3245 = vmatprep.subr.mxu0 0.0
    %3246 = vmatpush2.msra.mxu0 0.0
    %3247 = vmatprep.mubr.f32.mxu0 0.0
    %3248 = vmatmul.mubr.f32.gmra.mxu0 %v3181
    %v3249 = vpop.f32.mrf.mxu0
    %v3250 = vadd.f32 0.0, %v3249
    %v3251 = vpop.f32.mrf.mxu0
    %3252 = vdwg.mxu0
    %3253 = vmatprep.subr.mxu0 0.0
    %3254 = vmatpush1.msra.mxu0 0.0
    %3255 = vmatprep.subr.mxu0 0.0
    %3256 = vmatpush1.msra.mxu0 0.0
    %3257 = vmatprep.subr.mxu0 0.0
    %3258 = vmatpush1.msra.mxu0 0.0
    %3259 = vmatprep.subr.mxu0 0.0
    %3260 = vmatpush1.msra.mxu0 0.0
    %3261 = vmatprep.subr.mxu0 0.0
    %3262 = vmatpush1.msra.mxu0 0.0
    %3263 = vmatprep.subr.mxu0 0.0
    %3264 = vmatpush1.msra.mxu0 0.0
    %3265 = vmatprep.subr.mxu0 0.0
    %3266 = vmatpush1.msra.mxu0 0.0
    %3267 = vmatprep.subr.mxu0 0.0
    %3268 = vmatpush1.msra.mxu0 0.0
    %3269 = vmatprep.subr.mxu0 0.0
    %3270 = vmatpush1.msra.mxu0 0.0
    %3271 = vmatprep.subr.mxu0 0.0
    %3272 = vmatpush1.msra.mxu0 0.0
    %3273 = vmatprep.subr.mxu0 0.0
    %3274 = vmatpush1.msra.mxu0 0.0
    %3275 = vmatprep.subr.mxu0 0.0
    %3276 = vmatpush1.msra.mxu0 0.0
    %3277 = vmatprep.subr.mxu0 0.0
    %3278 = vmatpush1.msra.mxu0 %v46
    %3279 = vmatprep.subr.mxu0 0.0
    %3280 = vmatpush1.msra.mxu0 %v45
    %3281 = vmatprep.subr.mxu0 0.0
    %3282 = vmatpush1.msra.mxu0 %v44
    %3283 = vmatprep.subr.mxu0 0.0
    %3284 = vmatpush1.msra.mxu0 %v43
    %3285 = vmatprep.subr.mxu0 0.0
    %3286 = vmatpush2.msra.mxu0 0.0
    %3287 = vmatprep.subr.mxu0 0.0
    %3288 = vmatpush2.msra.mxu0 0.0
    %3289 = vmatprep.subr.mxu0 0.0
    %3290 = vmatpush2.msra.mxu0 0.0
    %3291 = vmatprep.subr.mxu0 0.0
    %3292 = vmatpush2.msra.mxu0 0.0
    %3293 = vmatprep.subr.mxu0 0.0
    %3294 = vmatpush2.msra.mxu0 0.0
    %3295 = vmatprep.subr.mxu0 0.0
    %3296 = vmatpush2.msra.mxu0 0.0
    %3297 = vmatprep.subr.mxu0 0.0
    %3298 = vmatpush2.msra.mxu0 0.0
    %3299 = vmatprep.subr.mxu0 0.0
    %3300 = vmatpush2.msra.mxu0 0.0
    %3301 = vmatprep.subr.mxu0 0.0
    %3302 = vmatpush2.msra.mxu0 0.0
    %3303 = vmatprep.subr.mxu0 0.0
    %3304 = vmatpush2.msra.mxu0 0.0
    %3305 = vmatprep.subr.mxu0 0.0
    %3306 = vmatpush2.msra.mxu0 0.0
    %3307 = vmatprep.subr.mxu0 0.0
    %3308 = vmatpush2.msra.mxu0 0.0
    %3309 = vmatprep.subr.mxu0 0.0
    %3310 = vmatpush2.msra.mxu0 0.0
    %3311 = vmatprep.subr.mxu0 0.0
    %3312 = vmatpush2.msra.mxu0 0.0
    %3313 = vmatprep.subr.mxu0 0.0
    %3314 = vmatpush2.msra.mxu0 0.0
    %3315 = vmatprep.subr.mxu0 0.0
    %3316 = vmatpush2.msra.mxu0 0.0
    %3317 = vmatprep.mubr.f32.mxu0 0.0
    %3318 = vmatmul.mubr.f32.gmra.mxu0 %v3084
    %v3319 = vpop.f32.mrf.mxu0
    %v3320 = vadd.f32 0.0, %v3319
    %v3321 = vpop.f32.mrf.mxu0
    %3322 = vdwg.mxu0
    %v3323 = vadd.f32 %v3320, %v61
    %3325 = vrot.lane.b32.xlu0 %v3320, 64
    %v3326 = vpop.permute.xlu0 %3325
    %v3328 = vadd.f32 %v3250, %v3326
    %v3329 = vadd.f32 %v3328, %v223
    %v3330 = vsel %vm226, %v3329, -inf
    %3331 = vmax.xlane.f32.xlu0 %v3330
    %v3332 = vpop.xlane.xlu0 %3331
    %v3333 = vsub.f32 %v3329, %v3332
    %v3334 = vmul.f32 %v3333, 1.442695
    %v3335 = vpow.pop %v3334
    %3337 = vrot.lane.b32.xlu0 %v3335, 96
    %v3338 = vpop.permute.xlu0 %3337
    %v3340 = vsel %vm237, %v3338, 0.0
    %3341 = vadd.xlane.f32.xlu0 %v3340
    %v3342 = vpop.xlane.xlu0 %3341
    %v3343 = vrcp.pop %v3342
    %v3344 = vmul.f32 %v3335, %v3343
    %3346 = vrot.lane.b32.xlu0 %v3344, 96
    %v3347 = vpop.permute.xlu0 %3346
    %v3348 = vsel %vm246, %v3347, 0
    %3350 = vmatprep.subr.mxu0 0.0
    %3351 = vmatpush1.msra.mxu0 0.0
    %3352 = vmatprep.subr.mxu0 0.0
    %3353 = vmatpush1.msra.mxu0 0.0
    %3354 = vmatprep.subr.mxu0 0.0
    %3355 = vmatpush1.msra.mxu0 0.0
    %3356 = vmatprep.subr.mxu0 0.0
    %3357 = vmatpush1.msra.mxu0 0.0
    %3358 = vmatprep.subr.mxu0 0.0
    %3359 = vmatpush1.msra.mxu0 0.0
    %3360 = vmatprep.subr.mxu0 0.0
    %3361 = vmatpush1.msra.mxu0 0.0
    %3362 = vmatprep.subr.mxu0 0.0
    %3363 = vmatpush1.msra.mxu0 0.0
    %3364 = vmatprep.subr.mxu0 0.0
    %3365 = vmatpush1.msra.mxu0 0.0
    %3366 = vmatprep.subr.mxu0 0.0
    %3367 = vmatpush1.msra.mxu0 0.0
    %3368 = vmatprep.subr.mxu0 0.0
    %3369 = vmatpush1.msra.mxu0 0.0
    %3370 = vmatprep.subr.mxu0 0.0
    %3371 = vmatpush1.msra.mxu0 0.0
    %3372 = vmatprep.subr.mxu0 0.0
    %3373 = vmatpush1.msra.mxu0 0.0
    %3374 = vmatprep.subr.mxu0 0.0
    %3375 = vmatpush1.msra.mxu0 0.0
    %3376 = vmatprep.subr.mxu0 0.0
    %3377 = vmatpush1.msra.mxu0 0.0
    %3378 = vmatprep.subr.mxu0 0.0
    %3379 = vmatpush1.msra.mxu0 %v63
    %3380 = vmatprep.subr.mxu0 0.0
    %3381 = vmatpush1.msra.mxu0 %v62
    %3382 = vmatprep.subr.mxu0 0.0
    %3383 = vmatpush2.msra.mxu0 0.0
    %3384 = vmatprep.subr.mxu0 0.0
    %3385 = vmatpush2.msra.mxu0 0.0
    %3386 = vmatprep.subr.mxu0 0.0
    %3387 = vmatpush2.msra.mxu0 0.0
    %3388 = vmatprep.subr.mxu0 0.0
    %3389 = vmatpush2.msra.mxu0 0.0
    %3390 = vmatprep.subr.mxu0 0.0
    %3391 = vmatpush2.msra.mxu0 0.0
    %3392 = vmatprep.subr.mxu0 0.0
    %3393 = vmatpush2.msra.mxu0 0.0
    %3394 = vmatprep.subr.mxu0 0.0
    %3395 = vmatpush2.msra.mxu0 0.0
    %3396 = vmatprep.subr.mxu0 0.0
    %3397 = vmatpush2.msra.mxu0 0.0
    %3398 = vmatprep.subr.mxu0 0.0
    %3399 = vmatpush2.msra.mxu0 0.0
    %3400 = vmatprep.subr.mxu0 0.0
    %3401 = vmatpush2.msra.mxu0 0.0
    %3402 = vmatprep.subr.mxu0 0.0
    %3403 = vmatpush2.msra.mxu0 0.0
    %3404 = vmatprep.subr.mxu0 0.0
    %3405 = vmatpush2.msra.mxu0 0.0
    %3406 = vmatprep.subr.mxu0 0.0
    %3407 = vmatpush2.msra.mxu0 0.0
    %3408 = vmatprep.subr.mxu0 0.0
    %3409 = vmatpush2.msra.mxu0 0.0
    %3410 = vmatprep.subr.mxu0 0.0
    %3411 = vmatpush2.msra.mxu0 0.0
    %3412 = vmatprep.subr.mxu0 0.0
    %3413 = vmatpush2.msra.mxu0 0.0
    %3414 = vmatprep.mubr.f32.mxu0 0.0
    %3415 = vmatmul.mubr.f32.gmra.mxu0 %v3348
    %v3416 = vpop.f32.mrf.mxu0
    %v3417 = vadd.f32 0.0, %v3416
    %v3418 = vpop.f32.mrf.mxu0
    %3419 = vdwg.mxu0
    %v3421 = vsel %vm68, %v3417, 0
    %3423 = vmatprep.subr.mxu0 0.0
    %3424 = vmatpush1.msra.mxu0 0.0
    %3425 = vmatprep.subr.mxu0 0.0
    %3426 = vmatpush1.msra.mxu0 0.0
    %3427 = vmatprep.subr.mxu0 0.0
    %3428 = vmatpush1.msra.mxu0 0.0
    %3429 = vmatprep.subr.mxu0 0.0
    %3430 = vmatpush1.msra.mxu0 0.0
    %3431 = vmatprep.subr.mxu0 0.0
    %3432 = vmatpush1.msra.mxu0 0.0
    %3433 = vmatprep.subr.mxu0 0.0
    %3434 = vmatpush1.msra.mxu0 0.0
    %3435 = vmatprep.subr.mxu0 0.0
    %3436 = vmatpush1.msra.mxu0 0.0
    %3437 = vmatprep.subr.mxu0 0.0
    %3438 = vmatpush1.msra.mxu0 0.0
    %3439 = vmatprep.subr.mxu0 0.0
    %3440 = vmatpush1.msra.mxu0 0.0
    %3441 = vmatprep.subr.mxu0 0.0
    %3442 = vmatpush1.msra.mxu0 0.0
    %3443 = vmatprep.subr.mxu0 0.0
    %3444 = vmatpush1.msra.mxu0 0.0
    %3445 = vmatprep.subr.mxu0 0.0
    %3446 = vmatpush1.msra.mxu0 0.0
    %3447 = vmatprep.subr.mxu0 0.0
    %3448 = vmatpush1.msra.mxu0 %v50
    %3449 = vmatprep.subr.mxu0 0.0
    %3450 = vmatpush1.msra.mxu0 %v49
    %3451 = vmatprep.subr.mxu0 0.0
    %3452 = vmatpush1.msra.mxu0 %v48
    %3453 = vmatprep.subr.mxu0 0.0
    %3454 = vmatpush1.msra.mxu0 %v47
    %3455 = vmatprep.subr.mxu0 0.0
    %3456 = vmatpush2.msra.mxu0 0.0
    %3457 = vmatprep.subr.mxu0 0.0
    %3458 = vmatpush2.msra.mxu0 0.0
    %3459 = vmatprep.subr.mxu0 0.0
    %3460 = vmatpush2.msra.mxu0 0.0
    %3461 = vmatprep.subr.mxu0 0.0
    %3462 = vmatpush2.msra.mxu0 0.0
    %3463 = vmatprep.subr.mxu0 0.0
    %3464 = vmatpush2.msra.mxu0 0.0
    %3465 = vmatprep.subr.mxu0 0.0
    %3466 = vmatpush2.msra.mxu0 0.0
    %3467 = vmatprep.subr.mxu0 0.0
    %3468 = vmatpush2.msra.mxu0 0.0
    %3469 = vmatprep.subr.mxu0 0.0
    %3470 = vmatpush2.msra.mxu0 0.0
    %3471 = vmatprep.subr.mxu0 0.0
    %3472 = vmatpush2.msra.mxu0 0.0
    %3473 = vmatprep.subr.mxu0 0.0
    %3474 = vmatpush2.msra.mxu0 0.0
    %3475 = vmatprep.subr.mxu0 0.0
    %3476 = vmatpush2.msra.mxu0 0.0
    %3477 = vmatprep.subr.mxu0 0.0
    %3478 = vmatpush2.msra.mxu0 0.0
    %3479 = vmatprep.subr.mxu0 0.0
    %3480 = vmatpush2.msra.mxu0 0.0
    %3481 = vmatprep.subr.mxu0 0.0
    %3482 = vmatpush2.msra.mxu0 0.0
    %3483 = vmatprep.subr.mxu0 0.0
    %3484 = vmatpush2.msra.mxu0 0.0
    %3485 = vmatprep.subr.mxu0 0.0
    %3486 = vmatpush2.msra.mxu0 0.0
    %3487 = vmatprep.mubr.f32.mxu0 0.0
    %3488 = vmatmul.mubr.f32.gmra.mxu0 %v3421
    %v3489 = vpop.f32.mrf.mxu0
    %v3490 = vadd.f32 0.0, %v3489
    %v3491 = vpop.f32.mrf.mxu0
    %3492 = vdwg.mxu0
    %v3493 = vadd.f32 %v3250, %v3490
    %v3494 = vadd.f32 %v3493, %v394
    %v3495 = vmax.f32 %v3494, 0.0
    %v3497 = vsel %vm68, %v3495, 0
    %3499 = vmatprep.subr.mxu0 0.0
    %3500 = vmatpush1.msra.mxu0 0.0
    %3501 = vmatprep.subr.mxu0 0.0
    %3502 = vmatpush1.msra.mxu0 0.0
    %3503 = vmatprep.subr.mxu0 0.0
    %3504 = vmatpush1.msra.mxu0 0.0
    %3505 = vmatprep.subr.mxu0 0.0
    %3506 = vmatpush1.msra.mxu0 0.0
    %3507 = vmatprep.subr.mxu0 0.0
    %3508 = vmatpush1.msra.mxu0 0.0
    %3509 = vmatprep.subr.mxu0 0.0
    %3510 = vmatpush1.msra.mxu0 0.0
    %3511 = vmatprep.subr.mxu0 0.0
    %3512 = vmatpush1.msra.mxu0 0.0
    %3513 = vmatprep.subr.mxu0 0.0
    %3514 = vmatpush1.msra.mxu0 0.0
    %3515 = vmatprep.subr.mxu0 0.0
    %3516 = vmatpush1.msra.mxu0 0.0
    %3517 = vmatprep.subr.mxu0 0.0
    %3518 = vmatpush1.msra.mxu0 0.0
    %3519 = vmatprep.subr.mxu0 0.0
    %3520 = vmatpush1.msra.mxu0 0.0
    %3521 = vmatprep.subr.mxu0 0.0
    %3522 = vmatpush1.msra.mxu0 0.0
    %3523 = vmatprep.subr.mxu0 0.0
    %3524 = vmatpush1.msra.mxu0 %v54
    %3525 = vmatprep.subr.mxu0 0.0
    %3526 = vmatpush1.msra.mxu0 %v53
    %3527 = vmatprep.subr.mxu0 0.0
    %3528 = vmatpush1.msra.mxu0 %v52
    %3529 = vmatprep.subr.mxu0 0.0
    %3530 = vmatpush1.msra.mxu0 %v51
    %3531 = vmatprep.subr.mxu0 0.0
    %3532 = vmatpush2.msra.mxu0 0.0
    %3533 = vmatprep.subr.mxu0 0.0
    %3534 = vmatpush2.msra.mxu0 0.0
    %3535 = vmatprep.subr.mxu0 0.0
    %3536 = vmatpush2.msra.mxu0 0.0
    %3537 = vmatprep.subr.mxu0 0.0
    %3538 = vmatpush2.msra.mxu0 0.0
    %3539 = vmatprep.subr.mxu0 0.0
    %3540 = vmatpush2.msra.mxu0 0.0
    %3541 = vmatprep.subr.mxu0 0.0
    %3542 = vmatpush2.msra.mxu0 0.0
    %3543 = vmatprep.subr.mxu0 0.0
    %3544 = vmatpush2.msra.mxu0 0.0
    %3545 = vmatprep.subr.mxu0 0.0
    %3546 = vmatpush2.msra.mxu0 0.0
    %3547 = vmatprep.subr.mxu0 0.0
    %3548 = vmatpush2.msra.mxu0 0.0
    %3549 = vmatprep.subr.mxu0 0.0
    %3550 = vmatpush2.msra.mxu0 0.0
    %3551 = vmatprep.subr.mxu0 0.0
    %3552 = vmatpush2.msra.mxu0 0.0
    %3553 = vmatprep.subr.mxu0 0.0
    %3554 = vmatpush2.msra.mxu0 0.0
    %3555 = vmatprep.subr.mxu0 0.0
    %3556 = vmatpush2.msra.mxu0 0.0
    %3557 = vmatprep.subr.mxu0 0.0
    %3558 = vmatpush2.msra.mxu0 0.0
    %3559 = vmatprep.subr.mxu0 0.0
    %3560 = vmatpush2.msra.mxu0 0.0
    %3561 = vmatprep.subr.mxu0 0.0
    %3562 = vmatpush2.msra.mxu0 0.0
    %3563 = vmatprep.mubr.f32.mxu0 0.0
    %3564 = vmatmul.mubr.f32.gmra.mxu0 %v3497
    %v3565 = vpop.f32.mrf.mxu0
    %v3566 = vadd.f32 %v60, %v3565
    %v3567 = vpop.f32.mrf.mxu0
    %3568 = vdwg.mxu0
    %v3569 = vadd.f32 %v3566, %v3323
    %v3570 = vxor.u32 %v3569, 2147483648
    %v3571 = vmul.f32 %v3570, 1.442695
    %v3572 = vpow.pop %v3571
    %v3573 = vadd.f32 %v3572, 1.0
    %v3574 = vrcp.pop %v3573
    %v3575 = vmul.f32 1.0, %v3574
    %3577 = vrot.lane.b32.xlu0 %v3323, 64
    %v3578 = vpop.permute.xlu0 %3577
    %v3580 = vmul.f32 %v3575, %v3578
    %3582 = vrot.lane.b32.xlu0 %v3580, 64
    %v3583 = vpop.permute.xlu0 %3582
    %v3585 = vadd.f32 %v3566, %v3583
    %v3586 = vtanh.pop %v3585
    %v3587 = vsub.f32 1.0, %v3575
    %3589 = vrot.lane.b32.xlu0 %v3586, 96
    %v3590 = vpop.permute.xlu0 %3589
    %v3592 = vmul.f32 %v3587, %v3590
    %v3593 = vmul.f32 %v3575, %v3080
    %v3594 = vadd.f32 %v3592, %v3593
    %3596 = vrot.lane.b32.xlu0 %v3594, 96
    %v3597 = vpop.permute.xlu0 %3596
    %v3598 = vsel %vm68, %v3597, 0
    %3600 = vmatprep.subr.mxu0 0.0
    %3601 = vmatpush1.msra.mxu0 0.0
    %3602 = vmatprep.subr.mxu0 0.0
    %3603 = vmatpush1.msra.mxu0 0.0
    %3604 = vmatprep.subr.mxu0 0.0
    %3605 = vmatpush1.msra.mxu0 0.0
    %3606 = vmatprep.subr.mxu0 0.0
    %3607 = vmatpush1.msra.mxu0 0.0
    %3608 = vmatprep.subr.mxu0 0.0
    %3609 = vmatpush1.msra.mxu0 0.0
    %3610 = vmatprep.subr.mxu0 0.0
    %3611 = vmatpush1.msra.mxu0 0.0
    %3612 = vmatprep.subr.mxu0 0.0
    %3613 = vmatpush1.msra.mxu0 0.0
    %3614 = vmatprep.subr.mxu0 0.0
    %3615 = vmatpush1.msra.mxu0 0.0
    %3616 = vmatprep.subr.mxu0 0.0
    %3617 = vmatpush1.msra.mxu0 0.0
    %3618 = vmatprep.subr.mxu0 0.0
    %3619 = vmatpush1.msra.mxu0 0.0
    %3620 = vmatprep.subr.mxu0 0.0
    %3621 = vmatpush1.msra.mxu0 0.0
    %3622 = vmatprep.subr.mxu0 0.0
    %3623 = vmatpush1.msra.mxu0 0.0
    %3624 = vmatprep.subr.mxu0 0.0
    %3625 = vmatpush1.msra.mxu0 %v58
    %3626 = vmatprep.subr.mxu0 0.0
    %3627 = vmatpush1.msra.mxu0 %v57
    %3628 = vmatprep.subr.mxu0 0.0
    %3629 = vmatpush1.msra.mxu0 %v56
    %3630 = vmatprep.subr.mxu0 0.0
    %3631 = vmatpush1.msra.mxu0 %v55
    %3632 = vmatprep.subr.mxu0 0.0
    %3633 = vmatpush2.msra.mxu0 0.0
    %3634 = vmatprep.subr.mxu0 0.0
    %3635 = vmatpush2.msra.mxu0 0.0
    %3636 = vmatprep.subr.mxu0 0.0
    %3637 = vmatpush2.msra.mxu0 0.0
    %3638 = vmatprep.subr.mxu0 0.0
    %3639 = vmatpush2.msra.mxu0 0.0
    %3640 = vmatprep.subr.mxu0 0.0
    %3641 = vmatpush2.msra.mxu0 0.0
    %3642 = vmatprep.subr.mxu0 0.0
    %3643 = vmatpush2.msra.mxu0 0.0
    %3644 = vmatprep.subr.mxu0 0.0
    %3645 = vmatpush2.msra.mxu0 0.0
    %3646 = vmatprep.subr.mxu0 0.0
    %3647 = vmatpush2.msra.mxu0 0.0
    %3648 = vmatprep.subr.mxu0 0.0
    %3649 = vmatpush2.msra.mxu0 0.0
    %3650 = vmatprep.subr.mxu0 0.0
    %3651 = vmatpush2.msra.mxu0 0.0
    %3652 = vmatprep.subr.mxu0 0.0
    %3653 = vmatpush2.msra.mxu0 0.0
    %3654 = vmatprep.subr.mxu0 0.0
    %3655 = vmatpush2.msra.mxu0 0.0
    %3656 = vmatprep.subr.mxu0 0.0
    %3657 = vmatpush2.msra.mxu0 0.0
    %3658 = vmatprep.subr.mxu0 0.0
    %3659 = vmatpush2.msra.mxu0 0.0
    %3660 = vmatprep.subr.mxu0 0.0
    %3661 = vmatpush2.msra.mxu0 0.0
    %3662 = vmatprep.subr.mxu0 0.0
    %3663 = vmatpush2.msra.mxu0 0.0
    %3664 = vmatprep.mubr.f32.mxu0 0.0
    %3665 = vmatmul.mubr.f32.gmra.mxu0 %v3598
    %v3666 = vpop.f32.mrf.mxu0
    %v3667 = vadd.f32 %v508, %v3666
    %v3668 = vpop.f32.mrf.mxu0
    %3669 = vdwg.mxu0
    %v3670 = vsel %vm582, %v3667, -inf
    %3671 = vmax.xlane.f32.xlu0 %v3670
    %v3672 = vpop.xlane.xlu0 %3671
    %v3673 = vsub.f32 %v3667, %v3672
    %v3674 = vmul.f32 %v3673, 1.442695
    %v3675 = vpow.pop %v3674
    %v3676 = vsel %vm582, %v3675, 0.0
    %3677 = vadd.xlane.f32.xlu0 %v3676
    %v3678 = vpop.xlane.xlu0 %3677
    %v3679 = vlog2.pop %v3678
    %v3680 = vmul.f32 %v3679, 0.6931472
    %v3681 = vsub.f32 %v3673, %v3680
    %3682 = vrot.lane.b32.xlu0 %v3594, 32
    %v3683 = vpop.permute.xlu0 %3682
    %3685 = vrot.lane.b32.xlu0 %v3344, 64
    %v3686 = vpop.permute.xlu0 %3685
    %v3688 = vsel %vm601, %v3681, %v3683
    %v3689 = vsel %vm603, %v3688, %v3686
    %v3690 = vsel %vm605, %v3689, 0.0
    %s3691 = sld [smem:[#allocation3 + $0x7]]
    %s3692 = scalar_lea.vmem %s1, %s3691
    %v3693 = vld [vmem:[%s3692] sm:$0x1]
    %v3695 = vsel %vm68, %v3693, 0
    %3697 = vmatprep.subr.mxu0 0.0
    %3698 = vmatpush1.msra.mxu0 0.0
    %3699 = vmatprep.subr.mxu0 0.0
    %3700 = vmatpush1.msra.mxu0 0.0
    %3701 = vmatprep.subr.mxu0 0.0
    %3702 = vmatpush1.msra.mxu0 0.0
    %3703 = vmatprep.subr.mxu0 0.0
    %3704 = vmatpush1.msra.mxu0 0.0
    %3705 = vmatprep.subr.mxu0 0.0
    %3706 = vmatpush1.msra.mxu0 0.0
    %3707 = vmatprep.subr.mxu0 0.0
    %3708 = vmatpush1.msra.mxu0 0.0
    %3709 = vmatprep.subr.mxu0 0.0
    %3710 = vmatpush1.msra.mxu0 0.0
    %3711 = vmatprep.subr.mxu0 0.0
    %3712 = vmatpush1.msra.mxu0 0.0
    %3713 = vmatprep.subr.mxu0 0.0
    %3714 = vmatpush1.msra.mxu0 0.0
    %3715 = vmatprep.subr.mxu0 0.0
    %3716 = vmatpush1.msra.mxu0 0.0
    %3717 = vmatprep.subr.mxu0 0.0
    %3718 = vmatpush1.msra.mxu0 0.0
    %3719 = vmatprep.subr.mxu0 0.0
    %3720 = vmatpush1.msra.mxu0 0.0
    %3721 = vmatprep.subr.mxu0 0.0
    %3722 = vmatpush1.msra.mxu0 %v42
    %3723 = vmatprep.subr.mxu0 0.0
    %3724 = vmatpush1.msra.mxu0 %v41
    %3725 = vmatprep.subr.mxu0 0.0
    %3726 = vmatpush1.msra.mxu0 %v40
    %3727 = vmatprep.subr.mxu0 0.0
    %3728 = vmatpush1.msra.mxu0 %v39
    %3729 = vmatprep.subr.mxu0 0.0
    %3730 = vmatpush2.msra.mxu0 0.0
    %3731 = vmatprep.subr.mxu0 0.0
    %3732 = vmatpush2.msra.mxu0 0.0
    %3733 = vmatprep.subr.mxu0 0.0
    %3734 = vmatpush2.msra.mxu0 0.0
    %3735 = vmatprep.subr.mxu0 0.0
    %3736 = vmatpush2.msra.mxu0 0.0
    %3737 = vmatprep.subr.mxu0 0.0
    %3738 = vmatpush2.msra.mxu0 0.0
    %3739 = vmatprep.subr.mxu0 0.0
    %3740 = vmatpush2.msra.mxu0 0.0
    %3741 = vmatprep.subr.mxu0 0.0
    %3742 = vmatpush2.msra.mxu0 0.0
    %3743 = vmatprep.subr.mxu0 0.0
    %3744 = vmatpush2.msra.mxu0 0.0
    %3745 = vmatprep.subr.mxu0 0.0
    %3746 = vmatpush2.msra.mxu0 0.0
    %3747 = vmatprep.subr.mxu0 0.0
    %3748 = vmatpush2.msra.mxu0 0.0
    %3749 = vmatprep.subr.mxu0 0.0
    %3750 = vmatpush2.msra.mxu0 0.0
    %3751 = vmatprep.subr.mxu0 0.0
    %3752 = vmatpush2.msra.mxu0 0.0
    %3753 = vmatprep.subr.mxu0 0.0
    %3754 = vmatpush2.msra.mxu0 0.0
    %3755 = vmatprep.subr.mxu0 0.0
    %3756 = vmatpush2.msra.mxu0 0.0
    %3757 = vmatprep.subr.mxu0 0.0
    %3758 = vmatpush2.msra.mxu0 0.0
    %3759 = vmatprep.subr.mxu0 0.0
    %3760 = vmatpush2.msra.mxu0 0.0
    %3761 = vmatprep.mubr.f32.mxu0 0.0
    %3762 = vmatmul.mubr.f32.gmra.mxu0 %v3695
    %v3763 = vpop.f32.mrf.mxu0
    %v3764 = vadd.f32 0.0, %v3763
    %v3765 = vpop.f32.mrf.mxu0
    %3766 = vdwg.mxu0
    %3767 = vmatprep.subr.mxu0 0.0
    %3768 = vmatpush1.msra.mxu0 0.0
    %3769 = vmatprep.subr.mxu0 0.0
    %3770 = vmatpush1.msra.mxu0 0.0
    %3771 = vmatprep.subr.mxu0 0.0
    %3772 = vmatpush1.msra.mxu0 0.0
    %3773 = vmatprep.subr.mxu0 0.0
    %3774 = vmatpush1.msra.mxu0 0.0
    %3775 = vmatprep.subr.mxu0 0.0
    %3776 = vmatpush1.msra.mxu0 0.0
    %3777 = vmatprep.subr.mxu0 0.0
    %3778 = vmatpush1.msra.mxu0 0.0
    %3779 = vmatprep.subr.mxu0 0.0
    %3780 = vmatpush1.msra.mxu0 0.0
    %3781 = vmatprep.subr.mxu0 0.0
    %3782 = vmatpush1.msra.mxu0 0.0
    %3783 = vmatprep.subr.mxu0 0.0
    %3784 = vmatpush1.msra.mxu0 0.0
    %3785 = vmatprep.subr.mxu0 0.0
    %3786 = vmatpush1.msra.mxu0 0.0
    %3787 = vmatprep.subr.mxu0 0.0
    %3788 = vmatpush1.msra.mxu0 0.0
    %3789 = vmatprep.subr.mxu0 0.0
    %3790 = vmatpush1.msra.mxu0 0.0
    %3791 = vmatprep.subr.mxu0 0.0
    %3792 = vmatpush1.msra.mxu0 %v46
    %3793 = vmatprep.subr.mxu0 0.0
    %3794 = vmatpush1.msra.mxu0 %v45
    %3795 = vmatprep.subr.mxu0 0.0
    %3796 = vmatpush1.msra.mxu0 %v44
    %3797 = vmatprep.subr.mxu0 0.0
    %3798 = vmatpush1.msra.mxu0 %v43
    %3799 = vmatprep.subr.mxu0 0.0
    %3800 = vmatpush2.msra.mxu0 0.0
    %3801 = vmatprep.subr.mxu0 0.0
    %3802 = vmatpush2.msra.mxu0 0.0
    %3803 = vmatprep.subr.mxu0 0.0
    %3804 = vmatpush2.msra.mxu0 0.0
    %3805 = vmatprep.subr.mxu0 0.0
    %3806 = vmatpush2.msra.mxu0 0.0
    %3807 = vmatprep.subr.mxu0 0.0
    %3808 = vmatpush2.msra.mxu0 0.0
    %3809 = vmatprep.subr.mxu0 0.0
    %3810 = vmatpush2.msra.mxu0 0.0
    %3811 = vmatprep.subr.mxu0 0.0
    %3812 = vmatpush2.msra.mxu0 0.0
    %3813 = vmatprep.subr.mxu0 0.0
    %3814 = vmatpush2.msra.mxu0 0.0
    %3815 = vmatprep.subr.mxu0 0.0
    %3816 = vmatpush2.msra.mxu0 0.0
    %3817 = vmatprep.subr.mxu0 0.0
    %3818 = vmatpush2.msra.mxu0 0.0
    %3819 = vmatprep.subr.mxu0 0.0
    %3820 = vmatpush2.msra.mxu0 0.0
    %3821 = vmatprep.subr.mxu0 0.0
    %3822 = vmatpush2.msra.mxu0 0.0
    %3823 = vmatprep.subr.mxu0 0.0
    %3824 = vmatpush2.msra.mxu0 0.0
    %3825 = vmatprep.subr.mxu0 0.0
    %3826 = vmatpush2.msra.mxu0 0.0
    %3827 = vmatprep.subr.mxu0 0.0
    %3828 = vmatpush2.msra.mxu0 0.0
    %3829 = vmatprep.subr.mxu0 0.0
    %3830 = vmatpush2.msra.mxu0 0.0
    %3831 = vmatprep.mubr.f32.mxu0 0.0
    %3832 = vmatmul.mubr.f32.gmra.mxu0 %v3598
    %v3833 = vpop.f32.mrf.mxu0
    %v3834 = vadd.f32 0.0, %v3833
    %v3835 = vpop.f32.mrf.mxu0
    %3836 = vdwg.mxu0
    %v3837 = vadd.f32 %v3834, %v61
    %3839 = vrot.lane.b32.xlu0 %v3834, 64
    %v3840 = vpop.permute.xlu0 %3839
    %v3842 = vadd.f32 %v3764, %v3840
    %v3843 = vadd.f32 %v3842, %v223
    %v3844 = vsel %vm226, %v3843, -inf
    %3845 = vmax.xlane.f32.xlu0 %v3844
    %v3846 = vpop.xlane.xlu0 %3845
    %v3847 = vsub.f32 %v3843, %v3846
    %v3848 = vmul.f32 %v3847, 1.442695
    %v3849 = vpow.pop %v3848
    %3851 = vrot.lane.b32.xlu0 %v3849, 96
    %v3852 = vpop.permute.xlu0 %3851
    %v3854 = vsel %vm237, %v3852, 0.0
    %3855 = vadd.xlane.f32.xlu0 %v3854
    %v3856 = vpop.xlane.xlu0 %3855
    %v3857 = vrcp.pop %v3856
    %v3858 = vmul.f32 %v3849, %v3857
    %3860 = vrot.lane.b32.xlu0 %v3858, 96
    %v3861 = vpop.permute.xlu0 %3860
    %v3862 = vsel %vm246, %v3861, 0
    %3864 = vmatprep.subr.mxu0 0.0
    %3865 = vmatpush1.msra.mxu0 0.0
    %3866 = vmatprep.subr.mxu0 0.0
    %3867 = vmatpush1.msra.mxu0 0.0
    %3868 = vmatprep.subr.mxu0 0.0
    %3869 = vmatpush1.msra.mxu0 0.0
    %3870 = vmatprep.subr.mxu0 0.0
    %3871 = vmatpush1.msra.mxu0 0.0
    %3872 = vmatprep.subr.mxu0 0.0
    %3873 = vmatpush1.msra.mxu0 0.0
    %3874 = vmatprep.subr.mxu0 0.0
    %3875 = vmatpush1.msra.mxu0 0.0
    %3876 = vmatprep.subr.mxu0 0.0
    %3877 = vmatpush1.msra.mxu0 0.0
    %3878 = vmatprep.subr.mxu0 0.0
    %3879 = vmatpush1.msra.mxu0 0.0
    %3880 = vmatprep.subr.mxu0 0.0
    %3881 = vmatpush1.msra.mxu0 0.0
    %3882 = vmatprep.subr.mxu0 0.0
    %3883 = vmatpush1.msra.mxu0 0.0
    %3884 = vmatprep.subr.mxu0 0.0
    %3885 = vmatpush1.msra.mxu0 0.0
    %3886 = vmatprep.subr.mxu0 0.0
    %3887 = vmatpush1.msra.mxu0 0.0
    %3888 = vmatprep.subr.mxu0 0.0
    %3889 = vmatpush1.msra.mxu0 0.0
    %3890 = vmatprep.subr.mxu0 0.0
    %3891 = vmatpush1.msra.mxu0 0.0
    %3892 = vmatprep.subr.mxu0 0.0
    %3893 = vmatpush1.msra.mxu0 %v63
    %3894 = vmatprep.subr.mxu0 0.0
    %3895 = vmatpush1.msra.mxu0 %v62
    %3896 = vmatprep.subr.mxu0 0.0
    %3897 = vmatpush2.msra.mxu0 0.0
    %3898 = vmatprep.subr.mxu0 0.0
    %3899 = vmatpush2.msra.mxu0 0.0
    %3900 = vmatprep.subr.mxu0 0.0
    %3901 = vmatpush2.msra.mxu0 0.0
    %3902 = vmatprep.subr.mxu0 0.0
    %3903 = vmatpush2.msra.mxu0 0.0
    %3904 = vmatprep.subr.mxu0 0.0
    %3905 = vmatpush2.msra.mxu0 0.0
    %3906 = vmatprep.subr.mxu0 0.0
    %3907 = vmatpush2.msra.mxu0 0.0
    %3908 = vmatprep.subr.mxu0 0.0
    %3909 = vmatpush2.msra.mxu0 0.0
    %3910 = vmatprep.subr.mxu0 0.0
    %3911 = vmatpush2.msra.mxu0 0.0
    %3912 = vmatprep.subr.mxu0 0.0
    %3913 = vmatpush2.msra.mxu0 0.0
    %3914 = vmatprep.subr.mxu0 0.0
    %3915 = vmatpush2.msra.mxu0 0.0
    %3916 = vmatprep.subr.mxu0 0.0
    %3917 = vmatpush2.msra.mxu0 0.0
    %3918 = vmatprep.subr.mxu0 0.0
    %3919 = vmatpush2.msra.mxu0 0.0
    %3920 = vmatprep.subr.mxu0 0.0
    %3921 = vmatpush2.msra.mxu0 0.0
    %3922 = vmatprep.subr.mxu0 0.0
    %3923 = vmatpush2.msra.mxu0 0.0
    %3924 = vmatprep.subr.mxu0 0.0
    %3925 = vmatpush2.msra.mxu0 0.0
    %3926 = vmatprep.subr.mxu0 0.0
    %3927 = vmatpush2.msra.mxu0 0.0
    %3928 = vmatprep.mubr.f32.mxu0 0.0
    %3929 = vmatmul.mubr.f32.gmra.mxu0 %v3862
    %v3930 = vpop.f32.mrf.mxu0
    %v3931 = vadd.f32 0.0, %v3930
    %v3932 = vpop.f32.mrf.mxu0
    %3933 = vdwg.mxu0
    %v3935 = vsel %vm68, %v3931, 0
    %3937 = vmatprep.subr.mxu0 0.0
    %3938 = vmatpush1.msra.mxu0 0.0
    %3939 = vmatprep.subr.mxu0 0.0
    %3940 = vmatpush1.msra.mxu0 0.0
    %3941 = vmatprep.subr.mxu0 0.0
    %3942 = vmatpush1.msra.mxu0 0.0
    %3943 = vmatprep.subr.mxu0 0.0
    %3944 = vmatpush1.msra.mxu0 0.0
    %3945 = vmatprep.subr.mxu0 0.0
    %3946 = vmatpush1.msra.mxu0 0.0
    %3947 = vmatprep.subr.mxu0 0.0
    %3948 = vmatpush1.msra.mxu0 0.0
    %3949 = vmatprep.subr.mxu0 0.0
    %3950 = vmatpush1.msra.mxu0 0.0
    %3951 = vmatprep.subr.mxu0 0.0
    %3952 = vmatpush1.msra.mxu0 0.0
    %3953 = vmatprep.subr.mxu0 0.0
    %3954 = vmatpush1.msra.mxu0 0.0
    %3955 = vmatprep.subr.mxu0 0.0
    %3956 = vmatpush1.msra.mxu0 0.0
    %3957 = vmatprep.subr.mxu0 0.0
    %3958 = vmatpush1.msra.mxu0 0.0
    %3959 = vmatprep.subr.mxu0 0.0
    %3960 = vmatpush1.msra.mxu0 0.0
    %3961 = vmatprep.subr.mxu0 0.0
    %3962 = vmatpush1.msra.mxu0 %v50
    %3963 = vmatprep.subr.mxu0 0.0
    %3964 = vmatpush1.msra.mxu0 %v49
    %3965 = vmatprep.subr.mxu0 0.0
    %3966 = vmatpush1.msra.mxu0 %v48
    %3967 = vmatprep.subr.mxu0 0.0
    %3968 = vmatpush1.msra.mxu0 %v47
    %3969 = vmatprep.subr.mxu0 0.0
    %3970 = vmatpush2.msra.mxu0 0.0
    %3971 = vmatprep.subr.mxu0 0.0
    %3972 = vmatpush2.msra.mxu0 0.0
    %3973 = vmatprep.subr.mxu0 0.0
    %3974 = vmatpush2.msra.mxu0 0.0
    %3975 = vmatprep.subr.mxu0 0.0
    %3976 = vmatpush2.msra.mxu0 0.0
    %3977 = vmatprep.subr.mxu0 0.0
    %3978 = vmatpush2.msra.mxu0 0.0
    %3979 = vmatprep.subr.mxu0 0.0
    %3980 = vmatpush2.msra.mxu0 0.0
    %3981 = vmatprep.subr.mxu0 0.0
    %3982 = vmatpush2.msra.mxu0 0.0
    %3983 = vmatprep.subr.mxu0 0.0
    %3984 = vmatpush2.msra.mxu0 0.0
    %3985 = vmatprep.subr.mxu0 0.0
    %3986 = vmatpush2.msra.mxu0 0.0
    %3987 = vmatprep.subr.mxu0 0.0
    %3988 = vmatpush2.msra.mxu0 0.0
    %3989 = vmatprep.subr.mxu0 0.0
    %3990 = vmatpush2.msra.mxu0 0.0
    %3991 = vmatprep.subr.mxu0 0.0
    %3992 = vmatpush2.msra.mxu0 0.0
    %3993 = vmatprep.subr.mxu0 0.0
    %3994 = vmatpush2.msra.mxu0 0.0
    %3995 = vmatprep.subr.mxu0 0.0
    %3996 = vmatpush2.msra.mxu0 0.0
    %3997 = vmatprep.subr.mxu0 0.0
    %3998 = vmatpush2.msra.mxu0 0.0
    %3999 = vmatprep.subr.mxu0 0.0
    %4000 = vmatpush2.msra.mxu0 0.0
    %4001 = vmatprep.mubr.f32.mxu0 0.0
    %4002 = vmatmul.mubr.f32.gmra.mxu0 %v3935
    %v4003 = vpop.f32.mrf.mxu0
    %v4004 = vadd.f32 0.0, %v4003
    %v4005 = vpop.f32.mrf.mxu0
    %4006 = vdwg.mxu0
    %v4007 = vadd.f32 %v3764, %v4004
    %v4008 = vadd.f32 %v4007, %v394
    %v4009 = vmax.f32 %v4008, 0.0
    %v4011 = vsel %vm68, %v4009, 0
    %4013 = vmatprep.subr.mxu0 0.0
    %4014 = vmatpush1.msra.mxu0 0.0
    %4015 = vmatprep.subr.mxu0 0.0
    %4016 = vmatpush1.msra.mxu0 0.0
    %4017 = vmatprep.subr.mxu0 0.0
    %4018 = vmatpush1.msra.mxu0 0.0
    %4019 = vmatprep.subr.mxu0 0.0
    %4020 = vmatpush1.msra.mxu0 0.0
    %4021 = vmatprep.subr.mxu0 0.0
    %4022 = vmatpush1.msra.mxu0 0.0
    %4023 = vmatprep.subr.mxu0 0.0
    %4024 = vmatpush1.msra.mxu0 0.0
    %4025 = vmatprep.subr.mxu0 0.0
    %4026 = vmatpush1.msra.mxu0 0.0
    %4027 = vmatprep.subr.mxu0 0.0
    %4028 = vmatpush1.msra.mxu0 0.0
    %4029 = vmatprep.subr.mxu0 0.0
    %4030 = vmatpush1.msra.mxu0 0.0
    %4031 = vmatprep.subr.mxu0 0.0
    %4032 = vmatpush1.msra.mxu0 0.0
    %4033 = vmatprep.subr.mxu0 0.0
    %4034 = vmatpush1.msra.mxu0 0.0
    %4035 = vmatprep.subr.mxu0 0.0
    %4036 = vmatpush1.msra.mxu0 0.0
    %4037 = vmatprep.subr.mxu0 0.0
    %4038 = vmatpush1.msra.mxu0 %v54
    %4039 = vmatprep.subr.mxu0 0.0
    %4040 = vmatpush1.msra.mxu0 %v53
    %4041 = vmatprep.subr.mxu0 0.0
    %4042 = vmatpush1.msra.mxu0 %v52
    %4043 = vmatprep.subr.mxu0 0.0
    %4044 = vmatpush1.msra.mxu0 %v51
    %4045 = vmatprep.subr.mxu0 0.0
    %4046 = vmatpush2.msra.mxu0 0.0
    %4047 = vmatprep.subr.mxu0 0.0
    %4048 = vmatpush2.msra.mxu0 0.0
    %4049 = vmatprep.subr.mxu0 0.0
    %4050 = vmatpush2.msra.mxu0 0.0
    %4051 = vmatprep.subr.mxu0 0.0
    %4052 = vmatpush2.msra.mxu0 0.0
    %4053 = vmatprep.subr.mxu0 0.0
    %4054 = vmatpush2.msra.mxu0 0.0
    %4055 = vmatprep.subr.mxu0 0.0
    %4056 = vmatpush2.msra.mxu0 0.0
    %4057 = vmatprep.subr.mxu0 0.0
    %4058 = vmatpush2.msra.mxu0 0.0
    %4059 = vmatprep.subr.mxu0 0.0
    %4060 = vmatpush2.msra.mxu0 0.0
    %4061 = vmatprep.subr.mxu0 0.0
    %4062 = vmatpush2.msra.mxu0 0.0
    %4063 = vmatprep.subr.mxu0 0.0
    %4064 = vmatpush2.msra.mxu0 0.0
    %4065 = vmatprep.subr.mxu0 0.0
    %4066 = vmatpush2.msra.mxu0 0.0
    %4067 = vmatprep.subr.mxu0 0.0
    %4068 = vmatpush2.msra.mxu0 0.0
    %4069 = vmatprep.subr.mxu0 0.0
    %4070 = vmatpush2.msra.mxu0 0.0
    %4071 = vmatprep.subr.mxu0 0.0
    %4072 = vmatpush2.msra.mxu0 0.0
    %4073 = vmatprep.subr.mxu0 0.0
    %4074 = vmatpush2.msra.mxu0 0.0
    %4075 = vmatprep.subr.mxu0 0.0
    %4076 = vmatpush2.msra.mxu0 0.0
    %4077 = vmatprep.mubr.f32.mxu0 0.0
    %4078 = vmatmul.mubr.f32.gmra.mxu0 %v4011
    %v4079 = vpop.f32.mrf.mxu0
    %v4080 = vadd.f32 %v60, %v4079
    %v4081 = vpop.f32.mrf.mxu0
    %4082 = vdwg.mxu0
    %v4083 = vadd.f32 %v4080, %v3837
    %v4084 = vxor.u32 %v4083, 2147483648
    %v4085 = vmul.f32 %v4084, 1.442695
    %v4086 = vpow.pop %v4085
    %v4087 = vadd.f32 %v4086, 1.0
    %v4088 = vrcp.pop %v4087
    %v4089 = vmul.f32 1.0, %v4088
    %4091 = vrot.lane.b32.xlu0 %v3837, 64
    %v4092 = vpop.permute.xlu0 %4091
    %v4094 = vmul.f32 %v4089, %v4092
    %4096 = vrot.lane.b32.xlu0 %v4094, 64
    %v4097 = vpop.permute.xlu0 %4096
    %v4099 = vadd.f32 %v4080, %v4097
    %v4100 = vtanh.pop %v4099
    %v4101 = vsub.f32 1.0, %v4089
    %4103 = vrot.lane.b32.xlu0 %v4100, 96
    %v4104 = vpop.permute.xlu0 %4103
    %v4106 = vmul.f32 %v4101, %v4104
    %v4107 = vmul.f32 %v4089, %v3594
    %v4108 = vadd.f32 %v4106, %v4107
    %4110 = vrot.lane.b32.xlu0 %v4108, 96
    %v4111 = vpop.permute.xlu0 %4110
    %v4112 = vsel %vm68, %v4111, 0
    %4114 = vmatprep.subr.mxu0 0.0
    %4115 = vmatpush1.msra.mxu0 0.0
    %4116 = vmatprep.subr.mxu0 0.0
    %4117 = vmatpush1.msra.mxu0 0.0
    %4118 = vmatprep.subr.mxu0 0.0
    %4119 = vmatpush1.msra.mxu0 0.0
    %4120 = vmatprep.subr.mxu0 0.0
    %4121 = vmatpush1.msra.mxu0 0.0
    %4122 = vmatprep.subr.mxu0 0.0
    %4123 = vmatpush1.msra.mxu0 0.0
    %4124 = vmatprep.subr.mxu0 0.0
    %4125 = vmatpush1.msra.mxu0 0.0
    %4126 = vmatprep.subr.mxu0 0.0
    %4127 = vmatpush1.msra.mxu0 0.0
    %4128 = vmatprep.subr.mxu0 0.0
    %4129 = vmatpush1.msra.mxu0 0.0
    %4130 = vmatprep.subr.mxu0 0.0
    %4131 = vmatpush1.msra.mxu0 0.0
    %4132 = vmatprep.subr.mxu0 0.0
    %4133 = vmatpush1.msra.mxu0 0.0
    %4134 = vmatprep.subr.mxu0 0.0
    %4135 = vmatpush1.msra.mxu0 0.0
    %4136 = vmatprep.subr.mxu0 0.0
    %4137 = vmatpush1.msra.mxu0 0.0
    %4138 = vmatprep.subr.mxu0 0.0
    %4139 = vmatpush1.msra.mxu0 %v58
    %4140 = vmatprep.subr.mxu0 0.0
    %4141 = vmatpush1.msra.mxu0 %v57
    %4142 = vmatprep.subr.mxu0 0.0
    %4143 = vmatpush1.msra.mxu0 %v56
    %4144 = vmatprep.subr.mxu0 0.0
    %4145 = vmatpush1.msra.mxu0 %v55
    %4146 = vmatprep.subr.mxu0 0.0
    %4147 = vmatpush2.msra.mxu0 0.0
    %4148 = vmatprep.subr.mxu0 0.0
    %4149 = vmatpush2.msra.mxu0 0.0
    %4150 = vmatprep.subr.mxu0 0.0
    %4151 = vmatpush2.msra.mxu0 0.0
    %4152 = vmatprep.subr.mxu0 0.0
    %4153 = vmatpush2.msra.mxu0 0.0
    %4154 = vmatprep.subr.mxu0 0.0
    %4155 = vmatpush2.msra.mxu0 0.0
    %4156 = vmatprep.subr.mxu0 0.0
    %4157 = vmatpush2.msra.mxu0 0.0
    %4158 = vmatprep.subr.mxu0 0.0
    %4159 = vmatpush2.msra.mxu0 0.0
    %4160 = vmatprep.subr.mxu0 0.0
    %4161 = vmatpush2.msra.mxu0 0.0
    %4162 = vmatprep.subr.mxu0 0.0
    %4163 = vmatpush2.msra.mxu0 0.0
    %4164 = vmatprep.subr.mxu0 0.0
    %4165 = vmatpush2.msra.mxu0 0.0
    %4166 = vmatprep.subr.mxu0 0.0
    %4167 = vmatpush2.msra.mxu0 0.0
    %4168 = vmatprep.subr.mxu0 0.0
    %4169 = vmatpush2.msra.mxu0 0.0
    %4170 = vmatprep.subr.mxu0 0.0
    %4171 = vmatpush2.msra.mxu0 0.0
    %4172 = vmatprep.subr.mxu0 0.0
    %4173 = vmatpush2.msra.mxu0 0.0
    %4174 = vmatprep.subr.mxu0 0.0
    %4175 = vmatpush2.msra.mxu0 0.0
    %4176 = vmatprep.subr.mxu0 0.0
    %4177 = vmatpush2.msra.mxu0 0.0
    %4178 = vmatprep.mubr.f32.mxu0 0.0
    %4179 = vmatmul.mubr.f32.gmra.mxu0 %v4112
    %v4180 = vpop.f32.mrf.mxu0
    %v4181 = vadd.f32 %v508, %v4180
    %v4182 = vpop.f32.mrf.mxu0
    %4183 = vdwg.mxu0
    %v4184 = vsel %vm582, %v4181, -inf
    %4185 = vmax.xlane.f32.xlu0 %v4184
    %v4186 = vpop.xlane.xlu0 %4185
    %v4187 = vsub.f32 %v4181, %v4186
    %v4188 = vmul.f32 %v4187, 1.442695
    %v4189 = vpow.pop %v4188
    %v4190 = vsel %vm582, %v4189, 0.0
    %4191 = vadd.xlane.f32.xlu0 %v4190
    %v4192 = vpop.xlane.xlu0 %4191
    %v4193 = vlog2.pop %v4192
    %v4194 = vmul.f32 %v4193, 0.6931472
    %v4195 = vsub.f32 %v4187, %v4194
    %4196 = vrot.lane.b32.xlu0 %v4108, 32
    %v4197 = vpop.permute.xlu0 %4196
    %4199 = vrot.lane.b32.xlu0 %v3858, 64
    %v4200 = vpop.permute.xlu0 %4199
    %v4202 = vsel %vm601, %v4195, %v4197
    %v4203 = vsel %vm603, %v4202, %v4200
    %v4204 = vsel %vm605, %v4203, 0.0
    %v4206 = vrot.slane %v1120, 7
    %v4209 = vrot.slane %v1634, 6
    %v4212 = vrot.slane %v2148, 5
    %v4215 = vrot.slane %v2662, 4
    %v4218 = vrot.slane %v3176, 3
    %v4221 = vrot.slane %v3690, 2
    %v4224 = vrot.slane %v4204, 1
    %vm4226 = vcmask 1040384
    %v4227 = vsel %vm4226, %v606, %v4206
    %vm4228 = vcmask 1041408
    %v4229 = vsel %vm4228, %v4227, %v4209
    %vm4230 = vcmask 1042432
    %v4231 = vsel %vm4230, %v4229, %v4212
    %vm4232 = vcmask 1043456
    %v4233 = vsel %vm4232, %v4231, %v4215
    %vm4234 = vcmask 1044480
    %v4235 = vsel %vm4234, %v4233, %v4218
    %vm4236 = vcmask 1045504
    %v4237 = vsel %vm4236, %v4235, %v4221
    %vm4238 = vcmask 1046528
    %v4239 = vsel %vm4238, %v4237, %v4224
    %4240 = vst [vmem:[#allocation7] sm:$0xff] %v4239
    // Predicated region
    $region22: #{tpu_custom_call.1} parent=1 // pred_check
      _
    $region23: #{tpu_custom_call.1} parent=1 // pred_check_branch
      %4242 = sbr.rel (0) target = $region25
    $region24: #{tpu_custom_call.1} parent=1 // pred_region
      %s4244 = ssub.s32 128, 128
      %4245 = vsyncadd [#allocation6], %s4244
      %s4247 = sshll.u32 [#allocation7], 4
      %s4248 = int_to_ptr.vmem [resolvable:$true] %s4247
      %4250 = dma.vmem_to_hbm [thread:$0]  %s4248, 128, %s5, [#allocation6]
    $region25: #{tpu_custom_call.1} parent=1 // pred_fallthru
      _
    // Predicated region
    $region26: #{tpu_custom_call.1} parent=1 // pred_check
      _
    $region27: #{tpu_custom_call.1} parent=1 // pred_check_branch
      %4252 = sbr.rel (0) target = $region29
    $region28: #{tpu_custom_call.1} parent=1 // pred_region
      %4253 = dma.done [#allocation6], 128
    $region29: #{tpu_custom_call.1} parent=1 // pred_fallthru
      _
    %4254 = vsyncpa [#allocation5], 1
    %4255 = vsyncpa [#allocation6], 1

</llo_original>
